<compile_context>
chip_gen: v7x
topology: tpu7x:2x2x1
jax: 0.10.0
libtpu: 0.0.40
codegen_flags: <defaults>
</compile_context>

<pallas_src>
import functools

import jax
import jax.numpy as jnp
from jax.experimental import pallas as pl
from jax.experimental.pallas import tpu as pltpu


STEM_CHANNELS = 128
CLASSES_PAD = 128  # lane-dense classifier output; real classes sliced outside


def _round_up(x, m):
    return (x + m - 1) // m * m


# ----------------------------------------------------------------------------
# In-kernel helpers
# ----------------------------------------------------------------------------

def _maxpool2x2_flat(v, rows, cols, c):
    """2x2 / stride-2 max pool of a row-major flat (rows*cols, c) value.

    Fully vectorized: row-pair max via a leading split + half slices, then
    column-pair max via a sublane-pair regroup + two slices."""
    v3 = v.reshape(rows // 2, 2 * cols, c)
    rmax = jnp.maximum(v3[:, :cols, :], v3[:, cols:, :])        # (rows/2, cols, c)
    r4 = rmax.reshape(rows // 2, cols // 2, 2, c)
    cmax = jnp.maximum(r4[:, :, 0, :], r4[:, :, 1, :])          # (rows/2, cols/2, c)
    return cmax.reshape((rows // 2) * (cols // 2), c)


# ----------------------------------------------------------------------------
# Fused whole-network kernel (per image): stem GEMM -> cells -> GAP+classifier
# ----------------------------------------------------------------------------

def _fused_model_kernel(*refs, h0, w0, c, out_mp_flags):
    n_cells = len(out_mp_flags)
    it = iter(refs)
    cols_ref = next(it)          # (h0*w0, Kpad)  stem im2col patches (f32)
    sw_ref = next(it)            # (Kpad, c)      stem weight (bf16)
    sb_ref = next(it)            # (1, c)         stem bias  (f32)
    cell_w = []
    cell_b = []
    for _ in range(n_cells):
        cell_w.append(next(it))  # (9c, c) bf16
        cell_b.append(next(it))  # (1, c)  f32
    cw_ref = next(it)            # (c, CLASSES_PAD) bf16
    cb_ref = next(it)            # (1, CLASSES_PAD) f32
    o_ref = next(it)             # (1, 1, CLASSES_PAD) f32
    pad_refs = [next(it) for _ in range(n_cells)]   # per-cell (h+2, w+2, c) bf16

    # ---- Stem: single fused GEMM + bias + ReLU -------------------------------
    x = jnp.dot(cols_ref[...].astype(jnp.bfloat16), sw_ref[...],
                preferred_element_type=jnp.float32)
    x = jnp.maximum(x + sb_ref[...], 0.0)                       # (h0*w0, c) f32

    x_prev, hp, wp = x, h0, w0
    x_pp, hpp, wpp = x, h0, w0

    # ---- Midstage cells (statically unrolled; activations stay in VMEM) ------
    for ci, out_mp in enumerate(out_mp_flags):
        in_mp = (hpp != hp)

        # 1. combine: x_prev + (optionally 2x2 max-pooled) x_prevprev, in f32
        if in_mp:
            xpp_c = _maxpool2x2_flat(x_pp, hpp, wpp, c)          # (hp*wp, c)
        else:
            xpp_c = x_pp
        comb = (x_prev + xpp_c).reshape(hp, wp, c).astype(jnp.bfloat16)

        # 2. write zero-padded input into the small bf16 scratch (2 block stores)
        pad = pad_refs[ci]
        pad[...] = jnp.zeros_like(pad)
        pad[1:hp + 1, 1:wp + 1, :] = comb

        # 3. 3x3 conv as ONE (hp*wp, 9c) x (9c, c) bf16 matmul, f32 accumulation
        taps = [pad[ki:ki + hp, kj:kj + wp, :]
                for ki in range(3) for kj in range(3)]
        lhs = jnp.concatenate(taps, axis=-1).reshape(hp * wp, 9 * c)
        y = jnp.dot(lhs, cell_w[ci][...], preferred_element_type=jnp.float32)
        y = jnp.maximum(y + cell_b[ci][...], 0.0)                # (hp*wp, c)

        # 4. optional fused 2x2 max-pool of the output
        if out_mp:
            y = _maxpool2x2_flat(y, hp, wp, c)
            hy, wy = hp // 2, wp // 2
        else:
            hy, wy = hp, wp

        x_pp, hpp, wpp = x_prev, hp, wp
        x_prev, hp, wp = y, hy, wy

    # ---- Classifier: fused global-average-pool + linear ----------------------
    pooled = jnp.sum(x_prev, axis=0, keepdims=True) * (1.0 / float(hp * wp))
    logits = jnp.dot(pooled.astype(jnp.bfloat16), cw_ref[...],
                     preferred_element_type=jnp.float32) + cb_ref[...]
    o_ref[0] = logits


# ----------------------------------------------------------------------------
# Wrapper: tiny stem im2col (Cin=3) + the single fused pallas_call
# ----------------------------------------------------------------------------

def _stem_im2col(x, *, stride=2, pad=1):
    """x: (N,H,W,Cin) NHWC -> patch matrix (N*Ho*Wo, round_up(9*Cin, 8))."""
    N, H, W, Cin = x.shape
    kh = kw = 3
    xp = jnp.pad(x, ((0, 0), (pad, pad), (pad, pad), (0, 0)))
    Ho = (H + 2 * pad - kh) // stride + 1
    Wo = (W + 2 * pad - kw) // stride + 1
    patches = [xp[:, i:i + stride * Ho:stride, j:j + stride * Wo:stride, :]
               for i in range(kh) for j in range(kw)]
    cols = jnp.concatenate(patches, axis=-1).reshape(N * Ho * Wo, kh * kw * Cin)
    k_pad = _round_up(kh * kw * Cin, 8)
    cols = jnp.pad(cols, ((0, 0), (0, k_pad - kh * kw * Cin)))
    return cols, Ho, Wo, k_pad


def model_forward(params, x, ms_stacks, no_classes):
    """x: (N, H, W, Cin) NHWC. Returns (logits, runtime, util)."""
    N = x.shape[0]
    C = STEM_CHANNELS

    cols, H0, W0, k_pad = _stem_im2col(x)
    M0 = H0 * W0
    assert M0 % 8 == 0, "stem output spatial size must be a multiple of 8"

    # Static spatial bookkeeping (mirrors the reference 'multiplier' logic).
    cell_hw = []
    hp, wp = H0, W0
    hpp, wpp = H0, W0
    for out_mp in ms_stacks:
        if hpp != hp:                      # in_maxpool on x_prevprev
            assert hpp == 2 * hp and wpp == 2 * wp
        cell_hw.append((hp, wp))
        if out_mp:
            assert hp % 2 == 0 and wp % 2 == 0
            hy, wy = hp // 2, wp // 2
        else:
            hy, wy = hp, wp
        hpp, wpp = hp, wp
        hp, wp = hy, wy

    n_cells = len(ms_stacks)
    kernel = functools.partial(
        _fused_model_kernel, h0=H0, w0=W0, c=C,
        out_mp_flags=tuple(bool(m) for m in ms_stacks))

    in_specs = [
        pl.BlockSpec((M0, k_pad), lambda n: (n, 0)),
        pl.BlockSpec((k_pad, C), lambda n: (0, 0)),
        pl.BlockSpec((1, C), lambda n: (0, 0)),
    ]
    operands = [cols, params['stem']['w'], params['stem']['b']]
    for i in range(n_cells):
        in_specs.append(pl.BlockSpec((9 * C, C), lambda n: (0, 0)))
        in_specs.append(pl.BlockSpec((1, C), lambda n: (0, 0)))
        operands.append(params[f'midstage{i + 1}']['w'])
        operands.append(params[f'midstage{i + 1}']['b'])
    in_specs.append(pl.BlockSpec((C, CLASSES_PAD), lambda n: (0, 0)))
    in_specs.append(pl.BlockSpec((1, CLASSES_PAD), lambda n: (0, 0)))
    operands.append(params['classifier']['w'])
    operands.append(params['classifier']['b'])

    scratch = [pltpu.VMEM((h + 2, w + 2, C), jnp.bfloat16) for (h, w) in cell_hw]

    out = pl.pallas_call(
        kernel,
        out_shape=jax.ShapeDtypeStruct((N, 1, CLASSES_PAD), jnp.float32),
        grid=(N,),
        in_specs=in_specs,
        out_specs=pl.BlockSpec((1, 1, CLASSES_PAD), lambda n: (n, 0, 0)),
        scratch_shapes=scratch,
        compiler_params=pltpu.CompilerParams(
            dimension_semantics=("parallel",)),
    )(*operands)

    logits = out.reshape(N, CLASSES_PAD)[:, :no_classes]
    # TODO(synk): hw_model runtime/util estimates unavailable -> report 0.
    return logits, 0.0, 0.0


# ----------------------------------------------------------------------------
# Parameters (weights pre-reshaped / pre-padded / bf16 at init)
# ----------------------------------------------------------------------------

def init_params(key, in_channels, stem_channels, n_midstages, no_classes):
    params = {}
    k = key
    k_raw = 9 * in_channels
    k_pad = _round_up(k_raw, 8)

    k, sub = jax.random.split(k)
    w = 0.05 * jax.random.normal(sub, (3, 3, in_channels, stem_channels),
                                 jnp.float32)
    w2 = w.reshape(k_raw, stem_channels)
    w2 = jnp.pad(w2, ((0, k_pad - k_raw), (0, 0)))
    params['stem'] = {
        'w': w2.astype(jnp.bfloat16),
        'b': jnp.zeros((1, stem_channels), jnp.float32),
    }

    for i in range(n_midstages):
        k, sub = jax.random.split(k)
        w = 0.05 * jax.random.normal(
            sub, (3, 3, stem_channels, stem_channels), jnp.float32)
        params[f'midstage{i + 1}'] = {
            'w': w.reshape(9 * stem_channels, stem_channels).astype(jnp.bfloat16),
            'b': jnp.zeros((1, stem_channels), jnp.float32),
        }

    k, sub = jax.random.split(k)
    wc = 0.05 * jax.random.normal(sub, (stem_channels, no_classes), jnp.float32)
    wc_pad = jnp.zeros((stem_channels, CLASSES_PAD), jnp.float32)
    wc_pad = wc_pad.at[:, :no_classes].set(wc)
    params['classifier'] = {
        'w': wc_pad.astype(jnp.bfloat16),
        'b': jnp.zeros((1, CLASSES_PAD), jnp.float32),
    }
    return params


if __name__ == "__main__":
    key = jax.random.PRNGKey(0)

    # Small shapes consistent with the module: input_dims = (16, 16, 3),
    # no_classes = 10, ms_stacks = [False, True, False].
    batch = 2
    H = W = 16
    in_channels = 3
    no_classes = 10
    ms_stacks = [False, True, False]

    k_x, k_p = jax.random.split(key)
    # NHWC input (PyTorch reference would be NCHW (2, 3, 16, 16)).
    x = jax.random.normal(k_x, (batch, H, W, in_channels), jnp.float32)

    params = init_params(k_p, in_channels, STEM_CHANNELS, len(ms_stacks),
                         no_classes)

    fwd = jax.jit(functools.partial(model_forward, ms_stacks=ms_stacks,
                                    no_classes=no_classes))
    logits, runtime, util = fwd(params, x)
    logits = jax.block_until_ready(logits)

    assert logits.shape == (batch, no_classes)
    assert bool(jnp.all(jnp.isfinite(logits)))
    print("KERNEL_OK")
</pallas_src>

<mosaic_0001>
module attributes {stable_mosaic.version = 11 : i64} {
  func.func @_fused_model_kernel(%arg0: i32, %arg1: memref<64x32xf32, #tpu.memory_space<vmem>>, %arg2: memref<32x128xbf16, #tpu.memory_space<vmem>>, %arg3: memref<1x128xf32, #tpu.memory_space<vmem>>, %arg4: memref<1152x128xbf16, #tpu.memory_space<vmem>>, %arg5: memref<1x128xf32, #tpu.memory_space<vmem>>, %arg6: memref<1152x128xbf16, #tpu.memory_space<vmem>>, %arg7: memref<1x128xf32, #tpu.memory_space<vmem>>, %arg8: memref<1152x128xbf16, #tpu.memory_space<vmem>>, %arg9: memref<1x128xf32, #tpu.memory_space<vmem>>, %arg10: memref<128x128xbf16, #tpu.memory_space<vmem>>, %arg11: memref<1x128xf32, #tpu.memory_space<vmem>>, %arg12: memref<1x1x128xf32, #tpu.memory_space<vmem>>, %arg13: memref<10x10x128xbf16, #tpu.memory_space<vmem>>, %arg14: memref<10x10x128xbf16, #tpu.memory_space<vmem>>, %arg15: memref<6x6x128xbf16, #tpu.memory_space<vmem>>) attributes {dimension_semantics = [#tpu.dimension_semantics<parallel>], iteration_bounds = array<i64: 2>, scalar_prefetch = 0 : i64, scratch_operands = 3 : i64, tpu.core_type = #tpu.core_type<tc>, window_params = [{transform_indices = @transform_0, window_bounds = array<i64: 64, 32>}, {pipeline_mode = #tpu.pipeline_mode<synchronous>, transform_indices = @transform_1, window_bounds = array<i64: 32, 128>}, {pipeline_mode = #tpu.pipeline_mode<synchronous>, transform_indices = @transform_2, window_bounds = array<i64: 1, 128>}, {pipeline_mode = #tpu.pipeline_mode<synchronous>, transform_indices = @transform_3, window_bounds = array<i64: 1152, 128>}, {pipeline_mode = #tpu.pipeline_mode<synchronous>, transform_indices = @transform_4, window_bounds = array<i64: 1, 128>}, {pipeline_mode = #tpu.pipeline_mode<synchronous>, transform_indices = @transform_5, window_bounds = array<i64: 1152, 128>}, {pipeline_mode = #tpu.pipeline_mode<synchronous>, transform_indices = @transform_6, window_bounds = array<i64: 1, 128>}, {pipeline_mode = #tpu.pipeline_mode<synchronous>, transform_indices = @transform_7, window_bounds = array<i64: 1152, 128>}, {pipeline_mode = #tpu.pipeline_mode<synchronous>, transform_indices = @transform_8, window_bounds = array<i64: 1, 128>}, {pipeline_mode = #tpu.pipeline_mode<synchronous>, transform_indices = @transform_9, window_bounds = array<i64: 128, 128>}, {pipeline_mode = #tpu.pipeline_mode<synchronous>, transform_indices = @transform_10, window_bounds = array<i64: 1, 128>}, {transform_indices = @transform_11, window_bounds = array<i64: 1, 1, 128>}]} {
    %c0 = arith.constant 0 : index
    %c0_0 = arith.constant 0 : index
    %0 = vector.load %arg1[%c0, %c0_0] : memref<64x32xf32, #tpu.memory_space<vmem>>, vector<64x32xf32>
    %1 = arith.truncf %0 : vector<64x32xf32> to vector<64x32xbf16>
    %c0_1 = arith.constant 0 : index
    %c0_2 = arith.constant 0 : index
    %2 = vector.load %arg2[%c0_1, %c0_2] : memref<32x128xbf16, #tpu.memory_space<vmem>>, vector<32x128xbf16>
    %cst = arith.constant dense<0.000000e+00> : vector<64x128xf32>
    %3 = tpu.matmul %1, %2, %cst {dimension_numbers = #tpu.dot_dimension_numbers<[1], [0], [0], [1], [0, 0, 1, 1], [], []>} : vector<64x32xbf16>, vector<32x128xbf16>, vector<64x128xf32> -> vector<64x128xf32>
    %c0_3 = arith.constant 0 : index
    %c0_4 = arith.constant 0 : index
    %4 = vector.load %arg3[%c0_3, %c0_4] : memref<1x128xf32, #tpu.memory_space<vmem>>, vector<1x128xf32>
    %5 = vector.broadcast %4 : vector<1x128xf32> to vector<64x128xf32>
    %6 = arith.addf %3, %5 : vector<64x128xf32>
    %cst_5 = arith.constant 0.000000e+00 : f32
    %7 = vector.broadcast %cst_5 : f32 to vector<64x128xf32>
    %8 = arith.maximumf %6, %7 : vector<64x128xf32>
    %9 = arith.addf %8, %8 : vector<64x128xf32>
    %10 = vector.shape_cast %9 : vector<64x128xf32> to vector<8x8x128xf32>
    %11 = arith.truncf %10 : vector<8x8x128xf32> to vector<8x8x128xbf16>
    %cst_6 = arith.constant 0.000000e+00 : bf16
    %12 = vector.broadcast %cst_6 : bf16 to vector<10x10x128xbf16>
    %c0_7 = arith.constant 0 : index
    %c0_8 = arith.constant 0 : index
    %c0_9 = arith.constant 0 : index
    %13 = vector.load %arg13[%c0_7, %c0_8, %c0_9] : memref<10x10x128xbf16, #tpu.memory_space<vmem>>, vector<10x10x128xbf16>
    tpu.vector_store %arg13[%c0_7, %c0_8, %c0_9], %12 {strides = array<i32>} : memref<10x10x128xbf16, #tpu.memory_space<vmem>>, vector<10x10x128xbf16>,
    %c1 = arith.constant 1 : index
    %c1_10 = arith.constant 1 : index
    %c0_11 = arith.constant 0 : index
    %14 = vector.load %arg13[%c1, %c1_10, %c0_11] : memref<10x10x128xbf16, #tpu.memory_space<vmem>>, vector<8x8x128xbf16>
    tpu.vector_store %arg13[%c1, %c1_10, %c0_11], %11 {strides = array<i32>} : memref<10x10x128xbf16, #tpu.memory_space<vmem>>, vector<8x8x128xbf16>,
    %c0_12 = arith.constant 0 : index
    %c0_13 = arith.constant 0 : index
    %c0_14 = arith.constant 0 : index
    %15 = vector.load %arg13[%c0_12, %c0_13, %c0_14] : memref<10x10x128xbf16, #tpu.memory_space<vmem>>, vector<8x8x128xbf16>
    %c0_15 = arith.constant 0 : index
    %c1_16 = arith.constant 1 : index
    %c0_17 = arith.constant 0 : index
    %16 = vector.load %arg13[%c0_15, %c1_16, %c0_17] : memref<10x10x128xbf16, #tpu.memory_space<vmem>>, vector<8x8x128xbf16>
    %c0_18 = arith.constant 0 : index
    %c2 = arith.constant 2 : index
    %c0_19 = arith.constant 0 : index
    %17 = vector.load %arg13[%c0_18, %c2, %c0_19] : memref<10x10x128xbf16, #tpu.memory_space<vmem>>, vector<8x8x128xbf16>
    %c1_20 = arith.constant 1 : index
    %c0_21 = arith.constant 0 : index
    %c0_22 = arith.constant 0 : index
    %18 = vector.load %arg13[%c1_20, %c0_21, %c0_22] : memref<10x10x128xbf16, #tpu.memory_space<vmem>>, vector<8x8x128xbf16>
    %c1_23 = arith.constant 1 : index
    %c1_24 = arith.constant 1 : index
    %c0_25 = arith.constant 0 : index
    %19 = vector.load %arg13[%c1_23, %c1_24, %c0_25] : memref<10x10x128xbf16, #tpu.memory_space<vmem>>, vector<8x8x128xbf16>
    %c1_26 = arith.constant 1 : index
    %c2_27 = arith.constant 2 : index
    %c0_28 = arith.constant 0 : index
    %20 = vector.load %arg13[%c1_26, %c2_27, %c0_28] : memref<10x10x128xbf16, #tpu.memory_space<vmem>>, vector<8x8x128xbf16>
    %c2_29 = arith.constant 2 : index
    %c0_30 = arith.constant 0 : index
    %c0_31 = arith.constant 0 : index
    %21 = vector.load %arg13[%c2_29, %c0_30, %c0_31] : memref<10x10x128xbf16, #tpu.memory_space<vmem>>, vector<8x8x128xbf16>
    %c2_32 = arith.constant 2 : index
    %c1_33 = arith.constant 1 : index
    %c0_34 = arith.constant 0 : index
    %22 = vector.load %arg13[%c2_32, %c1_33, %c0_34] : memref<10x10x128xbf16, #tpu.memory_space<vmem>>, vector<8x8x128xbf16>
    %c2_35 = arith.constant 2 : index
    %c2_36 = arith.constant 2 : index
    %c0_37 = arith.constant 0 : index
    %23 = vector.load %arg13[%c2_35, %c2_36, %c0_37] : memref<10x10x128xbf16, #tpu.memory_space<vmem>>, vector<8x8x128xbf16>
    %24 = tpu.concatenate %15, %16, %17, %18, %19, %20, %21, %22, %23 in 2 : vector<8x8x128xbf16>, vector<8x8x128xbf16>, vector<8x8x128xbf16>, vector<8x8x128xbf16>, vector<8x8x128xbf16>, vector<8x8x128xbf16>, vector<8x8x128xbf16>, vector<8x8x128xbf16>, vector<8x8x128xbf16> -> vector<8x8x1152xbf16>
    %25 = vector.shape_cast %24 : vector<8x8x1152xbf16> to vector<64x1152xbf16>
    %c0_38 = arith.constant 0 : index
    %c0_39 = arith.constant 0 : index
    %26 = vector.load %arg4[%c0_38, %c0_39] : memref<1152x128xbf16, #tpu.memory_space<vmem>>, vector<1152x128xbf16>
    %cst_40 = arith.constant dense<0.000000e+00> : vector<64x128xf32>
    %27 = tpu.matmul %25, %26, %cst_40 {dimension_numbers = #tpu.dot_dimension_numbers<[1], [0], [0], [1], [0, 0, 1, 1], [], []>} : vector<64x1152xbf16>, vector<1152x128xbf16>, vector<64x128xf32> -> vector<64x128xf32>
    %c0_41 = arith.constant 0 : index
    %c0_42 = arith.constant 0 : index
    %28 = vector.load %arg5[%c0_41, %c0_42] : memref<1x128xf32, #tpu.memory_space<vmem>>, vector<1x128xf32>
    %29 = vector.broadcast %28 : vector<1x128xf32> to vector<64x128xf32>
    %30 = arith.addf %27, %29 : vector<64x128xf32>
    %cst_43 = arith.constant 0.000000e+00 : f32
    %31 = vector.broadcast %cst_43 : f32 to vector<64x128xf32>
    %32 = arith.maximumf %30, %31 : vector<64x128xf32>
    %33 = arith.addf %32, %8 : vector<64x128xf32>
    %34 = vector.shape_cast %33 : vector<64x128xf32> to vector<8x8x128xf32>
    %35 = arith.truncf %34 : vector<8x8x128xf32> to vector<8x8x128xbf16>
    %cst_44 = arith.constant 0.000000e+00 : bf16
    %36 = vector.broadcast %cst_44 : bf16 to vector<10x10x128xbf16>
    %c0_45 = arith.constant 0 : index
    %c0_46 = arith.constant 0 : index
    %c0_47 = arith.constant 0 : index
    %37 = vector.load %arg14[%c0_45, %c0_46, %c0_47] : memref<10x10x128xbf16, #tpu.memory_space<vmem>>, vector<10x10x128xbf16>
    tpu.vector_store %arg14[%c0_45, %c0_46, %c0_47], %36 {strides = array<i32>} : memref<10x10x128xbf16, #tpu.memory_space<vmem>>, vector<10x10x128xbf16>,
    %c1_48 = arith.constant 1 : index
    %c1_49 = arith.constant 1 : index
    %c0_50 = arith.constant 0 : index
    %38 = vector.load %arg14[%c1_48, %c1_49, %c0_50] : memref<10x10x128xbf16, #tpu.memory_space<vmem>>, vector<8x8x128xbf16>
    tpu.vector_store %arg14[%c1_48, %c1_49, %c0_50], %35 {strides = array<i32>} : memref<10x10x128xbf16, #tpu.memory_space<vmem>>, vector<8x8x128xbf16>,
    %c0_51 = arith.constant 0 : index
    %c0_52 = arith.constant 0 : index
    %c0_53 = arith.constant 0 : index
    %39 = vector.load %arg14[%c0_51, %c0_52, %c0_53] : memref<10x10x128xbf16, #tpu.memory_space<vmem>>, vector<8x8x128xbf16>
    %c0_54 = arith.constant 0 : index
    %c1_55 = arith.constant 1 : index
    %c0_56 = arith.constant 0 : index
    %40 = vector.load %arg14[%c0_54, %c1_55, %c0_56] : memref<10x10x128xbf16, #tpu.memory_space<vmem>>, vector<8x8x128xbf16>
    %c0_57 = arith.constant 0 : index
    %c2_58 = arith.constant 2 : index
    %c0_59 = arith.constant 0 : index
    %41 = vector.load %arg14[%c0_57, %c2_58, %c0_59] : memref<10x10x128xbf16, #tpu.memory_space<vmem>>, vector<8x8x128xbf16>
    %c1_60 = arith.constant 1 : index
    %c0_61 = arith.constant 0 : index
    %c0_62 = arith.constant 0 : index
    %42 = vector.load %arg14[%c1_60, %c0_61, %c0_62] : memref<10x10x128xbf16, #tpu.memory_space<vmem>>, vector<8x8x128xbf16>
    %c1_63 = arith.constant 1 : index
    %c1_64 = arith.constant 1 : index
    %c0_65 = arith.constant 0 : index
    %43 = vector.load %arg14[%c1_63, %c1_64, %c0_65] : memref<10x10x128xbf16, #tpu.memory_space<vmem>>, vector<8x8x128xbf16>
    %c1_66 = arith.constant 1 : index
    %c2_67 = arith.constant 2 : index
    %c0_68 = arith.constant 0 : index
    %44 = vector.load %arg14[%c1_66, %c2_67, %c0_68] : memref<10x10x128xbf16, #tpu.memory_space<vmem>>, vector<8x8x128xbf16>
    %c2_69 = arith.constant 2 : index
    %c0_70 = arith.constant 0 : index
    %c0_71 = arith.constant 0 : index
    %45 = vector.load %arg14[%c2_69, %c0_70, %c0_71] : memref<10x10x128xbf16, #tpu.memory_space<vmem>>, vector<8x8x128xbf16>
    %c2_72 = arith.constant 2 : index
    %c1_73 = arith.constant 1 : index
    %c0_74 = arith.constant 0 : index
    %46 = vector.load %arg14[%c2_72, %c1_73, %c0_74] : memref<10x10x128xbf16, #tpu.memory_space<vmem>>, vector<8x8x128xbf16>
    %c2_75 = arith.constant 2 : index
    %c2_76 = arith.constant 2 : index
    %c0_77 = arith.constant 0 : index
    %47 = vector.load %arg14[%c2_75, %c2_76, %c0_77] : memref<10x10x128xbf16, #tpu.memory_space<vmem>>, vector<8x8x128xbf16>
    %48 = tpu.concatenate %39, %40, %41, %42, %43, %44, %45, %46, %47 in 2 : vector<8x8x128xbf16>, vector<8x8x128xbf16>, vector<8x8x128xbf16>, vector<8x8x128xbf16>, vector<8x8x128xbf16>, vector<8x8x128xbf16>, vector<8x8x128xbf16>, vector<8x8x128xbf16>, vector<8x8x128xbf16> -> vector<8x8x1152xbf16>
    %49 = vector.shape_cast %48 : vector<8x8x1152xbf16> to vector<64x1152xbf16>
    %c0_78 = arith.constant 0 : index
    %c0_79 = arith.constant 0 : index
    %50 = vector.load %arg6[%c0_78, %c0_79] : memref<1152x128xbf16, #tpu.memory_space<vmem>>, vector<1152x128xbf16>
    %cst_80 = arith.constant dense<0.000000e+00> : vector<64x128xf32>
    %51 = tpu.matmul %49, %50, %cst_80 {dimension_numbers = #tpu.dot_dimension_numbers<[1], [0], [0], [1], [0, 0, 1, 1], [], []>} : vector<64x1152xbf16>, vector<1152x128xbf16>, vector<64x128xf32> -> vector<64x128xf32>
    %c0_81 = arith.constant 0 : index
    %c0_82 = arith.constant 0 : index
    %52 = vector.load %arg7[%c0_81, %c0_82] : memref<1x128xf32, #tpu.memory_space<vmem>>, vector<1x128xf32>
    %53 = vector.broadcast %52 : vector<1x128xf32> to vector<64x128xf32>
    %54 = arith.addf %51, %53 : vector<64x128xf32>
    %cst_83 = arith.constant 0.000000e+00 : f32
    %55 = vector.broadcast %cst_83 : f32 to vector<64x128xf32>
    %56 = arith.maximumf %54, %55 : vector<64x128xf32>
    %57 = vector.shape_cast %56 : vector<64x128xf32> to vector<4x16x128xf32>
    %58 = vector.extract_strided_slice %57 {offsets = [0, 0, 0], sizes = [4, 8, 128], strides = [1, 1, 1]} : vector<4x16x128xf32> to vector<4x8x128xf32>
    %59 = vector.extract_strided_slice %57 {offsets = [0, 8, 0], sizes = [4, 8, 128], strides = [1, 1, 1]} : vector<4x16x128xf32> to vector<4x8x128xf32>
    %60 = arith.maximumf %58, %59 : vector<4x8x128xf32>
    %61 = vector.shape_cast %60 : vector<4x8x128xf32> to vector<4x4x2x128xf32>
    %62 = vector.extract_strided_slice %61 {offsets = [0, 0, 0, 0], sizes = [4, 4, 1, 128], strides = [1, 1, 1, 1]} : vector<4x4x2x128xf32> to vector<4x4x1x128xf32>
    %63 = vector.shape_cast %62 : vector<4x4x1x128xf32> to vector<4x4x128xf32>
    %64 = vector.extract_strided_slice %61 {offsets = [0, 0, 1, 0], sizes = [4, 4, 1, 128], strides = [1, 1, 1, 1]} : vector<4x4x2x128xf32> to vector<4x4x1x128xf32>
    %65 = vector.shape_cast %64 : vector<4x4x1x128xf32> to vector<4x4x128xf32>
    %66 = arith.maximumf %63, %65 : vector<4x4x128xf32>
    %67 = vector.shape_cast %66 : vector<4x4x128xf32> to vector<16x128xf32>
    %68 = vector.shape_cast %32 : vector<64x128xf32> to vector<4x16x128xf32>
    %69 = vector.extract_strided_slice %68 {offsets = [0, 0, 0], sizes = [4, 8, 128], strides = [1, 1, 1]} : vector<4x16x128xf32> to vector<4x8x128xf32>
    %70 = vector.extract_strided_slice %68 {offsets = [0, 8, 0], sizes = [4, 8, 128], strides = [1, 1, 1]} : vector<4x16x128xf32> to vector<4x8x128xf32>
    %71 = arith.maximumf %69, %70 : vector<4x8x128xf32>
    %72 = vector.shape_cast %71 : vector<4x8x128xf32> to vector<4x4x2x128xf32>
    %73 = vector.extract_strided_slice %72 {offsets = [0, 0, 0, 0], sizes = [4, 4, 1, 128], strides = [1, 1, 1, 1]} : vector<4x4x2x128xf32> to vector<4x4x1x128xf32>
    %74 = vector.shape_cast %73 : vector<4x4x1x128xf32> to vector<4x4x128xf32>
    %75 = vector.extract_strided_slice %72 {offsets = [0, 0, 1, 0], sizes = [4, 4, 1, 128], strides = [1, 1, 1, 1]} : vector<4x4x2x128xf32> to vector<4x4x1x128xf32>
    %76 = vector.shape_cast %75 : vector<4x4x1x128xf32> to vector<4x4x128xf32>
    %77 = arith.maximumf %74, %76 : vector<4x4x128xf32>
    %78 = vector.shape_cast %77 : vector<4x4x128xf32> to vector<16x128xf32>
    %79 = arith.addf %67, %78 : vector<16x128xf32>
    %80 = vector.shape_cast %79 : vector<16x128xf32> to vector<4x4x128xf32>
    %81 = arith.truncf %80 : vector<4x4x128xf32> to vector<4x4x128xbf16>
    %cst_84 = arith.constant 0.000000e+00 : bf16
    %82 = vector.broadcast %cst_84 : bf16 to vector<6x6x128xbf16>
    %c0_85 = arith.constant 0 : index
    %c0_86 = arith.constant 0 : index
    %c0_87 = arith.constant 0 : index
    %83 = vector.load %arg15[%c0_85, %c0_86, %c0_87] : memref<6x6x128xbf16, #tpu.memory_space<vmem>>, vector<6x6x128xbf16>
    tpu.vector_store %arg15[%c0_85, %c0_86, %c0_87], %82 {strides = array<i32>} : memref<6x6x128xbf16, #tpu.memory_space<vmem>>, vector<6x6x128xbf16>,
    %c1_88 = arith.constant 1 : index
    %c1_89 = arith.constant 1 : index
    %c0_90 = arith.constant 0 : index
    %84 = vector.load %arg15[%c1_88, %c1_89, %c0_90] : memref<6x6x128xbf16, #tpu.memory_space<vmem>>, vector<4x4x128xbf16>
    tpu.vector_store %arg15[%c1_88, %c1_89, %c0_90], %81 {strides = array<i32>} : memref<6x6x128xbf16, #tpu.memory_space<vmem>>, vector<4x4x128xbf16>,
    %c0_91 = arith.constant 0 : index
    %c0_92 = arith.constant 0 : index
    %c0_93 = arith.constant 0 : index
    %85 = vector.load %arg15[%c0_91, %c0_92, %c0_93] : memref<6x6x128xbf16, #tpu.memory_space<vmem>>, vector<4x4x128xbf16>
    %c0_94 = arith.constant 0 : index
    %c1_95 = arith.constant 1 : index
    %c0_96 = arith.constant 0 : index
    %86 = vector.load %arg15[%c0_94, %c1_95, %c0_96] : memref<6x6x128xbf16, #tpu.memory_space<vmem>>, vector<4x4x128xbf16>
    %c0_97 = arith.constant 0 : index
    %c2_98 = arith.constant 2 : index
    %c0_99 = arith.constant 0 : index
    %87 = vector.load %arg15[%c0_97, %c2_98, %c0_99] : memref<6x6x128xbf16, #tpu.memory_space<vmem>>, vector<4x4x128xbf16>
    %c1_100 = arith.constant 1 : index
    %c0_101 = arith.constant 0 : index
    %c0_102 = arith.constant 0 : index
    %88 = vector.load %arg15[%c1_100, %c0_101, %c0_102] : memref<6x6x128xbf16, #tpu.memory_space<vmem>>, vector<4x4x128xbf16>
    %c1_103 = arith.constant 1 : index
    %c1_104 = arith.constant 1 : index
    %c0_105 = arith.constant 0 : index
    %89 = vector.load %arg15[%c1_103, %c1_104, %c0_105] : memref<6x6x128xbf16, #tpu.memory_space<vmem>>, vector<4x4x128xbf16>
    %c1_106 = arith.constant 1 : index
    %c2_107 = arith.constant 2 : index
    %c0_108 = arith.constant 0 : index
    %90 = vector.load %arg15[%c1_106, %c2_107, %c0_108] : memref<6x6x128xbf16, #tpu.memory_space<vmem>>, vector<4x4x128xbf16>
    %c2_109 = arith.constant 2 : index
    %c0_110 = arith.constant 0 : index
    %c0_111 = arith.constant 0 : index
    %91 = vector.load %arg15[%c2_109, %c0_110, %c0_111] : memref<6x6x128xbf16, #tpu.memory_space<vmem>>, vector<4x4x128xbf16>
    %c2_112 = arith.constant 2 : index
    %c1_113 = arith.constant 1 : index
    %c0_114 = arith.constant 0 : index
    %92 = vector.load %arg15[%c2_112, %c1_113, %c0_114] : memref<6x6x128xbf16, #tpu.memory_space<vmem>>, vector<4x4x128xbf16>
    %c2_115 = arith.constant 2 : index
    %c2_116 = arith.constant 2 : index
    %c0_117 = arith.constant 0 : index
    %93 = vector.load %arg15[%c2_115, %c2_116, %c0_117] : memref<6x6x128xbf16, #tpu.memory_space<vmem>>, vector<4x4x128xbf16>
    %94 = tpu.concatenate %85, %86, %87, %88, %89, %90, %91, %92, %93 in 2 : vector<4x4x128xbf16>, vector<4x4x128xbf16>, vector<4x4x128xbf16>, vector<4x4x128xbf16>, vector<4x4x128xbf16>, vector<4x4x128xbf16>, vector<4x4x128xbf16>, vector<4x4x128xbf16>, vector<4x4x128xbf16> -> vector<4x4x1152xbf16>
    %95 = vector.shape_cast %94 : vector<4x4x1152xbf16> to vector<16x1152xbf16>
    %c0_118 = arith.constant 0 : index
    %c0_119 = arith.constant 0 : index
    %96 = vector.load %arg8[%c0_118, %c0_119] : memref<1152x128xbf16, #tpu.memory_space<vmem>>, vector<1152x128xbf16>
    %cst_120 = arith.constant dense<0.000000e+00> : vector<16x128xf32>
    %97 = tpu.matmul %95, %96, %cst_120 {dimension_numbers = #tpu.dot_dimension_numbers<[1], [0], [0], [1], [0, 0, 1, 1], [], []>} : vector<16x1152xbf16>, vector<1152x128xbf16>, vector<16x128xf32> -> vector<16x128xf32>
    %c0_121 = arith.constant 0 : index
    %c0_122 = arith.constant 0 : index
    %98 = vector.load %arg9[%c0_121, %c0_122] : memref<1x128xf32, #tpu.memory_space<vmem>>, vector<1x128xf32>
    %99 = vector.broadcast %98 : vector<1x128xf32> to vector<16x128xf32>
    %100 = arith.addf %97, %99 : vector<16x128xf32>
    %cst_123 = arith.constant 0.000000e+00 : f32
    %101 = vector.broadcast %cst_123 : f32 to vector<16x128xf32>
    %102 = arith.maximumf %100, %101 : vector<16x128xf32>
    %cst_124 = arith.constant dense<0.000000e+00> : vector<128xf32>
    %103 = vector.multi_reduction <add>, %102, %cst_124 [0] : vector<16x128xf32> to vector<128xf32>
    %104 = vector.shape_cast %103 : vector<128xf32> to vector<1x128xf32>
    %cst_125 = arith.constant 6.250000e-02 : f32
    %105 = vector.broadcast %cst_125 : f32 to vector<1x128xf32>
    %106 = arith.mulf %104, %105 : vector<1x128xf32>
    %107 = arith.truncf %106 : vector<1x128xf32> to vector<1x128xbf16>
    %c0_126 = arith.constant 0 : index
    %c0_127 = arith.constant 0 : index
    %108 = vector.load %arg10[%c0_126, %c0_127] : memref<128x128xbf16, #tpu.memory_space<vmem>>, vector<128x128xbf16>
    %cst_128 = arith.constant dense<0.000000e+00> : vector<1x128xf32>
    %109 = tpu.matmul %107, %108, %cst_128 {dimension_numbers = #tpu.dot_dimension_numbers<[1], [0], [0], [1], [0, 0, 1, 1], [], []>} : vector<1x128xbf16>, vector<128x128xbf16>, vector<1x128xf32> -> vector<1x128xf32>
    %c0_129 = arith.constant 0 : index
    %c0_130 = arith.constant 0 : index
    %110 = vector.load %arg11[%c0_129, %c0_130] : memref<1x128xf32, #tpu.memory_space<vmem>>, vector<1x128xf32>
    %111 = arith.addf %109, %110 : vector<1x128xf32>
    %c0_131 = arith.constant 0 : index
    %c0_132 = arith.constant 0 : index
    %c0_133 = arith.constant 0 : index
    %112 = vector.load %arg12[%c0_131, %c0_132, %c0_133] : memref<1x1x128xf32, #tpu.memory_space<vmem>>, vector<1x1x128xf32>
    %113 = vector.shape_cast %112 : vector<1x1x128xf32> to vector<1x128xf32>
    %114 = vector.shape_cast %111 : vector<1x128xf32> to vector<1x1x128xf32>
    tpu.vector_store %arg12[%c0_131, %c0_132, %c0_133], %114 {strides = array<i32>} : memref<1x1x128xf32, #tpu.memory_space<vmem>>, vector<1x1x128xf32>,
    return
  }
  func.func @transform_0(%arg0: i32) -> (i32, i32) {
    %c0_i32 = arith.constant 0 : i32
    %c0_i32_0 = arith.constant 0 : i32
    return %arg0, %c0_i32 : i32, i32
  }
  func.func @transform_1(%arg0: i32) -> (i32, i32) {
    %c0_i32 = arith.constant 0 : i32
    %c0_i32_0 = arith.constant 0 : i32
    %c0_i32_1 = arith.constant 0 : i32
    return %c0_i32, %c0_i32_0 : i32, i32
  }
  func.func @transform_2(%arg0: i32) -> (i32, i32) {
    %c0_i32 = arith.constant 0 : i32
    %c0_i32_0 = arith.constant 0 : i32
    %c0_i32_1 = arith.constant 0 : i32
    return %c0_i32, %c0_i32_0 : i32, i32
  }
  func.func @transform_3(%arg0: i32) -> (i32, i32) {
    %c0_i32 = arith.constant 0 : i32
    %c0_i32_0 = arith.constant 0 : i32
    %c0_i32_1 = arith.constant 0 : i32
    return %c0_i32, %c0_i32_0 : i32, i32
  }
  func.func @transform_4(%arg0: i32) -> (i32, i32) {
    %c0_i32 = arith.constant 0 : i32
    %c0_i32_0 = arith.constant 0 : i32
    %c0_i32_1 = arith.constant 0 : i32
    return %c0_i32, %c0_i32_0 : i32, i32
  }
  func.func @transform_5(%arg0: i32) -> (i32, i32) {
    %c0_i32 = arith.constant 0 : i32
    %c0_i32_0 = arith.constant 0 : i32
    %c0_i32_1 = arith.constant 0 : i32
    return %c0_i32, %c0_i32_0 : i32, i32
  }
  func.func @transform_6(%arg0: i32) -> (i32, i32) {
    %c0_i32 = arith.constant 0 : i32
    %c0_i32_0 = arith.constant 0 : i32
    %c0_i32_1 = arith.constant 0 : i32
    return %c0_i32, %c0_i32_0 : i32, i32
  }
  func.func @transform_7(%arg0: i32) -> (i32, i32) {
    %c0_i32 = arith.constant 0 : i32
    %c0_i32_0 = arith.constant 0 : i32
    %c0_i32_1 = arith.constant 0 : i32
    return %c0_i32, %c0_i32_0 : i32, i32
  }
  func.func @transform_8(%arg0: i32) -> (i32, i32) {
    %c0_i32 = arith.constant 0 : i32
    %c0_i32_0 = arith.constant 0 : i32
    %c0_i32_1 = arith.constant 0 : i32
    return %c0_i32, %c0_i32_0 : i32, i32
  }
  func.func @transform_9(%arg0: i32) -> (i32, i32) {
    %c0_i32 = arith.constant 0 : i32
    %c0_i32_0 = arith.constant 0 : i32
    %c0_i32_1 = arith.constant 0 : i32
    return %c0_i32, %c0_i32_0 : i32, i32
  }
  func.func @transform_10(%arg0: i32) -> (i32, i32) {
    %c0_i32 = arith.constant 0 : i32
    %c0_i32_0 = arith.constant 0 : i32
    %c0_i32_1 = arith.constant 0 : i32
    return %c0_i32, %c0_i32_0 : i32, i32
  }
  func.func @transform_11(%arg0: i32) -> (i32, i32, i32) {
    %c0_i32 = arith.constant 0 : i32
    %c0_i32_0 = arith.constant 0 : i32
    %c0_i32_1 = arith.constant 0 : i32
    return %arg0, %c0_i32, %c0_i32_0 : i32, i32, i32
  }
}

</mosaic_0001>

<llo_original>
// kernel: model_forward.1
$region0: #{model_forward.1}
  #allocation0 [shape = 'u32[]', space=smem, size = 0x4, offset = 0x4, fixed_abs, tag = 'smem constant byte address 0x4 - core index']
  #allocation1 [shape = 'u32[144,128]{1,0:T(1,128)}', space=vmem, size = 0x12000, scoped, tag = 'internal scratch']
  #allocation2 [shape = 'bf16[10,10,128]{2,1,0:T(8,128)(2,1)}', space=vmem, size = 0xa000, scoped, tag = 'scratch operand']
  #allocation3 [shape = 'bf16[10,10,128]{2,1,0:T(8,128)(2,1)}', space=vmem, size = 0xa000, scoped, tag = 'scratch operand']
  #allocation4 [shape = 'bf16[6,6,128]{2,1,0:T(8,128)(2,1)}', space=vmem, size = 0x3000, scoped, tag = 'scratch operand']
  %s0 = inlined_call_operand.vmem [shape: f32[128,32], index: 0, kind: input, shape index: {}]
  %s1 = inlined_call_operand.vmem [shape: bf16[32,128], index: 1, kind: input, shape index: {}]
  %s2 = inlined_call_operand.vmem [shape: f32[1,128], index: 2, kind: input, shape index: {}]
  %s3 = inlined_call_operand.vmem [shape: bf16[1152,128], index: 3, kind: input, shape index: {}]
  %s4 = inlined_call_operand.vmem [shape: f32[1,128], index: 4, kind: input, shape index: {}]
  %s5 = inlined_call_operand.vmem [shape: bf16[1152,128], index: 5, kind: input, shape index: {}]
  %s6 = inlined_call_operand.vmem [shape: f32[1,128], index: 6, kind: input, shape index: {}]
  %s7 = inlined_call_operand.vmem [shape: bf16[1152,128], index: 7, kind: input, shape index: {}]
  %s8 = inlined_call_operand.vmem [shape: f32[1,128], index: 8, kind: input, shape index: {}]
  %s9 = inlined_call_operand.vmem [shape: bf16[128,128], index: 9, kind: input, shape index: {}]
  %s10 = inlined_call_operand.vmem [shape: f32[1,128], index: 10, kind: input, shape index: {}]
  %s11 = inlined_call_operand.hbm [shape: f32[2,1,128], index: 11, kind: output, shape index: {}]
  %s12 = sld [smem:[#allocation0]]
  $region77: #{model_forward.1} parent=0
    _
  %s14 = ssub.s32 1, %s12
  %s15 = scalar_select 0, %s14, %s12
  $region1: #{model_forward.1} parent=0
    #allocation5 [shape = 'u8[1024]{0}', space=vmem, size = 0x400, scoped, tag = 'output window, operand 0']
    #allocation6 [shape = 's32[2]{0}', space=sflag, size = 0x8, scoped, tag = 'scoped memory for model_forward.1']
    %16 = vsyncpa [#allocation6], 0
    %s17 = scalar_lea.sflag [#allocation6], 1
    %18 = vsyncpa %s17, 0
    loop: start=0, step=1, limit=4
    $region2: #{model_forward.1} parent=1 // loop_pre_header
      _
    $region3: #{model_forward.1} parent=1 // loop_header
      %s20 = sphi 0, %s24
      %p21 = scmp.ge.s32.totalorder %s20, 4
      %s30 = sphi 0, %s32
      %s33 = sphi 0, %s30
      %s34 = sphi 0, %s33
      %s50 = sphi 0, %s34
      %s54 = sphi 0, %s54
      %s56 = sphi 0, %s54
      %s57 = sphi 0, %s56
      %s71 = sphi 0, %s57
      %s75 = sphi 0, %s75
      %s77 = sphi 0, %s75
      %s78 = sphi 0, %s77
      %s92 = sphi 0, %s78
      %s96 = sphi 0, %s96
      %s98 = sphi 0, %s96
      %s99 = sphi 0, %s98
      %s113 = sphi 0, %s99
      %s117 = sphi 0, %s117
      %s119 = sphi 0, %s117
      %s120 = sphi 0, %s119
      %s134 = sphi 0, %s120
      %s138 = sphi 0, %s138
      %s140 = sphi 0, %s138
      %s141 = sphi 0, %s140
      %s155 = sphi 0, %s141
      %s159 = sphi 0, %s159
      %s161 = sphi 0, %s159
      %s162 = sphi 0, %s161
      %s176 = sphi 0, %s162
      %s180 = sphi 0, %s180
      %s182 = sphi 0, %s180
      %s183 = sphi 0, %s182
      %s197 = sphi 0, %s183
      %s201 = sphi 0, %s201
      %s203 = sphi 0, %s201
      %s204 = sphi 0, %s203
      %s218 = sphi 0, %s204
      %s222 = sphi 0, %s222
      %s224 = sphi 0, %s222
      %s225 = sphi 0, %s224
      %s239 = sphi 0, %s225
      %s243 = sphi 0, %s243
      %s245 = sphi 0, %s243
      %s246 = sphi 0, %s245
      %s260 = sphi 0, %s246
      %s266 = sphi 0, %s268
      %s269 = sphi 0, %s266
      %s270 = sphi 0, %s269
      %s286 = sphi 0, %s270
    $region4: #{model_forward.1} parent=1 // loop_header_branch
      %23 = sbr.rel (%p21) target = $region8
    $region5: #{model_forward.1} parent=1 // loop_body
      %s25 = ssub.s32 %s20, 1
      %s26 = ssub.s32 %s20, 2
      %s27 = sadd.s32 %s20, 1
      %s28 = ssub.s32 %s20, %s27
      %p29 = scmp.eq.s32.totalorder %s28, 0
      %s31 = sadd.s32 %s30, 1
      %s32 = scalar_select %p29, %s30, %s31
      %p35 = pneg %p29
      %p36 = scmp.eq.s32.totalorder %s20, 1
      %p37 = por %p35, %p36
      %p38 = scmp.ne.s32.totalorder %s30, %s33
      %p39 = scmp.eq.s32.totalorder %s20, 0
      %p40 = por %p38, %p39
      %p41 = scmp.ne.s32.totalorder %s30, %s33
      %p42 = scmp.eq.s32.totalorder %s25, 1
      %p43 = por %p41, %p42
      %p44 = scmp.ne.s32.totalorder %s33, %s34
      %p45 = scmp.eq.s32.totalorder %s25, 0
      %p46 = por %p44, %p45
      %p47 = scmp.ne.s32.totalorder %s33, %s34
      %p48 = scmp.eq.s32.totalorder %s26, 1
      %p49 = por %p47, %p48
      %p51 = scmp.ne.s32.totalorder %s34, %s50
      %p52 = scmp.eq.s32.totalorder %s26, 0
      %p53 = por %p51, %p52
      %s55 = sadd.s32 %s54, 1
      %p58 = scmp.eq.s32.totalorder %s20, 1
      %p59 = scmp.ne.s32.totalorder %s54, %s56
      %p60 = scmp.eq.s32.totalorder %s20, 0
      %p61 = por %p59, %p60
      %p62 = scmp.ne.s32.totalorder %s54, %s56
      %p63 = scmp.eq.s32.totalorder %s25, 1
      %p64 = por %p62, %p63
      %p65 = scmp.ne.s32.totalorder %s56, %s57
      %p66 = scmp.eq.s32.totalorder %s25, 0
      %p67 = por %p65, %p66
      %p68 = scmp.ne.s32.totalorder %s56, %s57
      %p69 = scmp.eq.s32.totalorder %s26, 1
      %p70 = por %p68, %p69
      %p72 = scmp.ne.s32.totalorder %s57, %s71
      %p73 = scmp.eq.s32.totalorder %s26, 0
      %p74 = por %p72, %p73
      %s76 = sadd.s32 %s75, 1
      %p79 = scmp.eq.s32.totalorder %s20, 1
      %p80 = scmp.ne.s32.totalorder %s75, %s77
      %p81 = scmp.eq.s32.totalorder %s20, 0
      %p82 = por %p80, %p81
      %p83 = scmp.ne.s32.totalorder %s75, %s77
      %p84 = scmp.eq.s32.totalorder %s25, 1
      %p85 = por %p83, %p84
      %p86 = scmp.ne.s32.totalorder %s77, %s78
      %p87 = scmp.eq.s32.totalorder %s25, 0
      %p88 = por %p86, %p87
      %p89 = scmp.ne.s32.totalorder %s77, %s78
      %p90 = scmp.eq.s32.totalorder %s26, 1
      %p91 = por %p89, %p90
      %p93 = scmp.ne.s32.totalorder %s78, %s92
      %p94 = scmp.eq.s32.totalorder %s26, 0
      %p95 = por %p93, %p94
      %s97 = sadd.s32 %s96, 1
      %p100 = scmp.eq.s32.totalorder %s20, 1
      %p101 = scmp.ne.s32.totalorder %s96, %s98
      %p102 = scmp.eq.s32.totalorder %s20, 0
      %p103 = por %p101, %p102
      %p104 = scmp.ne.s32.totalorder %s96, %s98
      %p105 = scmp.eq.s32.totalorder %s25, 1
      %p106 = por %p104, %p105
      %p107 = scmp.ne.s32.totalorder %s98, %s99
      %p108 = scmp.eq.s32.totalorder %s25, 0
      %p109 = por %p107, %p108
      %p110 = scmp.ne.s32.totalorder %s98, %s99
      %p111 = scmp.eq.s32.totalorder %s26, 1
      %p112 = por %p110, %p111
      %p114 = scmp.ne.s32.totalorder %s99, %s113
      %p115 = scmp.eq.s32.totalorder %s26, 0
      %p116 = por %p114, %p115
      %s118 = sadd.s32 %s117, 1
      %p121 = scmp.eq.s32.totalorder %s20, 1
      %p122 = scmp.ne.s32.totalorder %s117, %s119
      %p123 = scmp.eq.s32.totalorder %s20, 0
      %p124 = por %p122, %p123
      %p125 = scmp.ne.s32.totalorder %s117, %s119
      %p126 = scmp.eq.s32.totalorder %s25, 1
      %p127 = por %p125, %p126
      %p128 = scmp.ne.s32.totalorder %s119, %s120
      %p129 = scmp.eq.s32.totalorder %s25, 0
      %p130 = por %p128, %p129
      %p131 = scmp.ne.s32.totalorder %s119, %s120
      %p132 = scmp.eq.s32.totalorder %s26, 1
      %p133 = por %p131, %p132
      %p135 = scmp.ne.s32.totalorder %s120, %s134
      %p136 = scmp.eq.s32.totalorder %s26, 0
      %p137 = por %p135, %p136
      %s139 = sadd.s32 %s138, 1
      %p142 = scmp.eq.s32.totalorder %s20, 1
      %p143 = scmp.ne.s32.totalorder %s138, %s140
      %p144 = scmp.eq.s32.totalorder %s20, 0
      %p145 = por %p143, %p144
      %p146 = scmp.ne.s32.totalorder %s138, %s140
      %p147 = scmp.eq.s32.totalorder %s25, 1
      %p148 = por %p146, %p147
      %p149 = scmp.ne.s32.totalorder %s140, %s141
      %p150 = scmp.eq.s32.totalorder %s25, 0
      %p151 = por %p149, %p150
      %p152 = scmp.ne.s32.totalorder %s140, %s141
      %p153 = scmp.eq.s32.totalorder %s26, 1
      %p154 = por %p152, %p153
      %p156 = scmp.ne.s32.totalorder %s141, %s155
      %p157 = scmp.eq.s32.totalorder %s26, 0
      %p158 = por %p156, %p157
      %s160 = sadd.s32 %s159, 1
      %p163 = scmp.eq.s32.totalorder %s20, 1
      %p164 = scmp.ne.s32.totalorder %s159, %s161
      %p165 = scmp.eq.s32.totalorder %s20, 0
      %p166 = por %p164, %p165
      %p167 = scmp.ne.s32.totalorder %s159, %s161
      %p168 = scmp.eq.s32.totalorder %s25, 1
      %p169 = por %p167, %p168
      %p170 = scmp.ne.s32.totalorder %s161, %s162
      %p171 = scmp.eq.s32.totalorder %s25, 0
      %p172 = por %p170, %p171
      %p173 = scmp.ne.s32.totalorder %s161, %s162
      %p174 = scmp.eq.s32.totalorder %s26, 1
      %p175 = por %p173, %p174
      %p177 = scmp.ne.s32.totalorder %s162, %s176
      %p178 = scmp.eq.s32.totalorder %s26, 0
      %p179 = por %p177, %p178
      %s181 = sadd.s32 %s180, 1
      %p184 = scmp.eq.s32.totalorder %s20, 1
      %p185 = scmp.ne.s32.totalorder %s180, %s182
      %p186 = scmp.eq.s32.totalorder %s20, 0
      %p187 = por %p185, %p186
      %p188 = scmp.ne.s32.totalorder %s180, %s182
      %p189 = scmp.eq.s32.totalorder %s25, 1
      %p190 = por %p188, %p189
      %p191 = scmp.ne.s32.totalorder %s182, %s183
      %p192 = scmp.eq.s32.totalorder %s25, 0
      %p193 = por %p191, %p192
      %p194 = scmp.ne.s32.totalorder %s182, %s183
      %p195 = scmp.eq.s32.totalorder %s26, 1
      %p196 = por %p194, %p195
      %p198 = scmp.ne.s32.totalorder %s183, %s197
      %p199 = scmp.eq.s32.totalorder %s26, 0
      %p200 = por %p198, %p199
      %s202 = sadd.s32 %s201, 1
      %p205 = scmp.eq.s32.totalorder %s20, 1
      %p206 = scmp.ne.s32.totalorder %s201, %s203
      %p207 = scmp.eq.s32.totalorder %s20, 0
      %p208 = por %p206, %p207
      %p209 = scmp.ne.s32.totalorder %s201, %s203
      %p210 = scmp.eq.s32.totalorder %s25, 1
      %p211 = por %p209, %p210
      %p212 = scmp.ne.s32.totalorder %s203, %s204
      %p213 = scmp.eq.s32.totalorder %s25, 0
      %p214 = por %p212, %p213
      %p215 = scmp.ne.s32.totalorder %s203, %s204
      %p216 = scmp.eq.s32.totalorder %s26, 1
      %p217 = por %p215, %p216
      %p219 = scmp.ne.s32.totalorder %s204, %s218
      %p220 = scmp.eq.s32.totalorder %s26, 0
      %p221 = por %p219, %p220
      %s223 = sadd.s32 %s222, 1
      %p226 = scmp.eq.s32.totalorder %s20, 1
      %p227 = scmp.ne.s32.totalorder %s222, %s224
      %p228 = scmp.eq.s32.totalorder %s20, 0
      %p229 = por %p227, %p228
      %p230 = scmp.ne.s32.totalorder %s222, %s224
      %p231 = scmp.eq.s32.totalorder %s25, 1
      %p232 = por %p230, %p231
      %p233 = scmp.ne.s32.totalorder %s224, %s225
      %p234 = scmp.eq.s32.totalorder %s25, 0
      %p235 = por %p233, %p234
      %p236 = scmp.ne.s32.totalorder %s224, %s225
      %p237 = scmp.eq.s32.totalorder %s26, 1
      %p238 = por %p236, %p237
      %p240 = scmp.ne.s32.totalorder %s225, %s239
      %p241 = scmp.eq.s32.totalorder %s26, 0
      %p242 = por %p240, %p241
      %s244 = sadd.s32 %s243, 1
      %p247 = scmp.eq.s32.totalorder %s20, 1
      %p248 = scmp.ne.s32.totalorder %s243, %s245
      %p249 = scmp.eq.s32.totalorder %s20, 0
      %p250 = por %p248, %p249
      %p251 = scmp.ne.s32.totalorder %s243, %s245
      %p252 = scmp.eq.s32.totalorder %s25, 1
      %p253 = por %p251, %p252
      %p254 = scmp.ne.s32.totalorder %s245, %s246
      %p255 = scmp.eq.s32.totalorder %s25, 0
      %p256 = por %p254, %p255
      %p257 = scmp.ne.s32.totalorder %s245, %s246
      %p258 = scmp.eq.s32.totalorder %s26, 1
      %p259 = por %p257, %p258
      %p261 = scmp.ne.s32.totalorder %s246, %s260
      %p262 = scmp.eq.s32.totalorder %s26, 0
      %p263 = por %p261, %p262
      %s264 = ssub.s32 %s20, %s27
      %p265 = scmp.eq.s32.totalorder %s264, 0
      %s267 = sadd.s32 %s266, 1
      %s268 = scalar_select %p265, %s266, %s267
      %p271 = pneg %p265
      %p272 = scmp.eq.s32.totalorder %s20, 1
      %p273 = por %p271, %p272
      %p274 = scmp.ne.s32.totalorder %s266, %s269
      %p275 = scmp.eq.s32.totalorder %s20, 0
      %p276 = por %p274, %p275
      %p277 = scmp.ne.s32.totalorder %s266, %s269
      %p278 = scmp.eq.s32.totalorder %s25, 1
      %p279 = por %p277, %p278
      %p280 = scmp.ne.s32.totalorder %s269, %s270
      %p281 = scmp.eq.s32.totalorder %s25, 0
      %p282 = por %p280, %p281
      %p283 = scmp.ne.s32.totalorder %s269, %s270
      %p284 = scmp.eq.s32.totalorder %s26, 1
      %p285 = por %p283, %p284
      %p287 = scmp.ne.s32.totalorder %s270, %s286
      %p288 = scmp.eq.s32.totalorder %s26, 0
      %p289 = por %p287, %p288
      %p290 = scmp.le.s32.totalorder 1, %s20
      %p291 = scmp.lt.s32.totalorder %s20, 3
      %p292 = pnand %p290, %p291
      %p293 = pneg %p292
      // Predicated region
      $region9: #{model_forward.1} parent=5 // pred_check
        _
      $region10: #{model_forward.1} parent=5 // pred_check_branch
        %295 = sbr.rel (%p292) target = $region12
      $region11: #{model_forward.1} parent=5 // pred_region
        %s296 = ssub.s32 %s20, 1
        // Predicated region
        $region13: #{model_forward.1} parent=11 // pred_check
          %p297 = pneg %p67
        $region14: #{model_forward.1} parent=11 // pred_check_branch
          %299 = sbr.rel (%p297) target = $region16
        $region15: #{model_forward.1} parent=11 // pred_region
          _
        $region16: #{model_forward.1} parent=11 // pred_fallthru
          _
        // Predicated region
        $region17: #{model_forward.1} parent=11 // pred_check
          %p300 = pneg %p88
        $region18: #{model_forward.1} parent=11 // pred_check_branch
          %302 = sbr.rel (%p300) target = $region20
        $region19: #{model_forward.1} parent=11 // pred_region
          _
        $region20: #{model_forward.1} parent=11 // pred_fallthru
          _
        // Predicated region
        $region21: #{model_forward.1} parent=11 // pred_check
          %p303 = pneg %p109
        $region22: #{model_forward.1} parent=11 // pred_check_branch
          %305 = sbr.rel (%p303) target = $region24
        $region23: #{model_forward.1} parent=11 // pred_region
          _
        $region24: #{model_forward.1} parent=11 // pred_fallthru
          _
        // Predicated region
        $region25: #{model_forward.1} parent=11 // pred_check
          %p306 = pneg %p130
        $region26: #{model_forward.1} parent=11 // pred_check_branch
          %308 = sbr.rel (%p306) target = $region28
        $region27: #{model_forward.1} parent=11 // pred_region
          _
        $region28: #{model_forward.1} parent=11 // pred_fallthru
          _
        // Predicated region
        $region29: #{model_forward.1} parent=11 // pred_check
          %p309 = pneg %p151
        $region30: #{model_forward.1} parent=11 // pred_check_branch
          %311 = sbr.rel (%p309) target = $region32
        $region31: #{model_forward.1} parent=11 // pred_region
          _
        $region32: #{model_forward.1} parent=11 // pred_fallthru
          _
        // Predicated region
        $region33: #{model_forward.1} parent=11 // pred_check
          %p312 = pneg %p172
        $region34: #{model_forward.1} parent=11 // pred_check_branch
          %314 = sbr.rel (%p312) target = $region36
        $region35: #{model_forward.1} parent=11 // pred_region
          _
        $region36: #{model_forward.1} parent=11 // pred_fallthru
          _
        // Predicated region
        $region37: #{model_forward.1} parent=11 // pred_check
          %p315 = pneg %p193
        $region38: #{model_forward.1} parent=11 // pred_check_branch
          %317 = sbr.rel (%p315) target = $region40
        $region39: #{model_forward.1} parent=11 // pred_region
          _
        $region40: #{model_forward.1} parent=11 // pred_fallthru
          _
        // Predicated region
        $region41: #{model_forward.1} parent=11 // pred_check
          %p318 = pneg %p214
        $region42: #{model_forward.1} parent=11 // pred_check_branch
          %320 = sbr.rel (%p318) target = $region44
        $region43: #{model_forward.1} parent=11 // pred_region
          _
        $region44: #{model_forward.1} parent=11 // pred_fallthru
          _
        // Predicated region
        $region45: #{model_forward.1} parent=11 // pred_check
          %p321 = pneg %p235
        $region46: #{model_forward.1} parent=11 // pred_check_branch
          %323 = sbr.rel (%p321) target = $region48
        $region47: #{model_forward.1} parent=11 // pred_region
          _
        $region48: #{model_forward.1} parent=11 // pred_fallthru
          _
        // Predicated region
        $region49: #{model_forward.1} parent=11 // pred_check
          %p324 = pneg %p256
        $region50: #{model_forward.1} parent=11 // pred_check_branch
          %326 = sbr.rel (%p324) target = $region52
        $region51: #{model_forward.1} parent=11 // pred_region
          _
        $region52: #{model_forward.1} parent=11 // pred_fallthru
          _
      $region12: #{model_forward.1} parent=5 // pred_fallthru
        _
      %p327 = scmp.lt.s32.totalorder %s20, 2
      // Predicated region
      $region53: #{model_forward.1} parent=5 // pred_check
        %p328 = pneg %p327
      $region54: #{model_forward.1} parent=5 // pred_check_branch
        %330 = sbr.rel (%p328) target = $region56
      $region55: #{model_forward.1} parent=5 // pred_region
        // Predicated region
        $region57: #{model_forward.1} parent=55 // pred_check
          %p331 = pneg %p40
        $region58: #{model_forward.1} parent=55 // pred_check_branch
          %333 = sbr.rel (%p331) target = $region60
        $region59: #{model_forward.1} parent=55 // pred_region
          %s334 = smul.u32 8, %s20
          %p335 = scmp.lt.s32.totalorder %s334, 15
          %s336 = scalar_select %p335, %s334, 15
          %s337 = smul.addr %s336, 8
          %s338 = scalar_lea.vmem %s0, %s337
          %s339 = smul.u32 8, %s20
        $region60: #{model_forward.1} parent=55 // pred_fallthru
          _
      $region56: #{model_forward.1} parent=5 // pred_fallthru
        _
      %p340 = scmp.le.s32.totalorder 1, %s20
      %p341 = scmp.lt.s32.totalorder %s20, 3
      %p342 = pnand %p340, %p341
      %p343 = pneg %p342
      // Predicated region
      $region61: #{model_forward.1} parent=5 // pred_check
        _
      $region62: #{model_forward.1} parent=5 // pred_check_branch
        %345 = sbr.rel (%p342) target = $region64
      $region63: #{model_forward.1} parent=5 // pred_region
        %s346 = ssub.s32 %s20, 1
        %s347 = smul.u32 8, %s25
        %p348 = scmp.lt.s32.totalorder %s347, 15
        %s349 = scalar_select %p348, %s347, 15
        %s350 = smul.addr %s349, 8
        %s351 = scalar_lea.vmem %s0, %s350
        %p352 = pneg %p46
        %p353 = pneg %p43
        %p354 = pneg %p67
        %p355 = pneg %p64
        %p356 = pneg %p88
        %p357 = pneg %p85
        %p358 = pneg %p109
        %p359 = pneg %p106
        %p360 = pneg %p130
        %p361 = pneg %p127
        %p362 = pneg %p151
        %p363 = pneg %p148
        %p364 = pneg %p172
        %p365 = pneg %p169
        %p366 = pneg %p193
        %p367 = pneg %p190
        %p368 = pneg %p214
        %p369 = pneg %p211
        %p370 = pneg %p235
        %p371 = pneg %p232
        %p372 = pneg %p256
        %p373 = pneg %p253
        %p374 = pneg %p282
        %p375 = pneg %p279
        %s376 = sand.u32 %s269, 1
        %s377 = scalar_lea.sflag [#allocation6], %s376
        %s378 = sand.u32 %s269, 1
        %s379 = scalar_lea.vmem [#allocation5], %s378
        %s380 = smul.u32 8, %s25
        %p381 = scmp.lt.s32.totalorder %s380, 15
        %s382 = scalar_select %p381, %s380, 15
        %s383 = smul.addr %s382, 8
        %s384 = scalar_lea.vmem %s0, %s383
        %s385 = smul.u32 8, %s25
        %v387 = vld [vmem:[%s384] sm:$0xff]
        %v388 = vld [vmem:[%s384 + $0x8] sm:$0xff]
        %v389 = vld [vmem:[%s384 + $0x10] sm:$0xff]
        %v390 = vld [vmem:[%s384 + $0x18] sm:$0xff]
        %v391 = vld [vmem:[%s384 + $0x20] sm:$0xff]
        %v392 = vld [vmem:[%s384 + $0x28] sm:$0xff]
        %v393 = vld [vmem:[%s384 + $0x30] sm:$0xff]
        %v394 = vld [vmem:[%s384 + $0x38] sm:$0xff]
        %v395 = vpack.c.bf16 %v388, %v387
        %v396 = vpack.c.bf16 %v390, %v389
        %v397 = vpack.c.bf16 %v392, %v391
        %v398 = vpack.c.bf16 %v394, %v393
        %v399 = vld [vmem:[%s1] sm:$0xf]
        %v400 = vld [vmem:[%s1 + $0x4] sm:$0xf]
        %v401 = vld [vmem:[%s1 + $0x8] sm:$0xf]
        %v402 = vld [vmem:[%s1 + $0xc] sm:$0xf]
        %v403 = vld [vmem:[%s2] sm:$0x1]
        %v405 = vlaneseq
        %v406 = vshrl.u32 %v405, 7
        %v407 = vsub.s32 0, %v406
        %v408 = vrot.slane %v403, %v407
        %v414 = vunpack.c.l.b16 %v399
        %v415 = vunpack.c.l.b16 %v400
        %v416 = vunpack.c.l.b16 %v401
        %v417 = vunpack.c.l.b16 %v402
        %v418 = vpack.c.b16 %v415, %v414
        %v419 = vpack.c.b16 %v417, %v416
        %vm422 = vcmask 261120
        %v424 = vsel %vm422, %v395, 0
        %v427 = vsel %vm422, %v396, 0
        %v430 = vsel %vm422, %v397, 0
        %v433 = vsel %vm422, %v398, 0
        %435 = vmatprep.subr.bf16.mxu0 0
        %436 = vmatpush1.bf16.msra.mxu0 %v418
        %437 = vmatprep.subr.bf16.mxu0 0
        %438 = vmatpush1.bf16.msra.mxu0 %v419
        %439 = vmatprep.subr.bf16.mxu0 0
        %440 = vmatpush1.bf16.msra.mxu0 0
        %441 = vmatprep.subr.bf16.mxu0 0
        %442 = vmatpush1.bf16.msra.mxu0 0
        %443 = vmatprep.subr.bf16.mxu0 0
        %444 = vmatpush1.bf16.msra.mxu0 0
        %445 = vmatprep.subr.bf16.mxu0 0
        %446 = vmatpush1.bf16.msra.mxu0 0
        %447 = vmatprep.subr.bf16.mxu0 0
        %448 = vmatpush1.bf16.msra.mxu0 0
        %449 = vmatprep.subr.bf16.mxu0 0
        %450 = vmatpush1.bf16.msra.mxu0 0
        %451 = vmatprep.subr.bf16.mxu0 0
        %452 = vmatpush1.bf16.msra.mxu0 0
        %453 = vmatprep.subr.bf16.mxu0 0
        %454 = vmatpush1.bf16.msra.mxu0 0
        %455 = vmatprep.subr.bf16.mxu0 0
        %456 = vmatpush1.bf16.msra.mxu0 0
        %457 = vmatprep.subr.bf16.mxu0 0
        %458 = vmatpush1.bf16.msra.mxu0 0
        %459 = vmatprep.subr.bf16.mxu0 0
        %460 = vmatpush1.bf16.msra.mxu0 0
        %461 = vmatprep.subr.bf16.mxu0 0
        %462 = vmatpush1.bf16.msra.mxu0 0
        %463 = vmatprep.subr.bf16.mxu0 0
        %464 = vmatpush1.bf16.msra.mxu0 0
        %465 = vmatprep.subr.bf16.mxu0 0
        %466 = vmatpush1.bf16.msra.mxu0 0
        %467 = vmatprep.mubr.bf16.mxu0 0
        %468 = vmatmul.mubr.bf16.gmra.mrb[0].mxu0 %v424
        %v469 = vpop.f32.mrb[0].mxu0
        %v470 = vadd.f32 %v408, %v469
        %v471 = vpop.f32.mrb[0].mxu0
        %v472 = vpop.f32.mrb[0].mxu0
        %v473 = vadd.f32 %v408, %v472
        %v474 = vpop.f32.mrb[0].mxu0
        %475 = vmatprep.mubr.bf16.mxu0 0
        %476 = vmatmul.mubr.bf16.gmra.mrb[0].mxu0 %v427
        %v477 = vpop.f32.mrb[0].mxu0
        %v478 = vadd.f32 %v408, %v477
        %v479 = vpop.f32.mrb[0].mxu0
        %v480 = vpop.f32.mrb[0].mxu0
        %v481 = vadd.f32 %v408, %v480
        %v482 = vpop.f32.mrb[0].mxu0
        %483 = vmatprep.mubr.bf16.mxu0 0
        %484 = vmatmul.mubr.bf16.gmra.mrb[0].mxu0 %v430
        %v485 = vpop.f32.mrb[0].mxu0
        %v486 = vadd.f32 %v408, %v485
        %v487 = vpop.f32.mrb[0].mxu0
        %v488 = vpop.f32.mrb[0].mxu0
        %v489 = vadd.f32 %v408, %v488
        %v490 = vpop.f32.mrb[0].mxu0
        %491 = vmatprep.mubr.bf16.mxu0 0
        %492 = vmatmul.mubr.bf16.gmra.mrb[0].mxu0 %v433
        %v493 = vpop.f32.mrb[0].mxu0
        %v494 = vadd.f32 %v408, %v493
        %v495 = vpop.f32.mrb[0].mxu0
        %v496 = vpop.f32.mrb[0].mxu0
        %v497 = vadd.f32 %v408, %v496
        %v498 = vpop.f32.mrb[0].mxu0
        %499 = vdwg.mxu0
        %v500 = vmax.f32 %v470, 0.0
        %v501 = vmax.f32 %v473, 0.0
        %v502 = vmax.f32 %v478, 0.0
        %v503 = vmax.f32 %v481, 0.0
        %v504 = vmax.f32 %v486, 0.0
        %v505 = vmax.f32 %v489, 0.0
        %v506 = vmax.f32 %v494, 0.0
        %v507 = vmax.f32 %v497, 0.0
        %v508 = vadd.f32 %v500, %v500
        %v509 = vadd.f32 %v501, %v501
        %v510 = vadd.f32 %v502, %v502
        %v511 = vadd.f32 %v503, %v503
        %v512 = vadd.f32 %v504, %v504
        %v513 = vadd.f32 %v505, %v505
        %v514 = vadd.f32 %v506, %v506
        %v515 = vadd.f32 %v507, %v507
        %v516 = vpack.c.bf16 %v508, %v508
        %v517 = vpack.c.bf16 %v509, %v509
        %v518 = vpack.c.bf16 %v510, %v510
        %v519 = vpack.c.bf16 %v511, %v511
        %v520 = vpack.c.bf16 %v512, %v512
        %v521 = vpack.c.bf16 %v513, %v513
        %v522 = vpack.c.bf16 %v514, %v514
        %v523 = vpack.c.bf16 %v515, %v515
        %524 = vst [vmem:[#allocation2] sm:$0xf] 0
        %525 = vst [vmem:[#allocation2 + $0x4] sm:$0x1] 0
        %526 = vst [vmem:[#allocation2 + $0x8] sm:$0xf] 0
        %527 = vst [vmem:[#allocation2 + $0xc] sm:$0x1] 0
        %528 = vst [vmem:[#allocation2 + $0x10] sm:$0xf] 0
        %529 = vst [vmem:[#allocation2 + $0x14] sm:$0x1] 0
        %530 = vst [vmem:[#allocation2 + $0x18] sm:$0xf] 0
        %531 = vst [vmem:[#allocation2 + $0x1c] sm:$0x1] 0
        %532 = vst [vmem:[#allocation2 + $0x20] sm:$0xf] 0
        %533 = vst [vmem:[#allocation2 + $0x24] sm:$0x1] 0
        %534 = vst [vmem:[#allocation2 + $0x28] sm:$0xf] 0
        %535 = vst [vmem:[#allocation2 + $0x2c] sm:$0x1] 0
        %536 = vst [vmem:[#allocation2 + $0x30] sm:$0xf] 0
        %537 = vst [vmem:[#allocation2 + $0x34] sm:$0x1] 0
        %538 = vst [vmem:[#allocation2 + $0x38] sm:$0xf] 0
        %539 = vst [vmem:[#allocation2 + $0x3c] sm:$0x1] 0
        %540 = vst [vmem:[#allocation2 + $0x40] sm:$0xf] 0
        %541 = vst [vmem:[#allocation2 + $0x44] sm:$0x1] 0
        %542 = vst [vmem:[#allocation2 + $0x48] sm:$0xf] 0
        %543 = vst [vmem:[#allocation2 + $0x4c] sm:$0x1] 0
        %v552 = vunpack.c.l.b16 %v516
        %v553 = vunpack.c.l.b16 %v517
        %v554 = vunpack.c.l.b16 %v518
        %v555 = vunpack.c.l.b16 %v519
        %v556 = vunpack.c.l.b16 %v520
        %v557 = vunpack.c.l.b16 %v521
        %v558 = vunpack.c.l.b16 %v522
        %v559 = vunpack.c.l.b16 %v523
        %v560 = vpack.c.b16 %v552, %v552
        %v561 = vpack.c.b16 %v553, %v553
        %v562 = vpack.c.b16 %v554, %v554
        %v563 = vpack.c.b16 %v555, %v555
        %v564 = vpack.c.b16 %v556, %v556
        %v565 = vpack.c.b16 %v557, %v557
        %v566 = vpack.c.b16 %v558, %v558
        %v567 = vpack.c.b16 %v559, %v559
        %v569 = vshrl.u32 %v560, 16
        %v571 = vrot.slane %v569, 7
        %v572 = vshll.u32 %v560, 16
        %v574 = vor.u32 %v571, %v572
        %v575 = vrot.slane %v571, 4
        %v577 = vshrl.u32 %v561, 16
        %v579 = vrot.slane %v577, 7
        %v580 = vshll.u32 %v561, 16
        %v582 = vor.u32 %v579, %v580
        %v583 = vrot.slane %v579, 4
        %v585 = vshrl.u32 %v562, 16
        %v587 = vrot.slane %v585, 7
        %v588 = vshll.u32 %v562, 16
        %v590 = vor.u32 %v587, %v588
        %v591 = vrot.slane %v587, 4
        %v593 = vshrl.u32 %v563, 16
        %v595 = vrot.slane %v593, 7
        %v596 = vshll.u32 %v563, 16
        %v598 = vor.u32 %v595, %v596
        %v599 = vrot.slane %v595, 4
        %v601 = vshrl.u32 %v564, 16
        %v603 = vrot.slane %v601, 7
        %v604 = vshll.u32 %v564, 16
        %v606 = vor.u32 %v603, %v604
        %v607 = vrot.slane %v603, 4
        %v609 = vshrl.u32 %v565, 16
        %v611 = vrot.slane %v609, 7
        %v612 = vshll.u32 %v565, 16
        %v614 = vor.u32 %v611, %v612
        %v615 = vrot.slane %v611, 4
        %v617 = vshrl.u32 %v566, 16
        %v619 = vrot.slane %v617, 7
        %v620 = vshll.u32 %v566, 16
        %v622 = vor.u32 %v619, %v620
        %v623 = vrot.slane %v619, 4
        %v625 = vshrl.u32 %v567, 16
        %v627 = vrot.slane %v625, 7
        %v628 = vshll.u32 %v567, 16
        %v630 = vor.u32 %v627, %v628
        %v631 = vrot.slane %v627, 4
        %s648 = scalar_lea.vmem [#allocation2], 8
        %vm649 = vcmask 1043456
        %vm650 = vsmask.f32 7938
        %vm651 = vmand %vm649, %vm650
        %v652 = vld [vmem:[%s648] sm:$0xf]
        %v653 = vsel %vm651, %v574, %v652
        %654 = vst [vmem:[%s648] sm:$0xf] %v653
        %vm655 = vcmask 1040384
        %vm656 = vsmask.f32 256
        %vm657 = vmand %vm655, %vm656
        %v658 = vld [vmem:[%s648 + $0x4] sm:$0x1]
        %v659 = vsel %vm657, %v575, %v658
        %660 = vst [vmem:[%s648 + $0x4] sm:$0x1] %v659
        %v661 = vld [vmem:[%s648 + $0x8] sm:$0xf]
        %v662 = vsel %vm651, %v582, %v661
        %663 = vst [vmem:[%s648 + $0x8] sm:$0xf] %v662
        %v664 = vld [vmem:[%s648 + $0xc] sm:$0x1]
        %v665 = vsel %vm657, %v583, %v664
        %666 = vst [vmem:[%s648 + $0xc] sm:$0x1] %v665
        %v667 = vld [vmem:[%s648 + $0x10] sm:$0xf]
        %v668 = vsel %vm651, %v590, %v667
        %669 = vst [vmem:[%s648 + $0x10] sm:$0xf] %v668
        %v670 = vld [vmem:[%s648 + $0x14] sm:$0x1]
        %v671 = vsel %vm657, %v591, %v670
        %672 = vst [vmem:[%s648 + $0x14] sm:$0x1] %v671
        %v673 = vld [vmem:[%s648 + $0x18] sm:$0xf]
        %v674 = vsel %vm651, %v598, %v673
        %675 = vst [vmem:[%s648 + $0x18] sm:$0xf] %v674
        %v676 = vld [vmem:[%s648 + $0x1c] sm:$0x1]
        %v677 = vsel %vm657, %v599, %v676
        %678 = vst [vmem:[%s648 + $0x1c] sm:$0x1] %v677
        %v679 = vld [vmem:[%s648 + $0x20] sm:$0xf]
        %v680 = vsel %vm651, %v606, %v679
        %681 = vst [vmem:[%s648 + $0x20] sm:$0xf] %v680
        %v682 = vld [vmem:[%s648 + $0x24] sm:$0x1]
        %v683 = vsel %vm657, %v607, %v682
        %684 = vst [vmem:[%s648 + $0x24] sm:$0x1] %v683
        %v685 = vld [vmem:[%s648 + $0x28] sm:$0xf]
        %v686 = vsel %vm651, %v614, %v685
        %687 = vst [vmem:[%s648 + $0x28] sm:$0xf] %v686
        %v688 = vld [vmem:[%s648 + $0x2c] sm:$0x1]
        %v689 = vsel %vm657, %v615, %v688
        %690 = vst [vmem:[%s648 + $0x2c] sm:$0x1] %v689
        %v691 = vld [vmem:[%s648 + $0x30] sm:$0xf]
        %v692 = vsel %vm651, %v622, %v691
        %693 = vst [vmem:[%s648 + $0x30] sm:$0xf] %v692
        %v694 = vld [vmem:[%s648 + $0x34] sm:$0x1]
        %v695 = vsel %vm657, %v623, %v694
        %696 = vst [vmem:[%s648 + $0x34] sm:$0x1] %v695
        %v697 = vld [vmem:[%s648 + $0x38] sm:$0xf]
        %v698 = vsel %vm651, %v630, %v697
        %699 = vst [vmem:[%s648 + $0x38] sm:$0xf] %v698
        %v700 = vld [vmem:[%s648 + $0x3c] sm:$0x1]
        %v701 = vsel %vm657, %v631, %v700
        %702 = vst [vmem:[%s648 + $0x3c] sm:$0x1] %v701
        %v703 = vld [vmem:[#allocation2] sm:$0xf]
        %v704 = vld [vmem:[#allocation2 + $0x8] sm:$0xf]
        %v705 = vld [vmem:[#allocation2 + $0x10] sm:$0xf]
        %v706 = vld [vmem:[#allocation2 + $0x18] sm:$0xf]
        %v707 = vld [vmem:[#allocation2 + $0x20] sm:$0xf]
        %v708 = vld [vmem:[#allocation2 + $0x28] sm:$0xf]
        %v709 = vld [vmem:[#allocation2 + $0x30] sm:$0xf]
        %v710 = vld [vmem:[#allocation2 + $0x38] sm:$0xf]
        %v711 = vld [vmem:[#allocation2 + $0x4] sm:$0x1]
        %v712 = vld [vmem:[#allocation2 + $0xc] sm:$0x1]
        %v713 = vld [vmem:[#allocation2 + $0x14] sm:$0x1]
        %v714 = vld [vmem:[#allocation2 + $0x1c] sm:$0x1]
        %v715 = vld [vmem:[#allocation2 + $0x24] sm:$0x1]
        %v716 = vld [vmem:[#allocation2 + $0x2c] sm:$0x1]
        %v717 = vld [vmem:[#allocation2 + $0x34] sm:$0x1]
        %v718 = vld [vmem:[#allocation2 + $0x3c] sm:$0x1]
        %v719 = vld [vmem:[#allocation2] sm:$0xe]
        %v720 = vld [vmem:[#allocation2 + $0x8] sm:$0xe]
        %v721 = vld [vmem:[#allocation2 + $0x10] sm:$0xe]
        %v722 = vld [vmem:[#allocation2 + $0x18] sm:$0xe]
        %v723 = vld [vmem:[#allocation2 + $0x20] sm:$0xe]
        %v724 = vld [vmem:[#allocation2 + $0x28] sm:$0xe]
        %v725 = vld [vmem:[#allocation2 + $0x30] sm:$0xe]
        %v726 = vld [vmem:[#allocation2 + $0x38] sm:$0xe]
        %v727 = vld [vmem:[%s648] sm:$0xf]
        %v728 = vld [vmem:[%s648 + $0x8] sm:$0xf]
        %v729 = vld [vmem:[%s648 + $0x10] sm:$0xf]
        %v730 = vld [vmem:[%s648 + $0x18] sm:$0xf]
        %v731 = vld [vmem:[%s648 + $0x20] sm:$0xf]
        %v732 = vld [vmem:[%s648 + $0x28] sm:$0xf]
        %v733 = vld [vmem:[%s648 + $0x30] sm:$0xf]
        %v734 = vld [vmem:[%s648 + $0x38] sm:$0xf]
        %v735 = vld [vmem:[%s648 + $0x4] sm:$0x1]
        %v736 = vld [vmem:[%s648 + $0xc] sm:$0x1]
        %v737 = vld [vmem:[%s648 + $0x14] sm:$0x1]
        %v738 = vld [vmem:[%s648 + $0x1c] sm:$0x1]
        %v739 = vld [vmem:[%s648 + $0x24] sm:$0x1]
        %v740 = vld [vmem:[%s648 + $0x2c] sm:$0x1]
        %v741 = vld [vmem:[%s648 + $0x34] sm:$0x1]
        %v742 = vld [vmem:[%s648 + $0x3c] sm:$0x1]
        %v743 = vld [vmem:[%s648] sm:$0xe]
        %v744 = vld [vmem:[%s648 + $0x8] sm:$0xe]
        %v745 = vld [vmem:[%s648 + $0x10] sm:$0xe]
        %v746 = vld [vmem:[%s648 + $0x18] sm:$0xe]
        %v747 = vld [vmem:[%s648 + $0x20] sm:$0xe]
        %v748 = vld [vmem:[%s648 + $0x28] sm:$0xe]
        %v749 = vld [vmem:[%s648 + $0x30] sm:$0xe]
        %v750 = vld [vmem:[%s648 + $0x38] sm:$0xe]
        %s751 = scalar_lea.vmem [#allocation2], 16
        %v752 = vld [vmem:[%s751] sm:$0xf]
        %v753 = vld [vmem:[%s751 + $0x8] sm:$0xf]
        %v754 = vld [vmem:[%s751 + $0x10] sm:$0xf]
        %v755 = vld [vmem:[%s751 + $0x18] sm:$0xf]
        %v756 = vld [vmem:[%s751 + $0x20] sm:$0xf]
        %v757 = vld [vmem:[%s751 + $0x28] sm:$0xf]
        %v758 = vld [vmem:[%s751 + $0x30] sm:$0xf]
        %v759 = vld [vmem:[%s751 + $0x38] sm:$0xf]
        %v760 = vld [vmem:[%s751 + $0x4] sm:$0x1]
        %v761 = vld [vmem:[%s751 + $0xc] sm:$0x1]
        %v762 = vld [vmem:[%s751 + $0x14] sm:$0x1]
        %v763 = vld [vmem:[%s751 + $0x1c] sm:$0x1]
        %v764 = vld [vmem:[%s751 + $0x24] sm:$0x1]
        %v765 = vld [vmem:[%s751 + $0x2c] sm:$0x1]
        %v766 = vld [vmem:[%s751 + $0x34] sm:$0x1]
        %v767 = vld [vmem:[%s751 + $0x3c] sm:$0x1]
        %v768 = vld [vmem:[%s751] sm:$0xe]
        %v769 = vld [vmem:[%s751 + $0x8] sm:$0xe]
        %v770 = vld [vmem:[%s751 + $0x10] sm:$0xe]
        %v771 = vld [vmem:[%s751 + $0x18] sm:$0xe]
        %v772 = vld [vmem:[%s751 + $0x20] sm:$0xe]
        %v773 = vld [vmem:[%s751 + $0x28] sm:$0xe]
        %v774 = vld [vmem:[%s751 + $0x30] sm:$0xe]
        %v775 = vld [vmem:[%s751 + $0x38] sm:$0xe]
        %v792 = vunpack.c.l.b16 %v703
        %v793 = vunpack.c.l.b16 %v711
        %v794 = vunpack.c.l.b16 %v704
        %v795 = vunpack.c.l.b16 %v712
        %v796 = vunpack.c.l.b16 %v705
        %v797 = vunpack.c.l.b16 %v713
        %v798 = vunpack.c.l.b16 %v706
        %v799 = vunpack.c.l.b16 %v714
        %v800 = vunpack.c.l.b16 %v707
        %v801 = vunpack.c.l.b16 %v715
        %v802 = vunpack.c.l.b16 %v708
        %v803 = vunpack.c.l.b16 %v716
        %v804 = vunpack.c.l.b16 %v709
        %v805 = vunpack.c.l.b16 %v717
        %v806 = vunpack.c.l.b16 %v710
        %v807 = vunpack.c.l.b16 %v718
        %v808 = vpack.c.b16 %v793, %v792
        %v809 = vpack.c.b16 %v795, %v794
        %v810 = vpack.c.b16 %v797, %v796
        %v811 = vpack.c.b16 %v799, %v798
        %v812 = vpack.c.b16 %v801, %v800
        %v813 = vpack.c.b16 %v803, %v802
        %v814 = vpack.c.b16 %v805, %v804
        %v815 = vpack.c.b16 %v807, %v806
        %v817 = vshrl.u32 %v808, 16
        %v819 = vshll.u32 %v808, 16
        %v821 = vrot.slane %v819, 1
        %v822 = vor.u32 %v817, %v821
        %v824 = vshrl.u32 %v809, 16
        %v826 = vshll.u32 %v809, 16
        %v828 = vrot.slane %v826, 1
        %v829 = vor.u32 %v824, %v828
        %v831 = vshrl.u32 %v810, 16
        %v833 = vshll.u32 %v810, 16
        %v835 = vrot.slane %v833, 1
        %v836 = vor.u32 %v831, %v835
        %v838 = vshrl.u32 %v811, 16
        %v840 = vshll.u32 %v811, 16
        %v842 = vrot.slane %v840, 1
        %v843 = vor.u32 %v838, %v842
        %v845 = vshrl.u32 %v812, 16
        %v847 = vshll.u32 %v812, 16
        %v849 = vrot.slane %v847, 1
        %v850 = vor.u32 %v845, %v849
        %v852 = vshrl.u32 %v813, 16
        %v854 = vshll.u32 %v813, 16
        %v856 = vrot.slane %v854, 1
        %v857 = vor.u32 %v852, %v856
        %v859 = vshrl.u32 %v814, 16
        %v861 = vshll.u32 %v814, 16
        %v863 = vrot.slane %v861, 1
        %v864 = vor.u32 %v859, %v863
        %v866 = vshrl.u32 %v815, 16
        %v868 = vshll.u32 %v815, 16
        %v870 = vrot.slane %v868, 1
        %v871 = vor.u32 %v866, %v870
        %v880 = vunpack.c.l.b16 %v719
        %v881 = vunpack.c.l.b16 %v720
        %v882 = vunpack.c.l.b16 %v721
        %v883 = vunpack.c.l.b16 %v722
        %v884 = vunpack.c.l.b16 %v723
        %v885 = vunpack.c.l.b16 %v724
        %v886 = vunpack.c.l.b16 %v725
        %v887 = vunpack.c.l.b16 %v726
        %v888 = vpack.c.b16 %v793, %v880
        %v889 = vpack.c.b16 %v795, %v881
        %v890 = vpack.c.b16 %v797, %v882
        %v891 = vpack.c.b16 %v799, %v883
        %v892 = vpack.c.b16 %v801, %v884
        %v893 = vpack.c.b16 %v803, %v885
        %v894 = vpack.c.b16 %v805, %v886
        %v895 = vpack.c.b16 %v807, %v887
        %v896 = vrot.slane %v888, 1
        %v897 = vrot.slane %v889, 1
        %v898 = vrot.slane %v890, 1
        %v899 = vrot.slane %v891, 1
        %v900 = vrot.slane %v892, 1
        %v901 = vrot.slane %v893, 1
        %v902 = vrot.slane %v894, 1
        %v903 = vrot.slane %v895, 1
        %v920 = vunpack.c.l.b16 %v727
        %v921 = vunpack.c.l.b16 %v735
        %v922 = vunpack.c.l.b16 %v728
        %v923 = vunpack.c.l.b16 %v736
        %v924 = vunpack.c.l.b16 %v729
        %v925 = vunpack.c.l.b16 %v737
        %v926 = vunpack.c.l.b16 %v730
        %v927 = vunpack.c.l.b16 %v738
        %v928 = vunpack.c.l.b16 %v731
        %v929 = vunpack.c.l.b16 %v739
        %v930 = vunpack.c.l.b16 %v732
        %v931 = vunpack.c.l.b16 %v740
        %v932 = vunpack.c.l.b16 %v733
        %v933 = vunpack.c.l.b16 %v741
        %v934 = vunpack.c.l.b16 %v734
        %v935 = vunpack.c.l.b16 %v742
        %v936 = vpack.c.b16 %v921, %v920
        %v937 = vpack.c.b16 %v923, %v922
        %v938 = vpack.c.b16 %v925, %v924
        %v939 = vpack.c.b16 %v927, %v926
        %v940 = vpack.c.b16 %v929, %v928
        %v941 = vpack.c.b16 %v931, %v930
        %v942 = vpack.c.b16 %v933, %v932
        %v943 = vpack.c.b16 %v935, %v934
        %v945 = vshrl.u32 %v936, 16
        %v947 = vshll.u32 %v936, 16
        %v949 = vrot.slane %v947, 1
        %v950 = vor.u32 %v945, %v949
        %v952 = vshrl.u32 %v937, 16
        %v954 = vshll.u32 %v937, 16
        %v956 = vrot.slane %v954, 1
        %v957 = vor.u32 %v952, %v956
        %v959 = vshrl.u32 %v938, 16
        %v961 = vshll.u32 %v938, 16
        %v963 = vrot.slane %v961, 1
        %v964 = vor.u32 %v959, %v963
        %v966 = vshrl.u32 %v939, 16
        %v968 = vshll.u32 %v939, 16
        %v970 = vrot.slane %v968, 1
        %v971 = vor.u32 %v966, %v970
        %v973 = vshrl.u32 %v940, 16
        %v975 = vshll.u32 %v940, 16
        %v977 = vrot.slane %v975, 1
        %v978 = vor.u32 %v973, %v977
        %v980 = vshrl.u32 %v941, 16
        %v982 = vshll.u32 %v941, 16
        %v984 = vrot.slane %v982, 1
        %v985 = vor.u32 %v980, %v984
        %v987 = vshrl.u32 %v942, 16
        %v989 = vshll.u32 %v942, 16
        %v991 = vrot.slane %v989, 1
        %v992 = vor.u32 %v987, %v991
        %v994 = vshrl.u32 %v943, 16
        %v996 = vshll.u32 %v943, 16
        %v998 = vrot.slane %v996, 1
        %v999 = vor.u32 %v994, %v998
        %v1008 = vunpack.c.l.b16 %v743
        %v1009 = vunpack.c.l.b16 %v744
        %v1010 = vunpack.c.l.b16 %v745
        %v1011 = vunpack.c.l.b16 %v746
        %v1012 = vunpack.c.l.b16 %v747
        %v1013 = vunpack.c.l.b16 %v748
        %v1014 = vunpack.c.l.b16 %v749
        %v1015 = vunpack.c.l.b16 %v750
        %v1016 = vpack.c.b16 %v921, %v1008
        %v1017 = vpack.c.b16 %v923, %v1009
        %v1018 = vpack.c.b16 %v925, %v1010
        %v1019 = vpack.c.b16 %v927, %v1011
        %v1020 = vpack.c.b16 %v929, %v1012
        %v1021 = vpack.c.b16 %v931, %v1013
        %v1022 = vpack.c.b16 %v933, %v1014
        %v1023 = vpack.c.b16 %v935, %v1015
        %v1024 = vrot.slane %v1016, 1
        %v1025 = vrot.slane %v1017, 1
        %v1026 = vrot.slane %v1018, 1
        %v1027 = vrot.slane %v1019, 1
        %v1028 = vrot.slane %v1020, 1
        %v1029 = vrot.slane %v1021, 1
        %v1030 = vrot.slane %v1022, 1
        %v1031 = vrot.slane %v1023, 1
        %v1048 = vunpack.c.l.b16 %v752
        %v1049 = vunpack.c.l.b16 %v760
        %v1050 = vunpack.c.l.b16 %v753
        %v1051 = vunpack.c.l.b16 %v761
        %v1052 = vunpack.c.l.b16 %v754
        %v1053 = vunpack.c.l.b16 %v762
        %v1054 = vunpack.c.l.b16 %v755
        %v1055 = vunpack.c.l.b16 %v763
        %v1056 = vunpack.c.l.b16 %v756
        %v1057 = vunpack.c.l.b16 %v764
        %v1058 = vunpack.c.l.b16 %v757
        %v1059 = vunpack.c.l.b16 %v765
        %v1060 = vunpack.c.l.b16 %v758
        %v1061 = vunpack.c.l.b16 %v766
        %v1062 = vunpack.c.l.b16 %v759
        %v1063 = vunpack.c.l.b16 %v767
        %v1064 = vpack.c.b16 %v1049, %v1048
        %v1065 = vpack.c.b16 %v1051, %v1050
        %v1066 = vpack.c.b16 %v1053, %v1052
        %v1067 = vpack.c.b16 %v1055, %v1054
        %v1068 = vpack.c.b16 %v1057, %v1056
        %v1069 = vpack.c.b16 %v1059, %v1058
        %v1070 = vpack.c.b16 %v1061, %v1060
        %v1071 = vpack.c.b16 %v1063, %v1062
        %v1073 = vshrl.u32 %v1064, 16
        %v1075 = vshll.u32 %v1064, 16
        %v1077 = vrot.slane %v1075, 1
        %v1078 = vor.u32 %v1073, %v1077
        %v1080 = vshrl.u32 %v1065, 16
        %v1082 = vshll.u32 %v1065, 16
        %v1084 = vrot.slane %v1082, 1
        %v1085 = vor.u32 %v1080, %v1084
        %v1087 = vshrl.u32 %v1066, 16
        %v1089 = vshll.u32 %v1066, 16
        %v1091 = vrot.slane %v1089, 1
        %v1092 = vor.u32 %v1087, %v1091
        %v1094 = vshrl.u32 %v1067, 16
        %v1096 = vshll.u32 %v1067, 16
        %v1098 = vrot.slane %v1096, 1
        %v1099 = vor.u32 %v1094, %v1098
        %v1101 = vshrl.u32 %v1068, 16
        %v1103 = vshll.u32 %v1068, 16
        %v1105 = vrot.slane %v1103, 1
        %v1106 = vor.u32 %v1101, %v1105
        %v1108 = vshrl.u32 %v1069, 16
        %v1110 = vshll.u32 %v1069, 16
        %v1112 = vrot.slane %v1110, 1
        %v1113 = vor.u32 %v1108, %v1112
        %v1115 = vshrl.u32 %v1070, 16
        %v1117 = vshll.u32 %v1070, 16
        %v1119 = vrot.slane %v1117, 1
        %v1120 = vor.u32 %v1115, %v1119
        %v1122 = vshrl.u32 %v1071, 16
        %v1124 = vshll.u32 %v1071, 16
        %v1126 = vrot.slane %v1124, 1
        %v1127 = vor.u32 %v1122, %v1126
        %v1136 = vunpack.c.l.b16 %v768
        %v1137 = vunpack.c.l.b16 %v769
        %v1138 = vunpack.c.l.b16 %v770
        %v1139 = vunpack.c.l.b16 %v771
        %v1140 = vunpack.c.l.b16 %v772
        %v1141 = vunpack.c.l.b16 %v773
        %v1142 = vunpack.c.l.b16 %v774
        %v1143 = vunpack.c.l.b16 %v775
        %v1144 = vpack.c.b16 %v1049, %v1136
        %v1145 = vpack.c.b16 %v1051, %v1137
        %v1146 = vpack.c.b16 %v1053, %v1138
        %v1147 = vpack.c.b16 %v1055, %v1139
        %v1148 = vpack.c.b16 %v1057, %v1140
        %v1149 = vpack.c.b16 %v1059, %v1141
        %v1150 = vpack.c.b16 %v1061, %v1142
        %v1151 = vpack.c.b16 %v1063, %v1143
        %v1152 = vrot.slane %v1144, 1
        %v1153 = vrot.slane %v1145, 1
        %v1154 = vrot.slane %v1146, 1
        %v1155 = vrot.slane %v1147, 1
        %v1156 = vrot.slane %v1148, 1
        %v1157 = vrot.slane %v1149, 1
        %v1158 = vrot.slane %v1150, 1
        %v1159 = vrot.slane %v1151, 1
        %v1160 = vunpack.c.l.b16 %v822
        %v1161 = vunpack.c.l.b16 %v896
        %v1162 = vunpack.c.l.b16 %v950
        %v1163 = vunpack.c.l.b16 %v1024
        %v1164 = vunpack.c.l.b16 %v1078
        %v1165 = vunpack.c.l.b16 %v1152
        %v1166 = vunpack.c.l.b16 %v829
        %v1167 = vunpack.c.l.b16 %v897
        %v1168 = vunpack.c.l.b16 %v957
        %v1169 = vunpack.c.l.b16 %v1025
        %v1170 = vunpack.c.l.b16 %v1085
        %v1171 = vunpack.c.l.b16 %v1153
        %v1172 = vunpack.c.l.b16 %v836
        %v1173 = vunpack.c.l.b16 %v898
        %v1174 = vunpack.c.l.b16 %v964
        %v1175 = vunpack.c.l.b16 %v1026
        %v1176 = vunpack.c.l.b16 %v1092
        %v1177 = vunpack.c.l.b16 %v1154
        %v1178 = vunpack.c.l.b16 %v843
        %v1179 = vunpack.c.l.b16 %v899
        %v1180 = vunpack.c.l.b16 %v971
        %v1181 = vunpack.c.l.b16 %v1027
        %v1182 = vunpack.c.l.b16 %v1099
        %v1183 = vunpack.c.l.b16 %v1155
        %v1184 = vunpack.c.l.b16 %v850
        %v1185 = vunpack.c.l.b16 %v900
        %v1186 = vunpack.c.l.b16 %v978
        %v1187 = vunpack.c.l.b16 %v1028
        %v1188 = vunpack.c.l.b16 %v1106
        %v1189 = vunpack.c.l.b16 %v1156
        %v1190 = vunpack.c.l.b16 %v857
        %v1191 = vunpack.c.l.b16 %v901
        %v1192 = vunpack.c.l.b16 %v985
        %v1193 = vunpack.c.l.b16 %v1029
        %v1194 = vunpack.c.l.b16 %v1113
        %v1195 = vunpack.c.l.b16 %v1157
        %v1196 = vunpack.c.l.b16 %v864
        %v1197 = vunpack.c.l.b16 %v902
        %v1198 = vunpack.c.l.b16 %v992
        %v1199 = vunpack.c.l.b16 %v1030
        %v1200 = vunpack.c.l.b16 %v1120
        %v1201 = vunpack.c.l.b16 %v1158
        %v1202 = vunpack.c.l.b16 %v871
        %v1203 = vunpack.c.l.b16 %v903
        %v1204 = vunpack.c.l.b16 %v999
        %v1205 = vunpack.c.l.b16 %v1031
        %v1206 = vunpack.c.l.b16 %v1127
        %v1207 = vunpack.c.l.b16 %v1159
        %v1208 = vld [vmem:[%s3] sm:$0xf]
        %v1209 = vld [vmem:[%s3 + $0x4] sm:$0xf]
        %v1210 = vld [vmem:[%s3 + $0x8] sm:$0xf]
        %v1211 = vld [vmem:[%s3 + $0xc] sm:$0xf]
        %v1212 = vld [vmem:[%s3 + $0x10] sm:$0xf]
        %v1213 = vld [vmem:[%s3 + $0x14] sm:$0xf]
        %v1214 = vld [vmem:[%s3 + $0x18] sm:$0xf]
        %v1215 = vld [vmem:[%s3 + $0x1c] sm:$0xf]
        %v1216 = vld [vmem:[%s3 + $0x20] sm:$0xf]
        %v1217 = vld [vmem:[%s3 + $0x24] sm:$0xf]
        %v1218 = vld [vmem:[%s3 + $0x28] sm:$0xf]
        %v1219 = vld [vmem:[%s3 + $0x2c] sm:$0xf]
        %v1220 = vld [vmem:[%s3 + $0x30] sm:$0xf]
        %v1221 = vld [vmem:[%s3 + $0x34] sm:$0xf]
        %v1222 = vld [vmem:[%s3 + $0x38] sm:$0xf]
        %v1223 = vld [vmem:[%s3 + $0x3c] sm:$0xf]
        %v1224 = vld [vmem:[%s3 + $0x40] sm:$0xf]
        %v1225 = vld [vmem:[%s3 + $0x44] sm:$0xf]
        %v1226 = vld [vmem:[%s3 + $0x48] sm:$0xf]
        %v1227 = vld [vmem:[%s3 + $0x4c] sm:$0xf]
        %v1228 = vld [vmem:[%s3 + $0x50] sm:$0xf]
        %v1229 = vld [vmem:[%s3 + $0x54] sm:$0xf]
        %v1230 = vld [vmem:[%s3 + $0x58] sm:$0xf]
        %v1231 = vld [vmem:[%s3 + $0x5c] sm:$0xf]
        %v1232 = vld [vmem:[%s3 + $0x60] sm:$0xf]
        %v1233 = vld [vmem:[%s3 + $0x64] sm:$0xf]
        %v1234 = vld [vmem:[%s3 + $0x68] sm:$0xf]
        %v1235 = vld [vmem:[%s3 + $0x6c] sm:$0xf]
        %v1236 = vld [vmem:[%s3 + $0x70] sm:$0xf]
        %v1237 = vld [vmem:[%s3 + $0x74] sm:$0xf]
        %v1238 = vld [vmem:[%s3 + $0x78] sm:$0xf]
        %v1239 = vld [vmem:[%s3 + $0x7c] sm:$0xf]
        %v1240 = vld [vmem:[%s3 + $0x80] sm:$0xf]
        %v1241 = vld [vmem:[%s3 + $0x84] sm:$0xf]
        %v1242 = vld [vmem:[%s3 + $0x88] sm:$0xf]
        %v1243 = vld [vmem:[%s3 + $0x8c] sm:$0xf]
        %v1244 = vld [vmem:[%s3 + $0x90] sm:$0xf]
        %v1245 = vld [vmem:[%s3 + $0x94] sm:$0xf]
        %v1246 = vld [vmem:[%s3 + $0x98] sm:$0xf]
        %v1247 = vld [vmem:[%s3 + $0x9c] sm:$0xf]
        %v1248 = vld [vmem:[%s3 + $0xa0] sm:$0xf]
        %v1249 = vld [vmem:[%s3 + $0xa4] sm:$0xf]
        %v1250 = vld [vmem:[%s3 + $0xa8] sm:$0xf]
        %v1251 = vld [vmem:[%s3 + $0xac] sm:$0xf]
        %v1252 = vld [vmem:[%s3 + $0xb0] sm:$0xf]
        %v1253 = vld [vmem:[%s3 + $0xb4] sm:$0xf]
        %v1254 = vld [vmem:[%s3 + $0xb8] sm:$0xf]
        %v1255 = vld [vmem:[%s3 + $0xbc] sm:$0xf]
        %v1256 = vld [vmem:[%s3 + $0xc0] sm:$0xf]
        %v1257 = vld [vmem:[%s3 + $0xc4] sm:$0xf]
        %v1258 = vld [vmem:[%s3 + $0xc8] sm:$0xf]
        %v1259 = vld [vmem:[%s3 + $0xcc] sm:$0xf]
        %v1260 = vld [vmem:[%s3 + $0xd0] sm:$0xf]
        %v1261 = vld [vmem:[%s3 + $0xd4] sm:$0xf]
        %v1262 = vld [vmem:[%s3 + $0xd8] sm:$0xf]
        %v1263 = vld [vmem:[%s3 + $0xdc] sm:$0xf]
        %v1264 = vld [vmem:[%s3 + $0xe0] sm:$0xf]
        %v1265 = vld [vmem:[%s3 + $0xe4] sm:$0xf]
        %v1266 = vld [vmem:[%s3 + $0xe8] sm:$0xf]
        %v1267 = vld [vmem:[%s3 + $0xec] sm:$0xf]
        %v1268 = vld [vmem:[%s3 + $0xf0] sm:$0xf]
        %v1269 = vld [vmem:[%s3 + $0xf4] sm:$0xf]
        %v1270 = vld [vmem:[%s3 + $0xf8] sm:$0xf]
        %v1271 = vld [vmem:[%s3 + $0xfc] sm:$0xf]
        %v1272 = vld [vmem:[%s3 + $0x100] sm:$0xf]
        %v1273 = vld [vmem:[%s3 + $0x104] sm:$0xf]
        %v1274 = vld [vmem:[%s3 + $0x108] sm:$0xf]
        %v1275 = vld [vmem:[%s3 + $0x10c] sm:$0xf]
        %v1276 = vld [vmem:[%s3 + $0x110] sm:$0xf]
        %v1277 = vld [vmem:[%s3 + $0x114] sm:$0xf]
        %v1278 = vld [vmem:[%s3 + $0x118] sm:$0xf]
        %v1279 = vld [vmem:[%s3 + $0x11c] sm:$0xf]
        %v1280 = vld [vmem:[%s3 + $0x120] sm:$0xf]
        %v1281 = vld [vmem:[%s3 + $0x124] sm:$0xf]
        %v1282 = vld [vmem:[%s3 + $0x128] sm:$0xf]
        %v1283 = vld [vmem:[%s3 + $0x12c] sm:$0xf]
        %v1284 = vld [vmem:[%s3 + $0x130] sm:$0xf]
        %v1285 = vld [vmem:[%s3 + $0x134] sm:$0xf]
        %v1286 = vld [vmem:[%s3 + $0x138] sm:$0xf]
        %v1287 = vld [vmem:[%s3 + $0x13c] sm:$0xf]
        %v1288 = vld [vmem:[%s3 + $0x140] sm:$0xf]
        %v1289 = vld [vmem:[%s3 + $0x144] sm:$0xf]
        %v1290 = vld [vmem:[%s3 + $0x148] sm:$0xf]
        %v1291 = vld [vmem:[%s3 + $0x14c] sm:$0xf]
        %v1292 = vld [vmem:[%s3 + $0x150] sm:$0xf]
        %v1293 = vld [vmem:[%s3 + $0x154] sm:$0xf]
        %v1294 = vld [vmem:[%s3 + $0x158] sm:$0xf]
        %v1295 = vld [vmem:[%s3 + $0x15c] sm:$0xf]
        %v1296 = vld [vmem:[%s3 + $0x160] sm:$0xf]
        %v1297 = vld [vmem:[%s3 + $0x164] sm:$0xf]
        %v1298 = vld [vmem:[%s3 + $0x168] sm:$0xf]
        %v1299 = vld [vmem:[%s3 + $0x16c] sm:$0xf]
        %v1300 = vld [vmem:[%s3 + $0x170] sm:$0xf]
        %v1301 = vld [vmem:[%s3 + $0x174] sm:$0xf]
        %v1302 = vld [vmem:[%s3 + $0x178] sm:$0xf]
        %v1303 = vld [vmem:[%s3 + $0x17c] sm:$0xf]
        %v1304 = vld [vmem:[%s3 + $0x180] sm:$0xf]
        %v1305 = vld [vmem:[%s3 + $0x184] sm:$0xf]
        %v1306 = vld [vmem:[%s3 + $0x188] sm:$0xf]
        %v1307 = vld [vmem:[%s3 + $0x18c] sm:$0xf]
        %v1308 = vld [vmem:[%s3 + $0x190] sm:$0xf]
        %v1309 = vld [vmem:[%s3 + $0x194] sm:$0xf]
        %v1310 = vld [vmem:[%s3 + $0x198] sm:$0xf]
        %v1311 = vld [vmem:[%s3 + $0x19c] sm:$0xf]
        %v1312 = vld [vmem:[%s3 + $0x1a0] sm:$0xf]
        %v1313 = vld [vmem:[%s3 + $0x1a4] sm:$0xf]
        %v1314 = vld [vmem:[%s3 + $0x1a8] sm:$0xf]
        %v1315 = vld [vmem:[%s3 + $0x1ac] sm:$0xf]
        %v1316 = vld [vmem:[%s3 + $0x1b0] sm:$0xf]
        %v1317 = vld [vmem:[%s3 + $0x1b4] sm:$0xf]
        %v1318 = vld [vmem:[%s3 + $0x1b8] sm:$0xf]
        %v1319 = vld [vmem:[%s3 + $0x1bc] sm:$0xf]
        %v1320 = vld [vmem:[%s3 + $0x1c0] sm:$0xf]
        %v1321 = vld [vmem:[%s3 + $0x1c4] sm:$0xf]
        %v1322 = vld [vmem:[%s3 + $0x1c8] sm:$0xf]
        %v1323 = vld [vmem:[%s3 + $0x1cc] sm:$0xf]
        %v1324 = vld [vmem:[%s3 + $0x1d0] sm:$0xf]
        %v1325 = vld [vmem:[%s3 + $0x1d4] sm:$0xf]
        %v1326 = vld [vmem:[%s3 + $0x1d8] sm:$0xf]
        %v1327 = vld [vmem:[%s3 + $0x1dc] sm:$0xf]
        %v1328 = vld [vmem:[%s3 + $0x1e0] sm:$0xf]
        %v1329 = vld [vmem:[%s3 + $0x1e4] sm:$0xf]
        %v1330 = vld [vmem:[%s3 + $0x1e8] sm:$0xf]
        %v1331 = vld [vmem:[%s3 + $0x1ec] sm:$0xf]
        %v1332 = vld [vmem:[%s3 + $0x1f0] sm:$0xf]
        %v1333 = vld [vmem:[%s3 + $0x1f4] sm:$0xf]
        %v1334 = vld [vmem:[%s3 + $0x1f8] sm:$0xf]
        %v1335 = vld [vmem:[%s3 + $0x1fc] sm:$0xf]
        %v1336 = vld [vmem:[%s3 + $0x200] sm:$0xf]
        %v1337 = vld [vmem:[%s3 + $0x204] sm:$0xf]
        %v1338 = vld [vmem:[%s3 + $0x208] sm:$0xf]
        %v1339 = vld [vmem:[%s3 + $0x20c] sm:$0xf]
        %v1340 = vld [vmem:[%s3 + $0x210] sm:$0xf]
        %v1341 = vld [vmem:[%s3 + $0x214] sm:$0xf]
        %v1342 = vld [vmem:[%s3 + $0x218] sm:$0xf]
        %v1343 = vld [vmem:[%s3 + $0x21c] sm:$0xf]
        %v1344 = vld [vmem:[%s3 + $0x220] sm:$0xf]
        %v1345 = vld [vmem:[%s3 + $0x224] sm:$0xf]
        %v1346 = vld [vmem:[%s3 + $0x228] sm:$0xf]
        %v1347 = vld [vmem:[%s3 + $0x22c] sm:$0xf]
        %v1348 = vld [vmem:[%s3 + $0x230] sm:$0xf]
        %v1349 = vld [vmem:[%s3 + $0x234] sm:$0xf]
        %v1350 = vld [vmem:[%s3 + $0x238] sm:$0xf]
        %v1351 = vld [vmem:[%s3 + $0x23c] sm:$0xf]
        %v1352 = vld [vmem:[%s4] sm:$0x1]
        %v1354 = vlaneseq
        %v1355 = vshrl.u32 %v1354, 7
        %v1356 = vsub.s32 0, %v1355
        %v1357 = vrot.slane %v1352, %v1356
        %v1359 = vpack.c.b16 %v794, %v792
        %v1360 = vpack.c.b16 %v1166, %v1160
        %v1361 = vpack.c.b16 %v1167, %v1161
        %v1362 = vpack.c.b16 %v922, %v920
        %v1363 = vpack.c.b16 %v1168, %v1162
        %v1364 = vpack.c.b16 %v1169, %v1163
        %v1365 = vpack.c.b16 %v1050, %v1048
        %v1366 = vpack.c.b16 %v1170, %v1164
        %v1367 = vpack.c.b16 %v1171, %v1165
        %v1368 = vpack.c.b16 %v798, %v796
        %v1369 = vpack.c.b16 %v1178, %v1172
        %v1370 = vpack.c.b16 %v1179, %v1173
        %v1371 = vpack.c.b16 %v926, %v924
        %v1372 = vpack.c.b16 %v1180, %v1174
        %v1373 = vpack.c.b16 %v1181, %v1175
        %v1374 = vpack.c.b16 %v1054, %v1052
        %v1375 = vpack.c.b16 %v1182, %v1176
        %v1376 = vpack.c.b16 %v1183, %v1177
        %v1377 = vpack.c.b16 %v802, %v800
        %v1378 = vpack.c.b16 %v1190, %v1184
        %v1379 = vpack.c.b16 %v1191, %v1185
        %v1380 = vpack.c.b16 %v930, %v928
        %v1381 = vpack.c.b16 %v1192, %v1186
        %v1382 = vpack.c.b16 %v1193, %v1187
        %v1383 = vpack.c.b16 %v1058, %v1056
        %v1384 = vpack.c.b16 %v1194, %v1188
        %v1385 = vpack.c.b16 %v1195, %v1189
        %v1386 = vpack.c.b16 %v806, %v804
        %v1387 = vpack.c.b16 %v1202, %v1196
        %v1388 = vpack.c.b16 %v1203, %v1197
        %v1389 = vpack.c.b16 %v934, %v932
        %v1390 = vpack.c.b16 %v1204, %v1198
        %v1391 = vpack.c.b16 %v1205, %v1199
        %v1392 = vpack.c.b16 %v1062, %v1060
        %v1393 = vpack.c.b16 %v1206, %v1200
        %v1394 = vpack.c.b16 %v1207, %v1201
        %v1575 = vunpack.c.l.b16 %v1208
        %v1576 = vunpack.c.l.b16 %v1209
        %v1577 = vunpack.c.l.b16 %v1210
        %v1578 = vunpack.c.l.b16 %v1211
        %v1579 = vunpack.c.l.b16 %v1212
        %v1580 = vunpack.c.l.b16 %v1213
        %v1581 = vunpack.c.l.b16 %v1214
        %v1582 = vunpack.c.l.b16 %v1215
        %v1583 = vunpack.c.l.b16 %v1216
        %v1584 = vunpack.c.l.b16 %v1217
        %v1585 = vunpack.c.l.b16 %v1218
        %v1586 = vunpack.c.l.b16 %v1219
        %v1587 = vunpack.c.l.b16 %v1220
        %v1588 = vunpack.c.l.b16 %v1221
        %v1589 = vunpack.c.l.b16 %v1222
        %v1590 = vunpack.c.l.b16 %v1223
        %v1591 = vunpack.c.l.b16 %v1224
        %v1592 = vunpack.c.l.b16 %v1225
        %v1593 = vunpack.c.l.b16 %v1226
        %v1594 = vunpack.c.l.b16 %v1227
        %v1595 = vunpack.c.l.b16 %v1228
        %v1596 = vunpack.c.l.b16 %v1229
        %v1597 = vunpack.c.l.b16 %v1230
        %v1598 = vunpack.c.l.b16 %v1231
        %v1599 = vunpack.c.l.b16 %v1232
        %v1600 = vunpack.c.l.b16 %v1233
        %v1601 = vunpack.c.l.b16 %v1234
        %v1602 = vunpack.c.l.b16 %v1235
        %v1603 = vunpack.c.l.b16 %v1236
        %v1604 = vunpack.c.l.b16 %v1237
        %v1605 = vunpack.c.l.b16 %v1238
        %v1606 = vunpack.c.l.b16 %v1239
        %v1607 = vunpack.c.l.b16 %v1240
        %v1608 = vunpack.c.l.b16 %v1241
        %v1609 = vunpack.c.l.b16 %v1242
        %v1610 = vunpack.c.l.b16 %v1243
        %v1611 = vunpack.c.l.b16 %v1244
        %v1612 = vunpack.c.l.b16 %v1245
        %v1613 = vunpack.c.l.b16 %v1246
        %v1614 = vunpack.c.l.b16 %v1247
        %v1615 = vunpack.c.l.b16 %v1248
        %v1616 = vunpack.c.l.b16 %v1249
        %v1617 = vunpack.c.l.b16 %v1250
        %v1618 = vunpack.c.l.b16 %v1251
        %v1619 = vunpack.c.l.b16 %v1252
        %v1620 = vunpack.c.l.b16 %v1253
        %v1621 = vunpack.c.l.b16 %v1254
        %v1622 = vunpack.c.l.b16 %v1255
        %v1623 = vunpack.c.l.b16 %v1256
        %v1624 = vunpack.c.l.b16 %v1257
        %v1625 = vunpack.c.l.b16 %v1258
        %v1626 = vunpack.c.l.b16 %v1259
        %v1627 = vunpack.c.l.b16 %v1260
        %v1628 = vunpack.c.l.b16 %v1261
        %v1629 = vunpack.c.l.b16 %v1262
        %v1630 = vunpack.c.l.b16 %v1263
        %v1631 = vunpack.c.l.b16 %v1264
        %v1632 = vunpack.c.l.b16 %v1265
        %v1633 = vunpack.c.l.b16 %v1266
        %v1634 = vunpack.c.l.b16 %v1267
        %v1635 = vunpack.c.l.b16 %v1268
        %v1636 = vunpack.c.l.b16 %v1269
        %v1637 = vunpack.c.l.b16 %v1270
        %v1638 = vunpack.c.l.b16 %v1271
        %v1639 = vunpack.c.l.b16 %v1272
        %v1640 = vunpack.c.l.b16 %v1273
        %v1641 = vunpack.c.l.b16 %v1274
        %v1642 = vunpack.c.l.b16 %v1275
        %v1643 = vunpack.c.l.b16 %v1276
        %v1644 = vunpack.c.l.b16 %v1277
        %v1645 = vunpack.c.l.b16 %v1278
        %v1646 = vunpack.c.l.b16 %v1279
        %v1647 = vunpack.c.l.b16 %v1280
        %v1648 = vunpack.c.l.b16 %v1281
        %v1649 = vunpack.c.l.b16 %v1282
        %v1650 = vunpack.c.l.b16 %v1283
        %v1651 = vunpack.c.l.b16 %v1284
        %v1652 = vunpack.c.l.b16 %v1285
        %v1653 = vunpack.c.l.b16 %v1286
        %v1654 = vunpack.c.l.b16 %v1287
        %v1655 = vunpack.c.l.b16 %v1288
        %v1656 = vunpack.c.l.b16 %v1289
        %v1657 = vunpack.c.l.b16 %v1290
        %v1658 = vunpack.c.l.b16 %v1291
        %v1659 = vunpack.c.l.b16 %v1292
        %v1660 = vunpack.c.l.b16 %v1293
        %v1661 = vunpack.c.l.b16 %v1294
        %v1662 = vunpack.c.l.b16 %v1295
        %v1663 = vunpack.c.l.b16 %v1296
        %v1664 = vunpack.c.l.b16 %v1297
        %v1665 = vunpack.c.l.b16 %v1298
        %v1666 = vunpack.c.l.b16 %v1299
        %v1667 = vunpack.c.l.b16 %v1300
        %v1668 = vunpack.c.l.b16 %v1301
        %v1669 = vunpack.c.l.b16 %v1302
        %v1670 = vunpack.c.l.b16 %v1303
        %v1671 = vunpack.c.l.b16 %v1304
        %v1672 = vunpack.c.l.b16 %v1305
        %v1673 = vunpack.c.l.b16 %v1306
        %v1674 = vunpack.c.l.b16 %v1307
        %v1675 = vunpack.c.l.b16 %v1308
        %v1676 = vunpack.c.l.b16 %v1309
        %v1677 = vunpack.c.l.b16 %v1310
        %v1678 = vunpack.c.l.b16 %v1311
        %v1679 = vunpack.c.l.b16 %v1312
        %v1680 = vunpack.c.l.b16 %v1313
        %v1681 = vunpack.c.l.b16 %v1314
        %v1682 = vunpack.c.l.b16 %v1315
        %v1683 = vunpack.c.l.b16 %v1316
        %v1684 = vunpack.c.l.b16 %v1317
        %v1685 = vunpack.c.l.b16 %v1318
        %v1686 = vunpack.c.l.b16 %v1319
        %v1687 = vunpack.c.l.b16 %v1320
        %v1688 = vunpack.c.l.b16 %v1321
        %v1689 = vunpack.c.l.b16 %v1322
        %v1690 = vunpack.c.l.b16 %v1323
        %v1691 = vunpack.c.l.b16 %v1324
        %v1692 = vunpack.c.l.b16 %v1325
        %v1693 = vunpack.c.l.b16 %v1326
        %v1694 = vunpack.c.l.b16 %v1327
        %v1695 = vunpack.c.l.b16 %v1328
        %v1696 = vunpack.c.l.b16 %v1329
        %v1697 = vunpack.c.l.b16 %v1330
        %v1698 = vunpack.c.l.b16 %v1331
        %v1699 = vunpack.c.l.b16 %v1332
        %v1700 = vunpack.c.l.b16 %v1333
        %v1701 = vunpack.c.l.b16 %v1334
        %v1702 = vunpack.c.l.b16 %v1335
        %v1703 = vunpack.c.l.b16 %v1336
        %v1704 = vunpack.c.l.b16 %v1337
        %v1705 = vunpack.c.l.b16 %v1338
        %v1706 = vunpack.c.l.b16 %v1339
        %v1707 = vunpack.c.l.b16 %v1340
        %v1708 = vunpack.c.l.b16 %v1341
        %v1709 = vunpack.c.l.b16 %v1342
        %v1710 = vunpack.c.l.b16 %v1343
        %v1711 = vunpack.c.l.b16 %v1344
        %v1712 = vunpack.c.l.b16 %v1345
        %v1713 = vunpack.c.l.b16 %v1346
        %v1714 = vunpack.c.l.b16 %v1347
        %v1715 = vunpack.c.l.b16 %v1348
        %v1716 = vunpack.c.l.b16 %v1349
        %v1717 = vunpack.c.l.b16 %v1350
        %v1718 = vunpack.c.l.b16 %v1351
        %v1719 = vpack.c.b16 %v1576, %v1575
        %v1720 = vpack.c.b16 %v1578, %v1577
        %v1721 = vpack.c.b16 %v1580, %v1579
        %v1722 = vpack.c.b16 %v1582, %v1581
        %v1723 = vpack.c.b16 %v1584, %v1583
        %v1724 = vpack.c.b16 %v1586, %v1585
        %v1725 = vpack.c.b16 %v1588, %v1587
        %v1726 = vpack.c.b16 %v1590, %v1589
        %v1727 = vpack.c.b16 %v1592, %v1591
        %v1728 = vpack.c.b16 %v1594, %v1593
        %v1729 = vpack.c.b16 %v1596, %v1595
        %v1730 = vpack.c.b16 %v1598, %v1597
        %v1731 = vpack.c.b16 %v1600, %v1599
        %v1732 = vpack.c.b16 %v1602, %v1601
        %v1733 = vpack.c.b16 %v1604, %v1603
        %v1734 = vpack.c.b16 %v1606, %v1605
        %v1735 = vpack.c.b16 %v1608, %v1607
        %v1736 = vpack.c.b16 %v1610, %v1609
        %v1737 = vpack.c.b16 %v1612, %v1611
        %v1738 = vpack.c.b16 %v1614, %v1613
        %v1739 = vpack.c.b16 %v1616, %v1615
        %v1740 = vpack.c.b16 %v1618, %v1617
        %v1741 = vpack.c.b16 %v1620, %v1619
        %v1742 = vpack.c.b16 %v1622, %v1621
        %v1743 = vpack.c.b16 %v1624, %v1623
        %v1744 = vpack.c.b16 %v1626, %v1625
        %v1745 = vpack.c.b16 %v1628, %v1627
        %v1746 = vpack.c.b16 %v1630, %v1629
        %v1747 = vpack.c.b16 %v1632, %v1631
        %v1748 = vpack.c.b16 %v1634, %v1633
        %v1749 = vpack.c.b16 %v1636, %v1635
        %v1750 = vpack.c.b16 %v1638, %v1637
        %v1751 = vpack.c.b16 %v1640, %v1639
        %v1752 = vpack.c.b16 %v1642, %v1641
        %v1753 = vpack.c.b16 %v1644, %v1643
        %v1754 = vpack.c.b16 %v1646, %v1645
        %v1755 = vpack.c.b16 %v1648, %v1647
        %v1756 = vpack.c.b16 %v1650, %v1649
        %v1757 = vpack.c.b16 %v1652, %v1651
        %v1758 = vpack.c.b16 %v1654, %v1653
        %v1759 = vpack.c.b16 %v1656, %v1655
        %v1760 = vpack.c.b16 %v1658, %v1657
        %v1761 = vpack.c.b16 %v1660, %v1659
        %v1762 = vpack.c.b16 %v1662, %v1661
        %v1763 = vpack.c.b16 %v1664, %v1663
        %v1764 = vpack.c.b16 %v1666, %v1665
        %v1765 = vpack.c.b16 %v1668, %v1667
        %v1766 = vpack.c.b16 %v1670, %v1669
        %v1767 = vpack.c.b16 %v1672, %v1671
        %v1768 = vpack.c.b16 %v1674, %v1673
        %v1769 = vpack.c.b16 %v1676, %v1675
        %v1770 = vpack.c.b16 %v1678, %v1677
        %v1771 = vpack.c.b16 %v1680, %v1679
        %v1772 = vpack.c.b16 %v1682, %v1681
        %v1773 = vpack.c.b16 %v1684, %v1683
        %v1774 = vpack.c.b16 %v1686, %v1685
        %v1775 = vpack.c.b16 %v1688, %v1687
        %v1776 = vpack.c.b16 %v1690, %v1689
        %v1777 = vpack.c.b16 %v1692, %v1691
        %v1778 = vpack.c.b16 %v1694, %v1693
        %v1779 = vpack.c.b16 %v1696, %v1695
        %v1780 = vpack.c.b16 %v1698, %v1697
        %v1781 = vpack.c.b16 %v1700, %v1699
        %v1782 = vpack.c.b16 %v1702, %v1701
        %v1783 = vpack.c.b16 %v1704, %v1703
        %v1784 = vpack.c.b16 %v1706, %v1705
        %v1785 = vpack.c.b16 %v1708, %v1707
        %v1786 = vpack.c.b16 %v1710, %v1709
        %v1787 = vpack.c.b16 %v1712, %v1711
        %v1788 = vpack.c.b16 %v1714, %v1713
        %v1789 = vpack.c.b16 %v1716, %v1715
        %v1790 = vpack.c.b16 %v1718, %v1717
        %1863 = vmatprep.subr.bf16.mxu0 0
        %1864 = vmatpush1.bf16.msra.mxu0 %v1719
        %1865 = vmatprep.subr.bf16.mxu0 0
        %1866 = vmatpush1.bf16.msra.mxu0 %v1720
        %1867 = vmatprep.subr.bf16.mxu0 0
        %1868 = vmatpush1.bf16.msra.mxu0 %v1721
        %1869 = vmatprep.subr.bf16.mxu0 0
        %1870 = vmatpush1.bf16.msra.mxu0 %v1722
        %1871 = vmatprep.subr.bf16.mxu0 0
        %1872 = vmatpush1.bf16.msra.mxu0 %v1723
        %1873 = vmatprep.subr.bf16.mxu0 0
        %1874 = vmatpush1.bf16.msra.mxu0 %v1724
        %1875 = vmatprep.subr.bf16.mxu0 0
        %1876 = vmatpush1.bf16.msra.mxu0 %v1725
        %1877 = vmatprep.subr.bf16.mxu0 0
        %1878 = vmatpush1.bf16.msra.mxu0 %v1726
        %1879 = vmatprep.subr.bf16.mxu0 0
        %1880 = vmatpush1.bf16.msra.mxu0 %v1727
        %1881 = vmatprep.subr.bf16.mxu0 0
        %1882 = vmatpush1.bf16.msra.mxu0 %v1728
        %1883 = vmatprep.subr.bf16.mxu0 0
        %1884 = vmatpush1.bf16.msra.mxu0 %v1729
        %1885 = vmatprep.subr.bf16.mxu0 0
        %1886 = vmatpush1.bf16.msra.mxu0 %v1730
        %1887 = vmatprep.subr.bf16.mxu0 0
        %1888 = vmatpush1.bf16.msra.mxu0 %v1731
        %1889 = vmatprep.subr.bf16.mxu0 0
        %1890 = vmatpush1.bf16.msra.mxu0 %v1732
        %1891 = vmatprep.subr.bf16.mxu0 0
        %1892 = vmatpush1.bf16.msra.mxu0 %v1733
        %1893 = vmatprep.subr.bf16.mxu0 0
        %1894 = vmatpush1.bf16.msra.mxu0 %v1734
        %1895 = vmatprep.mubr.bf16.mxu0 %v1360
        %1896 = vmatmul.mubr.bf16.gmra.mrb[0].mxu0 %v1359
        %v1897 = vpop.f32.mrb[0].mxu0
        %v1898 = vadd.f32 %v1357, %v1897
        %v1899 = vpop.f32.mrb[0].mxu0
        %v1900 = vpop.f32.mrb[0].mxu0
        %v1901 = vadd.f32 %v1357, %v1900
        %v1902 = vpop.f32.mrb[0].mxu0
        %1903 = vmatprep.mubr.bf16.mxu0 %v1369
        %1904 = vmatmul.mubr.bf16.gmra.mrb[0].mxu0 %v1368
        %v1905 = vpop.f32.mrb[0].mxu0
        %v1906 = vadd.f32 %v1357, %v1905
        %v1907 = vpop.f32.mrb[0].mxu0
        %v1908 = vpop.f32.mrb[0].mxu0
        %v1909 = vadd.f32 %v1357, %v1908
        %v1910 = vpop.f32.mrb[0].mxu0
        %1911 = vmatprep.mubr.bf16.mxu0 %v1378
        %1912 = vmatmul.mubr.bf16.gmra.mrb[0].mxu0 %v1377
        %v1913 = vpop.f32.mrb[0].mxu0
        %v1914 = vadd.f32 %v1357, %v1913
        %v1915 = vpop.f32.mrb[0].mxu0
        %v1916 = vpop.f32.mrb[0].mxu0
        %v1917 = vadd.f32 %v1357, %v1916
        %v1918 = vpop.f32.mrb[0].mxu0
        %1919 = vmatprep.mubr.bf16.mxu0 %v1387
        %1920 = vmatmul.mubr.bf16.gmra.mrb[0].mxu0 %v1386
        %v1921 = vpop.f32.mrb[0].mxu0
        %v1922 = vadd.f32 %v1357, %v1921
        %v1923 = vpop.f32.mrb[0].mxu0
        %v1924 = vpop.f32.mrb[0].mxu0
        %v1925 = vadd.f32 %v1357, %v1924
        %v1926 = vpop.f32.mrb[0].mxu0
        %1927 = vdwg.mxu0
        %1928 = vmatprep.subr.bf16.mxu0 0
        %1929 = vmatpush1.bf16.msra.mxu0 %v1735
        %1930 = vmatprep.subr.bf16.mxu0 0
        %1931 = vmatpush1.bf16.msra.mxu0 %v1736
        %1932 = vmatprep.subr.bf16.mxu0 0
        %1933 = vmatpush1.bf16.msra.mxu0 %v1737
        %1934 = vmatprep.subr.bf16.mxu0 0
        %1935 = vmatpush1.bf16.msra.mxu0 %v1738
        %1936 = vmatprep.subr.bf16.mxu0 0
        %1937 = vmatpush1.bf16.msra.mxu0 %v1739
        %1938 = vmatprep.subr.bf16.mxu0 0
        %1939 = vmatpush1.bf16.msra.mxu0 %v1740
        %1940 = vmatprep.subr.bf16.mxu0 0
        %1941 = vmatpush1.bf16.msra.mxu0 %v1741
        %1942 = vmatprep.subr.bf16.mxu0 0
        %1943 = vmatpush1.bf16.msra.mxu0 %v1742
        %1944 = vmatprep.subr.bf16.mxu0 0
        %1945 = vmatpush1.bf16.msra.mxu0 %v1743
        %1946 = vmatprep.subr.bf16.mxu0 0
        %1947 = vmatpush1.bf16.msra.mxu0 %v1744
        %1948 = vmatprep.subr.bf16.mxu0 0
        %1949 = vmatpush1.bf16.msra.mxu0 %v1745
        %1950 = vmatprep.subr.bf16.mxu0 0
        %1951 = vmatpush1.bf16.msra.mxu0 %v1746
        %1952 = vmatprep.subr.bf16.mxu0 0
        %1953 = vmatpush1.bf16.msra.mxu0 %v1747
        %1954 = vmatprep.subr.bf16.mxu0 0
        %1955 = vmatpush1.bf16.msra.mxu0 %v1748
        %1956 = vmatprep.subr.bf16.mxu0 0
        %1957 = vmatpush1.bf16.msra.mxu0 %v1749
        %1958 = vmatprep.subr.bf16.mxu0 0
        %1959 = vmatpush1.bf16.msra.mxu0 %v1750
        %1960 = vmatprep.mubr.bf16.mxu0 %v1362
        %1961 = vmatmul.mubr.bf16.gmra.mrb[0].mxu0 %v1361
        %v1962 = vpop.f32.mrb[0].mxu0
        %v1963 = vadd.f32 %v1898, %v1962
        %v1964 = vpop.f32.mrb[0].mxu0
        %v1965 = vpop.f32.mrb[0].mxu0
        %v1966 = vadd.f32 %v1901, %v1965
        %v1967 = vpop.f32.mrb[0].mxu0
        %1968 = vmatprep.mubr.bf16.mxu0 %v1371
        %1969 = vmatmul.mubr.bf16.gmra.mrb[0].mxu0 %v1370
        %v1970 = vpop.f32.mrb[0].mxu0
        %v1971 = vadd.f32 %v1906, %v1970
        %v1972 = vpop.f32.mrb[0].mxu0
        %v1973 = vpop.f32.mrb[0].mxu0
        %v1974 = vadd.f32 %v1909, %v1973
        %v1975 = vpop.f32.mrb[0].mxu0
        %1976 = vmatprep.mubr.bf16.mxu0 %v1380
        %1977 = vmatmul.mubr.bf16.gmra.mrb[0].mxu0 %v1379
        %v1978 = vpop.f32.mrb[0].mxu0
        %v1979 = vadd.f32 %v1914, %v1978
        %v1980 = vpop.f32.mrb[0].mxu0
        %v1981 = vpop.f32.mrb[0].mxu0
        %v1982 = vadd.f32 %v1917, %v1981
        %v1983 = vpop.f32.mrb[0].mxu0
        %1984 = vmatprep.mubr.bf16.mxu0 %v1389
        %1985 = vmatmul.mubr.bf16.gmra.mrb[0].mxu0 %v1388
        %v1986 = vpop.f32.mrb[0].mxu0
        %v1987 = vadd.f32 %v1922, %v1986
        %v1988 = vpop.f32.mrb[0].mxu0
        %v1989 = vpop.f32.mrb[0].mxu0
        %v1990 = vadd.f32 %v1925, %v1989
        %v1991 = vpop.f32.mrb[0].mxu0
        %1992 = vdwg.mxu0
        %1993 = vmatprep.subr.bf16.mxu0 0
        %1994 = vmatpush1.bf16.msra.mxu0 %v1751
        %1995 = vmatprep.subr.bf16.mxu0 0
        %1996 = vmatpush1.bf16.msra.mxu0 %v1752
        %1997 = vmatprep.subr.bf16.mxu0 0
        %1998 = vmatpush1.bf16.msra.mxu0 %v1753
        %1999 = vmatprep.subr.bf16.mxu0 0
        %2000 = vmatpush1.bf16.msra.mxu0 %v1754
        %2001 = vmatprep.subr.bf16.mxu0 0
        %2002 = vmatpush1.bf16.msra.mxu0 %v1755
        %2003 = vmatprep.subr.bf16.mxu0 0
        %2004 = vmatpush1.bf16.msra.mxu0 %v1756
        %2005 = vmatprep.subr.bf16.mxu0 0
        %2006 = vmatpush1.bf16.msra.mxu0 %v1757
        %2007 = vmatprep.subr.bf16.mxu0 0
        %2008 = vmatpush1.bf16.msra.mxu0 %v1758
        %2009 = vmatprep.subr.bf16.mxu0 0
        %2010 = vmatpush1.bf16.msra.mxu0 %v1759
        %2011 = vmatprep.subr.bf16.mxu0 0
        %2012 = vmatpush1.bf16.msra.mxu0 %v1760
        %2013 = vmatprep.subr.bf16.mxu0 0
        %2014 = vmatpush1.bf16.msra.mxu0 %v1761
        %2015 = vmatprep.subr.bf16.mxu0 0
        %2016 = vmatpush1.bf16.msra.mxu0 %v1762
        %2017 = vmatprep.subr.bf16.mxu0 0
        %2018 = vmatpush1.bf16.msra.mxu0 %v1763
        %2019 = vmatprep.subr.bf16.mxu0 0
        %2020 = vmatpush1.bf16.msra.mxu0 %v1764
        %2021 = vmatprep.subr.bf16.mxu0 0
        %2022 = vmatpush1.bf16.msra.mxu0 %v1765
        %2023 = vmatprep.subr.bf16.mxu0 0
        %2024 = vmatpush1.bf16.msra.mxu0 %v1766
        %2025 = vmatprep.mubr.bf16.mxu0 %v1364
        %2026 = vmatmul.mubr.bf16.gmra.mrb[0].mxu0 %v1363
        %v2027 = vpop.f32.mrb[0].mxu0
        %v2028 = vadd.f32 %v1963, %v2027
        %v2029 = vpop.f32.mrb[0].mxu0
        %v2030 = vpop.f32.mrb[0].mxu0
        %v2031 = vadd.f32 %v1966, %v2030
        %v2032 = vpop.f32.mrb[0].mxu0
        %2033 = vmatprep.mubr.bf16.mxu0 %v1373
        %2034 = vmatmul.mubr.bf16.gmra.mrb[0].mxu0 %v1372
        %v2035 = vpop.f32.mrb[0].mxu0
        %v2036 = vadd.f32 %v1971, %v2035
        %v2037 = vpop.f32.mrb[0].mxu0
        %v2038 = vpop.f32.mrb[0].mxu0
        %v2039 = vadd.f32 %v1974, %v2038
        %v2040 = vpop.f32.mrb[0].mxu0
        %2041 = vmatprep.mubr.bf16.mxu0 %v1382
        %2042 = vmatmul.mubr.bf16.gmra.mrb[0].mxu0 %v1381
        %v2043 = vpop.f32.mrb[0].mxu0
        %v2044 = vadd.f32 %v1979, %v2043
        %v2045 = vpop.f32.mrb[0].mxu0
        %v2046 = vpop.f32.mrb[0].mxu0
        %v2047 = vadd.f32 %v1982, %v2046
        %v2048 = vpop.f32.mrb[0].mxu0
        %2049 = vmatprep.mubr.bf16.mxu0 %v1391
        %2050 = vmatmul.mubr.bf16.gmra.mrb[0].mxu0 %v1390
        %v2051 = vpop.f32.mrb[0].mxu0
        %v2052 = vadd.f32 %v1987, %v2051
        %v2053 = vpop.f32.mrb[0].mxu0
        %v2054 = vpop.f32.mrb[0].mxu0
        %v2055 = vadd.f32 %v1990, %v2054
        %v2056 = vpop.f32.mrb[0].mxu0
        %2057 = vdwg.mxu0
        %2058 = vmatprep.subr.bf16.mxu0 0
        %2059 = vmatpush1.bf16.msra.mxu0 %v1767
        %2060 = vmatprep.subr.bf16.mxu0 0
        %2061 = vmatpush1.bf16.msra.mxu0 %v1768
        %2062 = vmatprep.subr.bf16.mxu0 0
        %2063 = vmatpush1.bf16.msra.mxu0 %v1769
        %2064 = vmatprep.subr.bf16.mxu0 0
        %2065 = vmatpush1.bf16.msra.mxu0 %v1770
        %2066 = vmatprep.subr.bf16.mxu0 0
        %2067 = vmatpush1.bf16.msra.mxu0 %v1771
        %2068 = vmatprep.subr.bf16.mxu0 0
        %2069 = vmatpush1.bf16.msra.mxu0 %v1772
        %2070 = vmatprep.subr.bf16.mxu0 0
        %2071 = vmatpush1.bf16.msra.mxu0 %v1773
        %2072 = vmatprep.subr.bf16.mxu0 0
        %2073 = vmatpush1.bf16.msra.mxu0 %v1774
        %2074 = vmatprep.subr.bf16.mxu0 0
        %2075 = vmatpush1.bf16.msra.mxu0 %v1775
        %2076 = vmatprep.subr.bf16.mxu0 0
        %2077 = vmatpush1.bf16.msra.mxu0 %v1776
        %2078 = vmatprep.subr.bf16.mxu0 0
        %2079 = vmatpush1.bf16.msra.mxu0 %v1777
        %2080 = vmatprep.subr.bf16.mxu0 0
        %2081 = vmatpush1.bf16.msra.mxu0 %v1778
        %2082 = vmatprep.subr.bf16.mxu0 0
        %2083 = vmatpush1.bf16.msra.mxu0 %v1779
        %2084 = vmatprep.subr.bf16.mxu0 0
        %2085 = vmatpush1.bf16.msra.mxu0 %v1780
        %2086 = vmatprep.subr.bf16.mxu0 0
        %2087 = vmatpush1.bf16.msra.mxu0 %v1781
        %2088 = vmatprep.subr.bf16.mxu0 0
        %2089 = vmatpush1.bf16.msra.mxu0 %v1782
        %2090 = vmatprep.mubr.bf16.mxu0 %v1366
        %2091 = vmatmul.mubr.bf16.gmra.mrb[0].mxu0 %v1365
        %v2092 = vpop.f32.mrb[0].mxu0
        %v2093 = vadd.f32 %v2028, %v2092
        %v2094 = vpop.f32.mrb[0].mxu0
        %v2095 = vpop.f32.mrb[0].mxu0
        %v2096 = vadd.f32 %v2031, %v2095
        %v2097 = vpop.f32.mrb[0].mxu0
        %2098 = vmatprep.mubr.bf16.mxu0 %v1375
        %2099 = vmatmul.mubr.bf16.gmra.mrb[0].mxu0 %v1374
        %v2100 = vpop.f32.mrb[0].mxu0
        %v2101 = vadd.f32 %v2036, %v2100
        %v2102 = vpop.f32.mrb[0].mxu0
        %v2103 = vpop.f32.mrb[0].mxu0
        %v2104 = vadd.f32 %v2039, %v2103
        %v2105 = vpop.f32.mrb[0].mxu0
        %2106 = vmatprep.mubr.bf16.mxu0 %v1384
        %2107 = vmatmul.mubr.bf16.gmra.mrb[0].mxu0 %v1383
        %v2108 = vpop.f32.mrb[0].mxu0
        %v2109 = vadd.f32 %v2044, %v2108
        %v2110 = vpop.f32.mrb[0].mxu0
        %v2111 = vpop.f32.mrb[0].mxu0
        %v2112 = vadd.f32 %v2047, %v2111
        %v2113 = vpop.f32.mrb[0].mxu0
        %2114 = vmatprep.mubr.bf16.mxu0 %v1393
        %2115 = vmatmul.mubr.bf16.gmra.mrb[0].mxu0 %v1392
        %v2116 = vpop.f32.mrb[0].mxu0
        %v2117 = vadd.f32 %v2052, %v2116
        %v2118 = vpop.f32.mrb[0].mxu0
        %v2119 = vpop.f32.mrb[0].mxu0
        %v2120 = vadd.f32 %v2055, %v2119
        %v2121 = vpop.f32.mrb[0].mxu0
        %2122 = vdwg.mxu0
        %2123 = vmatprep.subr.bf16.mxu0 0
        %2124 = vmatpush1.bf16.msra.mxu0 %v1783
        %2125 = vmatprep.subr.bf16.mxu0 0
        %2126 = vmatpush1.bf16.msra.mxu0 %v1784
        %2127 = vmatprep.subr.bf16.mxu0 0
        %2128 = vmatpush1.bf16.msra.mxu0 %v1785
        %2129 = vmatprep.subr.bf16.mxu0 0
        %2130 = vmatpush1.bf16.msra.mxu0 %v1786
        %2131 = vmatprep.subr.bf16.mxu0 0
        %2132 = vmatpush1.bf16.msra.mxu0 %v1787
        %2133 = vmatprep.subr.bf16.mxu0 0
        %2134 = vmatpush1.bf16.msra.mxu0 %v1788
        %2135 = vmatprep.subr.bf16.mxu0 0
        %2136 = vmatpush1.bf16.msra.mxu0 %v1789
        %2137 = vmatprep.subr.bf16.mxu0 0
        %2138 = vmatpush1.bf16.msra.mxu0 %v1790
        %2139 = vmatprep.subr.bf16.mxu0 0
        %2140 = vmatpush1.bf16.msra.mxu0 0
        %2141 = vmatprep.subr.bf16.mxu0 0
        %2142 = vmatpush1.bf16.msra.mxu0 0
        %2143 = vmatprep.subr.bf16.mxu0 0
        %2144 = vmatpush1.bf16.msra.mxu0 0
        %2145 = vmatprep.subr.bf16.mxu0 0
        %2146 = vmatpush1.bf16.msra.mxu0 0
        %2147 = vmatprep.subr.bf16.mxu0 0
        %2148 = vmatpush1.bf16.msra.mxu0 0
        %2149 = vmatprep.subr.bf16.mxu0 0
        %2150 = vmatpush1.bf16.msra.mxu0 0
        %2151 = vmatprep.subr.bf16.mxu0 0
        %2152 = vmatpush1.bf16.msra.mxu0 0
        %2153 = vmatprep.subr.bf16.mxu0 0
        %2154 = vmatpush1.bf16.msra.mxu0 0
        %2155 = vmatprep.mubr.bf16.mxu0 0
        %2156 = vmatmul.mubr.bf16.gmra.mrb[0].mxu0 %v1367
        %v2157 = vpop.f32.mrb[0].mxu0
        %v2158 = vadd.f32 %v2093, %v2157
        %v2159 = vpop.f32.mrb[0].mxu0
        %v2160 = vpop.f32.mrb[0].mxu0
        %v2161 = vadd.f32 %v2096, %v2160
        %v2162 = vpop.f32.mrb[0].mxu0
        %2163 = vmatprep.mubr.bf16.mxu0 0
        %2164 = vmatmul.mubr.bf16.gmra.mrb[0].mxu0 %v1376
        %v2165 = vpop.f32.mrb[0].mxu0
        %v2166 = vadd.f32 %v2101, %v2165
        %v2167 = vpop.f32.mrb[0].mxu0
        %v2168 = vpop.f32.mrb[0].mxu0
        %v2169 = vadd.f32 %v2104, %v2168
        %v2170 = vpop.f32.mrb[0].mxu0
        %2171 = vmatprep.mubr.bf16.mxu0 0
        %2172 = vmatmul.mubr.bf16.gmra.mrb[0].mxu0 %v1385
        %v2173 = vpop.f32.mrb[0].mxu0
        %v2174 = vadd.f32 %v2109, %v2173
        %v2175 = vpop.f32.mrb[0].mxu0
        %v2176 = vpop.f32.mrb[0].mxu0
        %v2177 = vadd.f32 %v2112, %v2176
        %v2178 = vpop.f32.mrb[0].mxu0
        %2179 = vmatprep.mubr.bf16.mxu0 0
        %2180 = vmatmul.mubr.bf16.gmra.mrb[0].mxu0 %v1394
        %v2181 = vpop.f32.mrb[0].mxu0
        %v2182 = vadd.f32 %v2117, %v2181
        %v2183 = vpop.f32.mrb[0].mxu0
        %v2184 = vpop.f32.mrb[0].mxu0
        %v2185 = vadd.f32 %v2120, %v2184
        %v2186 = vpop.f32.mrb[0].mxu0
        %2187 = vdwg.mxu0
        %v2188 = vmax.f32 %v2158, 0.0
        %v2189 = vmax.f32 %v2161, 0.0
        %v2190 = vmax.f32 %v2166, 0.0
        %v2191 = vmax.f32 %v2169, 0.0
        %v2192 = vmax.f32 %v2174, 0.0
        %v2193 = vmax.f32 %v2177, 0.0
        %v2194 = vmax.f32 %v2182, 0.0
        %v2195 = vmax.f32 %v2185, 0.0
        %v2196 = vadd.f32 %v2188, %v500
        %v2197 = vadd.f32 %v2189, %v501
        %v2198 = vadd.f32 %v2190, %v502
        %v2199 = vadd.f32 %v2191, %v503
        %v2200 = vadd.f32 %v2192, %v504
        %v2201 = vadd.f32 %v2193, %v505
        %v2202 = vadd.f32 %v2194, %v506
        %v2203 = vadd.f32 %v2195, %v507
        %v2204 = vpack.c.bf16 %v2196, %v2196
        %v2205 = vpack.c.bf16 %v2197, %v2197
        %v2206 = vpack.c.bf16 %v2198, %v2198
        %v2207 = vpack.c.bf16 %v2199, %v2199
        %v2208 = vpack.c.bf16 %v2200, %v2200
        %v2209 = vpack.c.bf16 %v2201, %v2201
        %v2210 = vpack.c.bf16 %v2202, %v2202
        %v2211 = vpack.c.bf16 %v2203, %v2203
        %2212 = vst [vmem:[#allocation3] sm:$0xf] 0
        %2213 = vst [vmem:[#allocation3 + $0x4] sm:$0x1] 0
        %2214 = vst [vmem:[#allocation3 + $0x8] sm:$0xf] 0
        %2215 = vst [vmem:[#allocation3 + $0xc] sm:$0x1] 0
        %2216 = vst [vmem:[#allocation3 + $0x10] sm:$0xf] 0
        %2217 = vst [vmem:[#allocation3 + $0x14] sm:$0x1] 0
        %2218 = vst [vmem:[#allocation3 + $0x18] sm:$0xf] 0
        %2219 = vst [vmem:[#allocation3 + $0x1c] sm:$0x1] 0
        %2220 = vst [vmem:[#allocation3 + $0x20] sm:$0xf] 0
        %2221 = vst [vmem:[#allocation3 + $0x24] sm:$0x1] 0
        %2222 = vst [vmem:[#allocation3 + $0x28] sm:$0xf] 0
        %2223 = vst [vmem:[#allocation3 + $0x2c] sm:$0x1] 0
        %2224 = vst [vmem:[#allocation3 + $0x30] sm:$0xf] 0
        %2225 = vst [vmem:[#allocation3 + $0x34] sm:$0x1] 0
        %2226 = vst [vmem:[#allocation3 + $0x38] sm:$0xf] 0
        %2227 = vst [vmem:[#allocation3 + $0x3c] sm:$0x1] 0
        %2228 = vst [vmem:[#allocation3 + $0x40] sm:$0xf] 0
        %2229 = vst [vmem:[#allocation3 + $0x44] sm:$0x1] 0
        %2230 = vst [vmem:[#allocation3 + $0x48] sm:$0xf] 0
        %2231 = vst [vmem:[#allocation3 + $0x4c] sm:$0x1] 0
        %v2240 = vunpack.c.l.b16 %v2204
        %v2241 = vunpack.c.l.b16 %v2205
        %v2242 = vunpack.c.l.b16 %v2206
        %v2243 = vunpack.c.l.b16 %v2207
        %v2244 = vunpack.c.l.b16 %v2208
        %v2245 = vunpack.c.l.b16 %v2209
        %v2246 = vunpack.c.l.b16 %v2210
        %v2247 = vunpack.c.l.b16 %v2211
        %v2248 = vpack.c.b16 %v2240, %v2240
        %v2249 = vpack.c.b16 %v2241, %v2241
        %v2250 = vpack.c.b16 %v2242, %v2242
        %v2251 = vpack.c.b16 %v2243, %v2243
        %v2252 = vpack.c.b16 %v2244, %v2244
        %v2253 = vpack.c.b16 %v2245, %v2245
        %v2254 = vpack.c.b16 %v2246, %v2246
        %v2255 = vpack.c.b16 %v2247, %v2247
        %v2257 = vshrl.u32 %v2248, 16
        %v2259 = vrot.slane %v2257, 7
        %v2260 = vshll.u32 %v2248, 16
        %v2262 = vor.u32 %v2259, %v2260
        %v2263 = vrot.slane %v2259, 4
        %v2265 = vshrl.u32 %v2249, 16
        %v2267 = vrot.slane %v2265, 7
        %v2268 = vshll.u32 %v2249, 16
        %v2270 = vor.u32 %v2267, %v2268
        %v2271 = vrot.slane %v2267, 4
        %v2273 = vshrl.u32 %v2250, 16
        %v2275 = vrot.slane %v2273, 7
        %v2276 = vshll.u32 %v2250, 16
        %v2278 = vor.u32 %v2275, %v2276
        %v2279 = vrot.slane %v2275, 4
        %v2281 = vshrl.u32 %v2251, 16
        %v2283 = vrot.slane %v2281, 7
        %v2284 = vshll.u32 %v2251, 16
        %v2286 = vor.u32 %v2283, %v2284
        %v2287 = vrot.slane %v2283, 4
        %v2289 = vshrl.u32 %v2252, 16
        %v2291 = vrot.slane %v2289, 7
        %v2292 = vshll.u32 %v2252, 16
        %v2294 = vor.u32 %v2291, %v2292
        %v2295 = vrot.slane %v2291, 4
        %v2297 = vshrl.u32 %v2253, 16
        %v2299 = vrot.slane %v2297, 7
        %v2300 = vshll.u32 %v2253, 16
        %v2302 = vor.u32 %v2299, %v2300
        %v2303 = vrot.slane %v2299, 4
        %v2305 = vshrl.u32 %v2254, 16
        %v2307 = vrot.slane %v2305, 7
        %v2308 = vshll.u32 %v2254, 16
        %v2310 = vor.u32 %v2307, %v2308
        %v2311 = vrot.slane %v2307, 4
        %v2313 = vshrl.u32 %v2255, 16
        %v2315 = vrot.slane %v2313, 7
        %v2316 = vshll.u32 %v2255, 16
        %v2318 = vor.u32 %v2315, %v2316
        %v2319 = vrot.slane %v2315, 4
        %s2336 = scalar_lea.vmem [#allocation3], 8
        %v2337 = vld [vmem:[%s2336] sm:$0xf]
        %v2338 = vsel %vm651, %v2262, %v2337
        %2339 = vst [vmem:[%s2336] sm:$0xf] %v2338
        %v2340 = vld [vmem:[%s2336 + $0x4] sm:$0x1]
        %v2341 = vsel %vm657, %v2263, %v2340
        %2342 = vst [vmem:[%s2336 + $0x4] sm:$0x1] %v2341
        %v2343 = vld [vmem:[%s2336 + $0x8] sm:$0xf]
        %v2344 = vsel %vm651, %v2270, %v2343
        %2345 = vst [vmem:[%s2336 + $0x8] sm:$0xf] %v2344
        %v2346 = vld [vmem:[%s2336 + $0xc] sm:$0x1]
        %v2347 = vsel %vm657, %v2271, %v2346
        %2348 = vst [vmem:[%s2336 + $0xc] sm:$0x1] %v2347
        %v2349 = vld [vmem:[%s2336 + $0x10] sm:$0xf]
        %v2350 = vsel %vm651, %v2278, %v2349
        %2351 = vst [vmem:[%s2336 + $0x10] sm:$0xf] %v2350
        %v2352 = vld [vmem:[%s2336 + $0x14] sm:$0x1]
        %v2353 = vsel %vm657, %v2279, %v2352
        %2354 = vst [vmem:[%s2336 + $0x14] sm:$0x1] %v2353
        %v2355 = vld [vmem:[%s2336 + $0x18] sm:$0xf]
        %v2356 = vsel %vm651, %v2286, %v2355
        %2357 = vst [vmem:[%s2336 + $0x18] sm:$0xf] %v2356
        %v2358 = vld [vmem:[%s2336 + $0x1c] sm:$0x1]
        %v2359 = vsel %vm657, %v2287, %v2358
        %2360 = vst [vmem:[%s2336 + $0x1c] sm:$0x1] %v2359
        %v2361 = vld [vmem:[%s2336 + $0x20] sm:$0xf]
        %v2362 = vsel %vm651, %v2294, %v2361
        %2363 = vst [vmem:[%s2336 + $0x20] sm:$0xf] %v2362
        %v2364 = vld [vmem:[%s2336 + $0x24] sm:$0x1]
        %v2365 = vsel %vm657, %v2295, %v2364
        %2366 = vst [vmem:[%s2336 + $0x24] sm:$0x1] %v2365
        %v2367 = vld [vmem:[%s2336 + $0x28] sm:$0xf]
        %v2368 = vsel %vm651, %v2302, %v2367
        %2369 = vst [vmem:[%s2336 + $0x28] sm:$0xf] %v2368
        %v2370 = vld [vmem:[%s2336 + $0x2c] sm:$0x1]
        %v2371 = vsel %vm657, %v2303, %v2370
        %2372 = vst [vmem:[%s2336 + $0x2c] sm:$0x1] %v2371
        %v2373 = vld [vmem:[%s2336 + $0x30] sm:$0xf]
        %v2374 = vsel %vm651, %v2310, %v2373
        %2375 = vst [vmem:[%s2336 + $0x30] sm:$0xf] %v2374
        %v2376 = vld [vmem:[%s2336 + $0x34] sm:$0x1]
        %v2377 = vsel %vm657, %v2311, %v2376
        %2378 = vst [vmem:[%s2336 + $0x34] sm:$0x1] %v2377
        %v2379 = vld [vmem:[%s2336 + $0x38] sm:$0xf]
        %v2380 = vsel %vm651, %v2318, %v2379
        %2381 = vst [vmem:[%s2336 + $0x38] sm:$0xf] %v2380
        %v2382 = vld [vmem:[%s2336 + $0x3c] sm:$0x1]
        %v2383 = vsel %vm657, %v2319, %v2382
        %2384 = vst [vmem:[%s2336 + $0x3c] sm:$0x1] %v2383
        %v2385 = vld [vmem:[#allocation3] sm:$0xf]
        %v2386 = vld [vmem:[#allocation3 + $0x8] sm:$0xf]
        %v2387 = vld [vmem:[#allocation3 + $0x10] sm:$0xf]
        %v2388 = vld [vmem:[#allocation3 + $0x18] sm:$0xf]
        %v2389 = vld [vmem:[#allocation3 + $0x20] sm:$0xf]
        %v2390 = vld [vmem:[#allocation3 + $0x28] sm:$0xf]
        %v2391 = vld [vmem:[#allocation3 + $0x30] sm:$0xf]
        %v2392 = vld [vmem:[#allocation3 + $0x38] sm:$0xf]
        %v2393 = vld [vmem:[#allocation3 + $0x4] sm:$0x1]
        %v2394 = vld [vmem:[#allocation3 + $0xc] sm:$0x1]
        %v2395 = vld [vmem:[#allocation3 + $0x14] sm:$0x1]
        %v2396 = vld [vmem:[#allocation3 + $0x1c] sm:$0x1]
        %v2397 = vld [vmem:[#allocation3 + $0x24] sm:$0x1]
        %v2398 = vld [vmem:[#allocation3 + $0x2c] sm:$0x1]
        %v2399 = vld [vmem:[#allocation3 + $0x34] sm:$0x1]
        %v2400 = vld [vmem:[#allocation3 + $0x3c] sm:$0x1]
        %v2401 = vld [vmem:[#allocation3] sm:$0xe]
        %v2402 = vld [vmem:[#allocation3 + $0x8] sm:$0xe]
        %v2403 = vld [vmem:[#allocation3 + $0x10] sm:$0xe]
        %v2404 = vld [vmem:[#allocation3 + $0x18] sm:$0xe]
        %v2405 = vld [vmem:[#allocation3 + $0x20] sm:$0xe]
        %v2406 = vld [vmem:[#allocation3 + $0x28] sm:$0xe]
        %v2407 = vld [vmem:[#allocation3 + $0x30] sm:$0xe]
        %v2408 = vld [vmem:[#allocation3 + $0x38] sm:$0xe]
        %v2409 = vld [vmem:[%s2336] sm:$0xf]
        %v2410 = vld [vmem:[%s2336 + $0x8] sm:$0xf]
        %v2411 = vld [vmem:[%s2336 + $0x10] sm:$0xf]
        %v2412 = vld [vmem:[%s2336 + $0x18] sm:$0xf]
        %v2413 = vld [vmem:[%s2336 + $0x20] sm:$0xf]
        %v2414 = vld [vmem:[%s2336 + $0x28] sm:$0xf]
        %v2415 = vld [vmem:[%s2336 + $0x30] sm:$0xf]
        %v2416 = vld [vmem:[%s2336 + $0x38] sm:$0xf]
        %v2417 = vld [vmem:[%s2336 + $0x4] sm:$0x1]
        %v2418 = vld [vmem:[%s2336 + $0xc] sm:$0x1]
        %v2419 = vld [vmem:[%s2336 + $0x14] sm:$0x1]
        %v2420 = vld [vmem:[%s2336 + $0x1c] sm:$0x1]
        %v2421 = vld [vmem:[%s2336 + $0x24] sm:$0x1]
        %v2422 = vld [vmem:[%s2336 + $0x2c] sm:$0x1]
        %v2423 = vld [vmem:[%s2336 + $0x34] sm:$0x1]
        %v2424 = vld [vmem:[%s2336 + $0x3c] sm:$0x1]
        %v2425 = vld [vmem:[%s2336] sm:$0xe]
        %v2426 = vld [vmem:[%s2336 + $0x8] sm:$0xe]
        %v2427 = vld [vmem:[%s2336 + $0x10] sm:$0xe]
        %v2428 = vld [vmem:[%s2336 + $0x18] sm:$0xe]
        %v2429 = vld [vmem:[%s2336 + $0x20] sm:$0xe]
        %v2430 = vld [vmem:[%s2336 + $0x28] sm:$0xe]
        %v2431 = vld [vmem:[%s2336 + $0x30] sm:$0xe]
        %v2432 = vld [vmem:[%s2336 + $0x38] sm:$0xe]
        %s2433 = scalar_lea.vmem [#allocation3], 16
        %v2434 = vld [vmem:[%s2433] sm:$0xf]
        %v2435 = vld [vmem:[%s2433 + $0x8] sm:$0xf]
        %v2436 = vld [vmem:[%s2433 + $0x10] sm:$0xf]
        %v2437 = vld [vmem:[%s2433 + $0x18] sm:$0xf]
        %v2438 = vld [vmem:[%s2433 + $0x20] sm:$0xf]
        %v2439 = vld [vmem:[%s2433 + $0x28] sm:$0xf]
        %v2440 = vld [vmem:[%s2433 + $0x30] sm:$0xf]
        %v2441 = vld [vmem:[%s2433 + $0x38] sm:$0xf]
        %v2442 = vld [vmem:[%s2433 + $0x4] sm:$0x1]
        %v2443 = vld [vmem:[%s2433 + $0xc] sm:$0x1]
        %v2444 = vld [vmem:[%s2433 + $0x14] sm:$0x1]
        %v2445 = vld [vmem:[%s2433 + $0x1c] sm:$0x1]
        %v2446 = vld [vmem:[%s2433 + $0x24] sm:$0x1]
        %v2447 = vld [vmem:[%s2433 + $0x2c] sm:$0x1]
        %v2448 = vld [vmem:[%s2433 + $0x34] sm:$0x1]
        %v2449 = vld [vmem:[%s2433 + $0x3c] sm:$0x1]
        %v2450 = vld [vmem:[%s2433] sm:$0xe]
        %v2451 = vld [vmem:[%s2433 + $0x8] sm:$0xe]
        %v2452 = vld [vmem:[%s2433 + $0x10] sm:$0xe]
        %v2453 = vld [vmem:[%s2433 + $0x18] sm:$0xe]
        %v2454 = vld [vmem:[%s2433 + $0x20] sm:$0xe]
        %v2455 = vld [vmem:[%s2433 + $0x28] sm:$0xe]
        %v2456 = vld [vmem:[%s2433 + $0x30] sm:$0xe]
        %v2457 = vld [vmem:[%s2433 + $0x38] sm:$0xe]
        %v2474 = vunpack.c.l.b16 %v2385
        %v2475 = vunpack.c.l.b16 %v2393
        %v2476 = vunpack.c.l.b16 %v2386
        %v2477 = vunpack.c.l.b16 %v2394
        %v2478 = vunpack.c.l.b16 %v2387
        %v2479 = vunpack.c.l.b16 %v2395
        %v2480 = vunpack.c.l.b16 %v2388
        %v2481 = vunpack.c.l.b16 %v2396
        %v2482 = vunpack.c.l.b16 %v2389
        %v2483 = vunpack.c.l.b16 %v2397
        %v2484 = vunpack.c.l.b16 %v2390
        %v2485 = vunpack.c.l.b16 %v2398
        %v2486 = vunpack.c.l.b16 %v2391
        %v2487 = vunpack.c.l.b16 %v2399
        %v2488 = vunpack.c.l.b16 %v2392
        %v2489 = vunpack.c.l.b16 %v2400
        %v2490 = vpack.c.b16 %v2475, %v2474
        %v2491 = vpack.c.b16 %v2477, %v2476
        %v2492 = vpack.c.b16 %v2479, %v2478
        %v2493 = vpack.c.b16 %v2481, %v2480
        %v2494 = vpack.c.b16 %v2483, %v2482
        %v2495 = vpack.c.b16 %v2485, %v2484
        %v2496 = vpack.c.b16 %v2487, %v2486
        %v2497 = vpack.c.b16 %v2489, %v2488
        %v2499 = vshrl.u32 %v2490, 16
        %v2501 = vshll.u32 %v2490, 16
        %v2503 = vrot.slane %v2501, 1
        %v2504 = vor.u32 %v2499, %v2503
        %v2506 = vshrl.u32 %v2491, 16
        %v2508 = vshll.u32 %v2491, 16
        %v2510 = vrot.slane %v2508, 1
        %v2511 = vor.u32 %v2506, %v2510
        %v2513 = vshrl.u32 %v2492, 16
        %v2515 = vshll.u32 %v2492, 16
        %v2517 = vrot.slane %v2515, 1
        %v2518 = vor.u32 %v2513, %v2517
        %v2520 = vshrl.u32 %v2493, 16
        %v2522 = vshll.u32 %v2493, 16
        %v2524 = vrot.slane %v2522, 1
        %v2525 = vor.u32 %v2520, %v2524
        %v2527 = vshrl.u32 %v2494, 16
        %v2529 = vshll.u32 %v2494, 16
        %v2531 = vrot.slane %v2529, 1
        %v2532 = vor.u32 %v2527, %v2531
        %v2534 = vshrl.u32 %v2495, 16
        %v2536 = vshll.u32 %v2495, 16
        %v2538 = vrot.slane %v2536, 1
        %v2539 = vor.u32 %v2534, %v2538
        %v2541 = vshrl.u32 %v2496, 16
        %v2543 = vshll.u32 %v2496, 16
        %v2545 = vrot.slane %v2543, 1
        %v2546 = vor.u32 %v2541, %v2545
        %v2548 = vshrl.u32 %v2497, 16
        %v2550 = vshll.u32 %v2497, 16
        %v2552 = vrot.slane %v2550, 1
        %v2553 = vor.u32 %v2548, %v2552
        %v2562 = vunpack.c.l.b16 %v2401
        %v2563 = vunpack.c.l.b16 %v2402
        %v2564 = vunpack.c.l.b16 %v2403
        %v2565 = vunpack.c.l.b16 %v2404
        %v2566 = vunpack.c.l.b16 %v2405
        %v2567 = vunpack.c.l.b16 %v2406
        %v2568 = vunpack.c.l.b16 %v2407
        %v2569 = vunpack.c.l.b16 %v2408
        %v2570 = vpack.c.b16 %v2475, %v2562
        %v2571 = vpack.c.b16 %v2477, %v2563
        %v2572 = vpack.c.b16 %v2479, %v2564
        %v2573 = vpack.c.b16 %v2481, %v2565
        %v2574 = vpack.c.b16 %v2483, %v2566
        %v2575 = vpack.c.b16 %v2485, %v2567
        %v2576 = vpack.c.b16 %v2487, %v2568
        %v2577 = vpack.c.b16 %v2489, %v2569
        %v2578 = vrot.slane %v2570, 1
        %v2579 = vrot.slane %v2571, 1
        %v2580 = vrot.slane %v2572, 1
        %v2581 = vrot.slane %v2573, 1
        %v2582 = vrot.slane %v2574, 1
        %v2583 = vrot.slane %v2575, 1
        %v2584 = vrot.slane %v2576, 1
        %v2585 = vrot.slane %v2577, 1
        %v2602 = vunpack.c.l.b16 %v2409
        %v2603 = vunpack.c.l.b16 %v2417
        %v2604 = vunpack.c.l.b16 %v2410
        %v2605 = vunpack.c.l.b16 %v2418
        %v2606 = vunpack.c.l.b16 %v2411
        %v2607 = vunpack.c.l.b16 %v2419
        %v2608 = vunpack.c.l.b16 %v2412
        %v2609 = vunpack.c.l.b16 %v2420
        %v2610 = vunpack.c.l.b16 %v2413
        %v2611 = vunpack.c.l.b16 %v2421
        %v2612 = vunpack.c.l.b16 %v2414
        %v2613 = vunpack.c.l.b16 %v2422
        %v2614 = vunpack.c.l.b16 %v2415
        %v2615 = vunpack.c.l.b16 %v2423
        %v2616 = vunpack.c.l.b16 %v2416
        %v2617 = vunpack.c.l.b16 %v2424
        %v2618 = vpack.c.b16 %v2603, %v2602
        %v2619 = vpack.c.b16 %v2605, %v2604
        %v2620 = vpack.c.b16 %v2607, %v2606
        %v2621 = vpack.c.b16 %v2609, %v2608
        %v2622 = vpack.c.b16 %v2611, %v2610
        %v2623 = vpack.c.b16 %v2613, %v2612
        %v2624 = vpack.c.b16 %v2615, %v2614
        %v2625 = vpack.c.b16 %v2617, %v2616
        %v2627 = vshrl.u32 %v2618, 16
        %v2629 = vshll.u32 %v2618, 16
        %v2631 = vrot.slane %v2629, 1
        %v2632 = vor.u32 %v2627, %v2631
        %v2634 = vshrl.u32 %v2619, 16
        %v2636 = vshll.u32 %v2619, 16
        %v2638 = vrot.slane %v2636, 1
        %v2639 = vor.u32 %v2634, %v2638
        %v2641 = vshrl.u32 %v2620, 16
        %v2643 = vshll.u32 %v2620, 16
        %v2645 = vrot.slane %v2643, 1
        %v2646 = vor.u32 %v2641, %v2645
        %v2648 = vshrl.u32 %v2621, 16
        %v2650 = vshll.u32 %v2621, 16
        %v2652 = vrot.slane %v2650, 1
        %v2653 = vor.u32 %v2648, %v2652
        %v2655 = vshrl.u32 %v2622, 16
        %v2657 = vshll.u32 %v2622, 16
        %v2659 = vrot.slane %v2657, 1
        %v2660 = vor.u32 %v2655, %v2659
        %v2662 = vshrl.u32 %v2623, 16
        %v2664 = vshll.u32 %v2623, 16
        %v2666 = vrot.slane %v2664, 1
        %v2667 = vor.u32 %v2662, %v2666
        %v2669 = vshrl.u32 %v2624, 16
        %v2671 = vshll.u32 %v2624, 16
        %v2673 = vrot.slane %v2671, 1
        %v2674 = vor.u32 %v2669, %v2673
        %v2676 = vshrl.u32 %v2625, 16
        %v2678 = vshll.u32 %v2625, 16
        %v2680 = vrot.slane %v2678, 1
        %v2681 = vor.u32 %v2676, %v2680
        %v2690 = vunpack.c.l.b16 %v2425
        %v2691 = vunpack.c.l.b16 %v2426
        %v2692 = vunpack.c.l.b16 %v2427
        %v2693 = vunpack.c.l.b16 %v2428
        %v2694 = vunpack.c.l.b16 %v2429
        %v2695 = vunpack.c.l.b16 %v2430
        %v2696 = vunpack.c.l.b16 %v2431
        %v2697 = vunpack.c.l.b16 %v2432
        %v2698 = vpack.c.b16 %v2603, %v2690
        %v2699 = vpack.c.b16 %v2605, %v2691
        %v2700 = vpack.c.b16 %v2607, %v2692
        %v2701 = vpack.c.b16 %v2609, %v2693
        %v2702 = vpack.c.b16 %v2611, %v2694
        %v2703 = vpack.c.b16 %v2613, %v2695
        %v2704 = vpack.c.b16 %v2615, %v2696
        %v2705 = vpack.c.b16 %v2617, %v2697
        %v2706 = vrot.slane %v2698, 1
        %v2707 = vrot.slane %v2699, 1
        %v2708 = vrot.slane %v2700, 1
        %v2709 = vrot.slane %v2701, 1
        %v2710 = vrot.slane %v2702, 1
        %v2711 = vrot.slane %v2703, 1
        %v2712 = vrot.slane %v2704, 1
        %v2713 = vrot.slane %v2705, 1
        %v2730 = vunpack.c.l.b16 %v2434
        %v2731 = vunpack.c.l.b16 %v2442
        %v2732 = vunpack.c.l.b16 %v2435
        %v2733 = vunpack.c.l.b16 %v2443
        %v2734 = vunpack.c.l.b16 %v2436
        %v2735 = vunpack.c.l.b16 %v2444
        %v2736 = vunpack.c.l.b16 %v2437
        %v2737 = vunpack.c.l.b16 %v2445
        %v2738 = vunpack.c.l.b16 %v2438
        %v2739 = vunpack.c.l.b16 %v2446
        %v2740 = vunpack.c.l.b16 %v2439
        %v2741 = vunpack.c.l.b16 %v2447
        %v2742 = vunpack.c.l.b16 %v2440
        %v2743 = vunpack.c.l.b16 %v2448
        %v2744 = vunpack.c.l.b16 %v2441
        %v2745 = vunpack.c.l.b16 %v2449
        %v2746 = vpack.c.b16 %v2731, %v2730
        %v2747 = vpack.c.b16 %v2733, %v2732
        %v2748 = vpack.c.b16 %v2735, %v2734
        %v2749 = vpack.c.b16 %v2737, %v2736
        %v2750 = vpack.c.b16 %v2739, %v2738
        %v2751 = vpack.c.b16 %v2741, %v2740
        %v2752 = vpack.c.b16 %v2743, %v2742
        %v2753 = vpack.c.b16 %v2745, %v2744
        %v2755 = vshrl.u32 %v2746, 16
        %v2757 = vshll.u32 %v2746, 16
        %v2759 = vrot.slane %v2757, 1
        %v2760 = vor.u32 %v2755, %v2759
        %v2762 = vshrl.u32 %v2747, 16
        %v2764 = vshll.u32 %v2747, 16
        %v2766 = vrot.slane %v2764, 1
        %v2767 = vor.u32 %v2762, %v2766
        %v2769 = vshrl.u32 %v2748, 16
        %v2771 = vshll.u32 %v2748, 16
        %v2773 = vrot.slane %v2771, 1
        %v2774 = vor.u32 %v2769, %v2773
        %v2776 = vshrl.u32 %v2749, 16
        %v2778 = vshll.u32 %v2749, 16
        %v2780 = vrot.slane %v2778, 1
        %v2781 = vor.u32 %v2776, %v2780
        %v2783 = vshrl.u32 %v2750, 16
        %v2785 = vshll.u32 %v2750, 16
        %v2787 = vrot.slane %v2785, 1
        %v2788 = vor.u32 %v2783, %v2787
        %v2790 = vshrl.u32 %v2751, 16
        %v2792 = vshll.u32 %v2751, 16
        %v2794 = vrot.slane %v2792, 1
        %v2795 = vor.u32 %v2790, %v2794
        %v2797 = vshrl.u32 %v2752, 16
        %v2799 = vshll.u32 %v2752, 16
        %v2801 = vrot.slane %v2799, 1
        %v2802 = vor.u32 %v2797, %v2801
        %v2804 = vshrl.u32 %v2753, 16
        %v2806 = vshll.u32 %v2753, 16
        %v2808 = vrot.slane %v2806, 1
        %v2809 = vor.u32 %v2804, %v2808
        %v2818 = vunpack.c.l.b16 %v2450
        %v2819 = vunpack.c.l.b16 %v2451
        %v2820 = vunpack.c.l.b16 %v2452
        %v2821 = vunpack.c.l.b16 %v2453
        %v2822 = vunpack.c.l.b16 %v2454
        %v2823 = vunpack.c.l.b16 %v2455
        %v2824 = vunpack.c.l.b16 %v2456
        %v2825 = vunpack.c.l.b16 %v2457
        %v2826 = vpack.c.b16 %v2731, %v2818
        %v2827 = vpack.c.b16 %v2733, %v2819
        %v2828 = vpack.c.b16 %v2735, %v2820
        %v2829 = vpack.c.b16 %v2737, %v2821
        %v2830 = vpack.c.b16 %v2739, %v2822
        %v2831 = vpack.c.b16 %v2741, %v2823
        %v2832 = vpack.c.b16 %v2743, %v2824
        %v2833 = vpack.c.b16 %v2745, %v2825
        %v2834 = vrot.slane %v2826, 1
        %v2835 = vrot.slane %v2827, 1
        %v2836 = vrot.slane %v2828, 1
        %v2837 = vrot.slane %v2829, 1
        %v2838 = vrot.slane %v2830, 1
        %v2839 = vrot.slane %v2831, 1
        %v2840 = vrot.slane %v2832, 1
        %v2841 = vrot.slane %v2833, 1
        %v2842 = vunpack.c.l.b16 %v2504
        %v2843 = vunpack.c.l.b16 %v2578
        %v2844 = vunpack.c.l.b16 %v2632
        %v2845 = vunpack.c.l.b16 %v2706
        %v2846 = vunpack.c.l.b16 %v2760
        %v2847 = vunpack.c.l.b16 %v2834
        %v2848 = vunpack.c.l.b16 %v2511
        %v2849 = vunpack.c.l.b16 %v2579
        %v2850 = vunpack.c.l.b16 %v2639
        %v2851 = vunpack.c.l.b16 %v2707
        %v2852 = vunpack.c.l.b16 %v2767
        %v2853 = vunpack.c.l.b16 %v2835
        %v2854 = vunpack.c.l.b16 %v2518
        %v2855 = vunpack.c.l.b16 %v2580
        %v2856 = vunpack.c.l.b16 %v2646
        %v2857 = vunpack.c.l.b16 %v2708
        %v2858 = vunpack.c.l.b16 %v2774
        %v2859 = vunpack.c.l.b16 %v2836
        %v2860 = vunpack.c.l.b16 %v2525
        %v2861 = vunpack.c.l.b16 %v2581
        %v2862 = vunpack.c.l.b16 %v2653
        %v2863 = vunpack.c.l.b16 %v2709
        %v2864 = vunpack.c.l.b16 %v2781
        %v2865 = vunpack.c.l.b16 %v2837
        %v2866 = vunpack.c.l.b16 %v2532
        %v2867 = vunpack.c.l.b16 %v2582
        %v2868 = vunpack.c.l.b16 %v2660
        %v2869 = vunpack.c.l.b16 %v2710
        %v2870 = vunpack.c.l.b16 %v2788
        %v2871 = vunpack.c.l.b16 %v2838
        %v2872 = vunpack.c.l.b16 %v2539
        %v2873 = vunpack.c.l.b16 %v2583
        %v2874 = vunpack.c.l.b16 %v2667
        %v2875 = vunpack.c.l.b16 %v2711
        %v2876 = vunpack.c.l.b16 %v2795
        %v2877 = vunpack.c.l.b16 %v2839
        %v2878 = vunpack.c.l.b16 %v2546
        %v2879 = vunpack.c.l.b16 %v2584
        %v2880 = vunpack.c.l.b16 %v2674
        %v2881 = vunpack.c.l.b16 %v2712
        %v2882 = vunpack.c.l.b16 %v2802
        %v2883 = vunpack.c.l.b16 %v2840
        %v2884 = vunpack.c.l.b16 %v2553
        %v2885 = vunpack.c.l.b16 %v2585
        %v2886 = vunpack.c.l.b16 %v2681
        %v2887 = vunpack.c.l.b16 %v2713
        %v2888 = vunpack.c.l.b16 %v2809
        %v2889 = vunpack.c.l.b16 %v2841
        %v2890 = vld [vmem:[%s5] sm:$0xf]
        %v2891 = vld [vmem:[%s5 + $0x4] sm:$0xf]
        %v2892 = vld [vmem:[%s5 + $0x8] sm:$0xf]
        %v2893 = vld [vmem:[%s5 + $0xc] sm:$0xf]
        %v2894 = vld [vmem:[%s5 + $0x10] sm:$0xf]
        %v2895 = vld [vmem:[%s5 + $0x14] sm:$0xf]
        %v2896 = vld [vmem:[%s5 + $0x18] sm:$0xf]
        %v2897 = vld [vmem:[%s5 + $0x1c] sm:$0xf]
        %v2898 = vld [vmem:[%s5 + $0x20] sm:$0xf]
        %v2899 = vld [vmem:[%s5 + $0x24] sm:$0xf]
        %v2900 = vld [vmem:[%s5 + $0x28] sm:$0xf]
        %v2901 = vld [vmem:[%s5 + $0x2c] sm:$0xf]
        %v2902 = vld [vmem:[%s5 + $0x30] sm:$0xf]
        %v2903 = vld [vmem:[%s5 + $0x34] sm:$0xf]
        %v2904 = vld [vmem:[%s5 + $0x38] sm:$0xf]
        %v2905 = vld [vmem:[%s5 + $0x3c] sm:$0xf]
        %v2906 = vld [vmem:[%s5 + $0x40] sm:$0xf]
        %v2907 = vld [vmem:[%s5 + $0x44] sm:$0xf]
        %v2908 = vld [vmem:[%s5 + $0x48] sm:$0xf]
        %v2909 = vld [vmem:[%s5 + $0x4c] sm:$0xf]
        %v2910 = vld [vmem:[%s5 + $0x50] sm:$0xf]
        %v2911 = vld [vmem:[%s5 + $0x54] sm:$0xf]
        %v2912 = vld [vmem:[%s5 + $0x58] sm:$0xf]
        %v2913 = vld [vmem:[%s5 + $0x5c] sm:$0xf]
        %v2914 = vld [vmem:[%s5 + $0x60] sm:$0xf]
        %v2915 = vld [vmem:[%s5 + $0x64] sm:$0xf]
        %v2916 = vld [vmem:[%s5 + $0x68] sm:$0xf]
        %v2917 = vld [vmem:[%s5 + $0x6c] sm:$0xf]
        %v2918 = vld [vmem:[%s5 + $0x70] sm:$0xf]
        %v2919 = vld [vmem:[%s5 + $0x74] sm:$0xf]
        %v2920 = vld [vmem:[%s5 + $0x78] sm:$0xf]
        %v2921 = vld [vmem:[%s5 + $0x7c] sm:$0xf]
        %v2922 = vld [vmem:[%s5 + $0x80] sm:$0xf]
        %v2923 = vld [vmem:[%s5 + $0x84] sm:$0xf]
        %v2924 = vld [vmem:[%s5 + $0x88] sm:$0xf]
        %v2925 = vld [vmem:[%s5 + $0x8c] sm:$0xf]
        %v2926 = vld [vmem:[%s5 + $0x90] sm:$0xf]
        %v2927 = vld [vmem:[%s5 + $0x94] sm:$0xf]
        %v2928 = vld [vmem:[%s5 + $0x98] sm:$0xf]
        %v2929 = vld [vmem:[%s5 + $0x9c] sm:$0xf]
        %v2930 = vld [vmem:[%s5 + $0xa0] sm:$0xf]
        %v2931 = vld [vmem:[%s5 + $0xa4] sm:$0xf]
        %v2932 = vld [vmem:[%s5 + $0xa8] sm:$0xf]
        %v2933 = vld [vmem:[%s5 + $0xac] sm:$0xf]
        %v2934 = vld [vmem:[%s5 + $0xb0] sm:$0xf]
        %v2935 = vld [vmem:[%s5 + $0xb4] sm:$0xf]
        %v2936 = vld [vmem:[%s5 + $0xb8] sm:$0xf]
        %v2937 = vld [vmem:[%s5 + $0xbc] sm:$0xf]
        %v2938 = vld [vmem:[%s5 + $0xc0] sm:$0xf]
        %v2939 = vld [vmem:[%s5 + $0xc4] sm:$0xf]
        %v2940 = vld [vmem:[%s5 + $0xc8] sm:$0xf]
        %v2941 = vld [vmem:[%s5 + $0xcc] sm:$0xf]
        %v2942 = vld [vmem:[%s5 + $0xd0] sm:$0xf]
        %v2943 = vld [vmem:[%s5 + $0xd4] sm:$0xf]
        %v2944 = vld [vmem:[%s5 + $0xd8] sm:$0xf]
        %v2945 = vld [vmem:[%s5 + $0xdc] sm:$0xf]
        %v2946 = vld [vmem:[%s5 + $0xe0] sm:$0xf]
        %v2947 = vld [vmem:[%s5 + $0xe4] sm:$0xf]
        %v2948 = vld [vmem:[%s5 + $0xe8] sm:$0xf]
        %v2949 = vld [vmem:[%s5 + $0xec] sm:$0xf]
        %v2950 = vld [vmem:[%s5 + $0xf0] sm:$0xf]
        %v2951 = vld [vmem:[%s5 + $0xf4] sm:$0xf]
        %v2952 = vld [vmem:[%s5 + $0xf8] sm:$0xf]
        %v2953 = vld [vmem:[%s5 + $0xfc] sm:$0xf]
        %v2954 = vld [vmem:[%s5 + $0x100] sm:$0xf]
        %v2955 = vld [vmem:[%s5 + $0x104] sm:$0xf]
        %v2956 = vld [vmem:[%s5 + $0x108] sm:$0xf]
        %v2957 = vld [vmem:[%s5 + $0x10c] sm:$0xf]
        %v2958 = vld [vmem:[%s5 + $0x110] sm:$0xf]
        %v2959 = vld [vmem:[%s5 + $0x114] sm:$0xf]
        %v2960 = vld [vmem:[%s5 + $0x118] sm:$0xf]
        %v2961 = vld [vmem:[%s5 + $0x11c] sm:$0xf]
        %v2962 = vld [vmem:[%s5 + $0x120] sm:$0xf]
        %v2963 = vld [vmem:[%s5 + $0x124] sm:$0xf]
        %v2964 = vld [vmem:[%s5 + $0x128] sm:$0xf]
        %v2965 = vld [vmem:[%s5 + $0x12c] sm:$0xf]
        %v2966 = vld [vmem:[%s5 + $0x130] sm:$0xf]
        %v2967 = vld [vmem:[%s5 + $0x134] sm:$0xf]
        %v2968 = vld [vmem:[%s5 + $0x138] sm:$0xf]
        %v2969 = vld [vmem:[%s5 + $0x13c] sm:$0xf]
        %v2970 = vld [vmem:[%s5 + $0x140] sm:$0xf]
        %v2971 = vld [vmem:[%s5 + $0x144] sm:$0xf]
        %v2972 = vld [vmem:[%s5 + $0x148] sm:$0xf]
        %v2973 = vld [vmem:[%s5 + $0x14c] sm:$0xf]
        %v2974 = vld [vmem:[%s5 + $0x150] sm:$0xf]
        %v2975 = vld [vmem:[%s5 + $0x154] sm:$0xf]
        %v2976 = vld [vmem:[%s5 + $0x158] sm:$0xf]
        %v2977 = vld [vmem:[%s5 + $0x15c] sm:$0xf]
        %v2978 = vld [vmem:[%s5 + $0x160] sm:$0xf]
        %v2979 = vld [vmem:[%s5 + $0x164] sm:$0xf]
        %v2980 = vld [vmem:[%s5 + $0x168] sm:$0xf]
        %v2981 = vld [vmem:[%s5 + $0x16c] sm:$0xf]
        %v2982 = vld [vmem:[%s5 + $0x170] sm:$0xf]
        %v2983 = vld [vmem:[%s5 + $0x174] sm:$0xf]
        %v2984 = vld [vmem:[%s5 + $0x178] sm:$0xf]
        %v2985 = vld [vmem:[%s5 + $0x17c] sm:$0xf]
        %v2986 = vld [vmem:[%s5 + $0x180] sm:$0xf]
        %v2987 = vld [vmem:[%s5 + $0x184] sm:$0xf]
        %v2988 = vld [vmem:[%s5 + $0x188] sm:$0xf]
        %v2989 = vld [vmem:[%s5 + $0x18c] sm:$0xf]
        %v2990 = vld [vmem:[%s5 + $0x190] sm:$0xf]
        %v2991 = vld [vmem:[%s5 + $0x194] sm:$0xf]
        %v2992 = vld [vmem:[%s5 + $0x198] sm:$0xf]
        %v2993 = vld [vmem:[%s5 + $0x19c] sm:$0xf]
        %v2994 = vld [vmem:[%s5 + $0x1a0] sm:$0xf]
        %v2995 = vld [vmem:[%s5 + $0x1a4] sm:$0xf]
        %v2996 = vld [vmem:[%s5 + $0x1a8] sm:$0xf]
        %v2997 = vld [vmem:[%s5 + $0x1ac] sm:$0xf]
        %v2998 = vld [vmem:[%s5 + $0x1b0] sm:$0xf]
        %v2999 = vld [vmem:[%s5 + $0x1b4] sm:$0xf]
        %v3000 = vld [vmem:[%s5 + $0x1b8] sm:$0xf]
        %v3001 = vld [vmem:[%s5 + $0x1bc] sm:$0xf]
        %v3002 = vld [vmem:[%s5 + $0x1c0] sm:$0xf]
        %v3003 = vld [vmem:[%s5 + $0x1c4] sm:$0xf]
        %v3004 = vld [vmem:[%s5 + $0x1c8] sm:$0xf]
        %v3005 = vld [vmem:[%s5 + $0x1cc] sm:$0xf]
        %v3006 = vld [vmem:[%s5 + $0x1d0] sm:$0xf]
        %v3007 = vld [vmem:[%s5 + $0x1d4] sm:$0xf]
        %v3008 = vld [vmem:[%s5 + $0x1d8] sm:$0xf]
        %v3009 = vld [vmem:[%s5 + $0x1dc] sm:$0xf]
        %v3010 = vld [vmem:[%s5 + $0x1e0] sm:$0xf]
        %v3011 = vld [vmem:[%s5 + $0x1e4] sm:$0xf]
        %v3012 = vld [vmem:[%s5 + $0x1e8] sm:$0xf]
        %v3013 = vld [vmem:[%s5 + $0x1ec] sm:$0xf]
        %v3014 = vld [vmem:[%s5 + $0x1f0] sm:$0xf]
        %v3015 = vld [vmem:[%s5 + $0x1f4] sm:$0xf]
        %v3016 = vld [vmem:[%s5 + $0x1f8] sm:$0xf]
        %v3017 = vld [vmem:[%s5 + $0x1fc] sm:$0xf]
        %v3018 = vld [vmem:[%s5 + $0x200] sm:$0xf]
        %v3019 = vld [vmem:[%s5 + $0x204] sm:$0xf]
        %v3020 = vld [vmem:[%s5 + $0x208] sm:$0xf]
        %v3021 = vld [vmem:[%s5 + $0x20c] sm:$0xf]
        %v3022 = vld [vmem:[%s5 + $0x210] sm:$0xf]
        %v3023 = vld [vmem:[%s5 + $0x214] sm:$0xf]
        %v3024 = vld [vmem:[%s5 + $0x218] sm:$0xf]
        %v3025 = vld [vmem:[%s5 + $0x21c] sm:$0xf]
        %v3026 = vld [vmem:[%s5 + $0x220] sm:$0xf]
        %v3027 = vld [vmem:[%s5 + $0x224] sm:$0xf]
        %v3028 = vld [vmem:[%s5 + $0x228] sm:$0xf]
        %v3029 = vld [vmem:[%s5 + $0x22c] sm:$0xf]
        %v3030 = vld [vmem:[%s5 + $0x230] sm:$0xf]
        %v3031 = vld [vmem:[%s5 + $0x234] sm:$0xf]
        %v3032 = vld [vmem:[%s5 + $0x238] sm:$0xf]
        %v3033 = vld [vmem:[%s5 + $0x23c] sm:$0xf]
        %v3034 = vld [vmem:[%s6] sm:$0x1]
        %v3036 = vlaneseq
        %v3037 = vshrl.u32 %v3036, 7
        %v3038 = vsub.s32 0, %v3037
        %v3039 = vrot.slane %v3034, %v3038
        %v3041 = vpack.c.b16 %v2476, %v2474
        %v3042 = vpack.c.b16 %v2848, %v2842
        %v3043 = vpack.c.b16 %v2849, %v2843
        %v3044 = vpack.c.b16 %v2604, %v2602
        %v3045 = vpack.c.b16 %v2850, %v2844
        %v3046 = vpack.c.b16 %v2851, %v2845
        %v3047 = vpack.c.b16 %v2732, %v2730
        %v3048 = vpack.c.b16 %v2852, %v2846
        %v3049 = vpack.c.b16 %v2853, %v2847
        %v3050 = vpack.c.b16 %v2480, %v2478
        %v3051 = vpack.c.b16 %v2860, %v2854
        %v3052 = vpack.c.b16 %v2861, %v2855
        %v3053 = vpack.c.b16 %v2608, %v2606
        %v3054 = vpack.c.b16 %v2862, %v2856
        %v3055 = vpack.c.b16 %v2863, %v2857
        %v3056 = vpack.c.b16 %v2736, %v2734
        %v3057 = vpack.c.b16 %v2864, %v2858
        %v3058 = vpack.c.b16 %v2865, %v2859
        %v3059 = vpack.c.b16 %v2484, %v2482
        %v3060 = vpack.c.b16 %v2872, %v2866
        %v3061 = vpack.c.b16 %v2873, %v2867
        %v3062 = vpack.c.b16 %v2612, %v2610
        %v3063 = vpack.c.b16 %v2874, %v2868
        %v3064 = vpack.c.b16 %v2875, %v2869
        %v3065 = vpack.c.b16 %v2740, %v2738
        %v3066 = vpack.c.b16 %v2876, %v2870
        %v3067 = vpack.c.b16 %v2877, %v2871
        %v3068 = vpack.c.b16 %v2488, %v2486
        %v3069 = vpack.c.b16 %v2884, %v2878
        %v3070 = vpack.c.b16 %v2885, %v2879
        %v3071 = vpack.c.b16 %v2616, %v2614
        %v3072 = vpack.c.b16 %v2886, %v2880
        %v3073 = vpack.c.b16 %v2887, %v2881
        %v3074 = vpack.c.b16 %v2744, %v2742
        %v3075 = vpack.c.b16 %v2888, %v2882
        %v3076 = vpack.c.b16 %v2889, %v2883
        %v3257 = vunpack.c.l.b16 %v2890
        %v3258 = vunpack.c.l.b16 %v2891
        %v3259 = vunpack.c.l.b16 %v2892
        %v3260 = vunpack.c.l.b16 %v2893
        %v3261 = vunpack.c.l.b16 %v2894
        %v3262 = vunpack.c.l.b16 %v2895
        %v3263 = vunpack.c.l.b16 %v2896
        %v3264 = vunpack.c.l.b16 %v2897
        %v3265 = vunpack.c.l.b16 %v2898
        %v3266 = vunpack.c.l.b16 %v2899
        %v3267 = vunpack.c.l.b16 %v2900
        %v3268 = vunpack.c.l.b16 %v2901
        %v3269 = vunpack.c.l.b16 %v2902
        %v3270 = vunpack.c.l.b16 %v2903
        %v3271 = vunpack.c.l.b16 %v2904
        %v3272 = vunpack.c.l.b16 %v2905
        %v3273 = vunpack.c.l.b16 %v2906
        %v3274 = vunpack.c.l.b16 %v2907
        %v3275 = vunpack.c.l.b16 %v2908
        %v3276 = vunpack.c.l.b16 %v2909
        %v3277 = vunpack.c.l.b16 %v2910
        %v3278 = vunpack.c.l.b16 %v2911
        %v3279 = vunpack.c.l.b16 %v2912
        %v3280 = vunpack.c.l.b16 %v2913
        %v3281 = vunpack.c.l.b16 %v2914
        %v3282 = vunpack.c.l.b16 %v2915
        %v3283 = vunpack.c.l.b16 %v2916
        %v3284 = vunpack.c.l.b16 %v2917
        %v3285 = vunpack.c.l.b16 %v2918
        %v3286 = vunpack.c.l.b16 %v2919
        %v3287 = vunpack.c.l.b16 %v2920
        %v3288 = vunpack.c.l.b16 %v2921
        %v3289 = vunpack.c.l.b16 %v2922
        %v3290 = vunpack.c.l.b16 %v2923
        %v3291 = vunpack.c.l.b16 %v2924
        %v3292 = vunpack.c.l.b16 %v2925
        %v3293 = vunpack.c.l.b16 %v2926
        %v3294 = vunpack.c.l.b16 %v2927
        %v3295 = vunpack.c.l.b16 %v2928
        %v3296 = vunpack.c.l.b16 %v2929
        %v3297 = vunpack.c.l.b16 %v2930
        %v3298 = vunpack.c.l.b16 %v2931
        %v3299 = vunpack.c.l.b16 %v2932
        %v3300 = vunpack.c.l.b16 %v2933
        %v3301 = vunpack.c.l.b16 %v2934
        %v3302 = vunpack.c.l.b16 %v2935
        %v3303 = vunpack.c.l.b16 %v2936
        %v3304 = vunpack.c.l.b16 %v2937
        %v3305 = vunpack.c.l.b16 %v2938
        %v3306 = vunpack.c.l.b16 %v2939
        %v3307 = vunpack.c.l.b16 %v2940
        %v3308 = vunpack.c.l.b16 %v2941
        %v3309 = vunpack.c.l.b16 %v2942
        %v3310 = vunpack.c.l.b16 %v2943
        %v3311 = vunpack.c.l.b16 %v2944
        %v3312 = vunpack.c.l.b16 %v2945
        %v3313 = vunpack.c.l.b16 %v2946
        %v3314 = vunpack.c.l.b16 %v2947
        %v3315 = vunpack.c.l.b16 %v2948
        %v3316 = vunpack.c.l.b16 %v2949
        %v3317 = vunpack.c.l.b16 %v2950
        %v3318 = vunpack.c.l.b16 %v2951
        %v3319 = vunpack.c.l.b16 %v2952
        %v3320 = vunpack.c.l.b16 %v2953
        %v3321 = vunpack.c.l.b16 %v2954
        %v3322 = vunpack.c.l.b16 %v2955
        %v3323 = vunpack.c.l.b16 %v2956
        %v3324 = vunpack.c.l.b16 %v2957
        %v3325 = vunpack.c.l.b16 %v2958
        %v3326 = vunpack.c.l.b16 %v2959
        %v3327 = vunpack.c.l.b16 %v2960
        %v3328 = vunpack.c.l.b16 %v2961
        %v3329 = vunpack.c.l.b16 %v2962
        %v3330 = vunpack.c.l.b16 %v2963
        %v3331 = vunpack.c.l.b16 %v2964
        %v3332 = vunpack.c.l.b16 %v2965
        %v3333 = vunpack.c.l.b16 %v2966
        %v3334 = vunpack.c.l.b16 %v2967
        %v3335 = vunpack.c.l.b16 %v2968
        %v3336 = vunpack.c.l.b16 %v2969
        %v3337 = vunpack.c.l.b16 %v2970
        %v3338 = vunpack.c.l.b16 %v2971
        %v3339 = vunpack.c.l.b16 %v2972
        %v3340 = vunpack.c.l.b16 %v2973
        %v3341 = vunpack.c.l.b16 %v2974
        %v3342 = vunpack.c.l.b16 %v2975
        %v3343 = vunpack.c.l.b16 %v2976
        %v3344 = vunpack.c.l.b16 %v2977
        %v3345 = vunpack.c.l.b16 %v2978
        %v3346 = vunpack.c.l.b16 %v2979
        %v3347 = vunpack.c.l.b16 %v2980
        %v3348 = vunpack.c.l.b16 %v2981
        %v3349 = vunpack.c.l.b16 %v2982
        %v3350 = vunpack.c.l.b16 %v2983
        %v3351 = vunpack.c.l.b16 %v2984
        %v3352 = vunpack.c.l.b16 %v2985
        %v3353 = vunpack.c.l.b16 %v2986
        %v3354 = vunpack.c.l.b16 %v2987
        %v3355 = vunpack.c.l.b16 %v2988
        %v3356 = vunpack.c.l.b16 %v2989
        %v3357 = vunpack.c.l.b16 %v2990
        %v3358 = vunpack.c.l.b16 %v2991
        %v3359 = vunpack.c.l.b16 %v2992
        %v3360 = vunpack.c.l.b16 %v2993
        %v3361 = vunpack.c.l.b16 %v2994
        %v3362 = vunpack.c.l.b16 %v2995
        %v3363 = vunpack.c.l.b16 %v2996
        %v3364 = vunpack.c.l.b16 %v2997
        %v3365 = vunpack.c.l.b16 %v2998
        %v3366 = vunpack.c.l.b16 %v2999
        %v3367 = vunpack.c.l.b16 %v3000
        %v3368 = vunpack.c.l.b16 %v3001
        %v3369 = vunpack.c.l.b16 %v3002
        %v3370 = vunpack.c.l.b16 %v3003
        %v3371 = vunpack.c.l.b16 %v3004
        %v3372 = vunpack.c.l.b16 %v3005
        %v3373 = vunpack.c.l.b16 %v3006
        %v3374 = vunpack.c.l.b16 %v3007
        %v3375 = vunpack.c.l.b16 %v3008
        %v3376 = vunpack.c.l.b16 %v3009
        %v3377 = vunpack.c.l.b16 %v3010
        %v3378 = vunpack.c.l.b16 %v3011
        %v3379 = vunpack.c.l.b16 %v3012
        %v3380 = vunpack.c.l.b16 %v3013
        %v3381 = vunpack.c.l.b16 %v3014
        %v3382 = vunpack.c.l.b16 %v3015
        %v3383 = vunpack.c.l.b16 %v3016
        %v3384 = vunpack.c.l.b16 %v3017
        %v3385 = vunpack.c.l.b16 %v3018
        %v3386 = vunpack.c.l.b16 %v3019
        %v3387 = vunpack.c.l.b16 %v3020
        %v3388 = vunpack.c.l.b16 %v3021
        %v3389 = vunpack.c.l.b16 %v3022
        %v3390 = vunpack.c.l.b16 %v3023
        %v3391 = vunpack.c.l.b16 %v3024
        %v3392 = vunpack.c.l.b16 %v3025
        %v3393 = vunpack.c.l.b16 %v3026
        %v3394 = vunpack.c.l.b16 %v3027
        %v3395 = vunpack.c.l.b16 %v3028
        %v3396 = vunpack.c.l.b16 %v3029
        %v3397 = vunpack.c.l.b16 %v3030
        %v3398 = vunpack.c.l.b16 %v3031
        %v3399 = vunpack.c.l.b16 %v3032
        %v3400 = vunpack.c.l.b16 %v3033
        %v3401 = vpack.c.b16 %v3258, %v3257
        %v3402 = vpack.c.b16 %v3260, %v3259
        %v3403 = vpack.c.b16 %v3262, %v3261
        %v3404 = vpack.c.b16 %v3264, %v3263
        %v3405 = vpack.c.b16 %v3266, %v3265
        %v3406 = vpack.c.b16 %v3268, %v3267
        %v3407 = vpack.c.b16 %v3270, %v3269
        %v3408 = vpack.c.b16 %v3272, %v3271
        %v3409 = vpack.c.b16 %v3274, %v3273
        %v3410 = vpack.c.b16 %v3276, %v3275
        %v3411 = vpack.c.b16 %v3278, %v3277
        %v3412 = vpack.c.b16 %v3280, %v3279
        %v3413 = vpack.c.b16 %v3282, %v3281
        %v3414 = vpack.c.b16 %v3284, %v3283
        %v3415 = vpack.c.b16 %v3286, %v3285
        %v3416 = vpack.c.b16 %v3288, %v3287
        %v3417 = vpack.c.b16 %v3290, %v3289
        %v3418 = vpack.c.b16 %v3292, %v3291
        %v3419 = vpack.c.b16 %v3294, %v3293
        %v3420 = vpack.c.b16 %v3296, %v3295
        %v3421 = vpack.c.b16 %v3298, %v3297
        %v3422 = vpack.c.b16 %v3300, %v3299
        %v3423 = vpack.c.b16 %v3302, %v3301
        %v3424 = vpack.c.b16 %v3304, %v3303
        %v3425 = vpack.c.b16 %v3306, %v3305
        %v3426 = vpack.c.b16 %v3308, %v3307
        %v3427 = vpack.c.b16 %v3310, %v3309
        %v3428 = vpack.c.b16 %v3312, %v3311
        %v3429 = vpack.c.b16 %v3314, %v3313
        %v3430 = vpack.c.b16 %v3316, %v3315
        %v3431 = vpack.c.b16 %v3318, %v3317
        %v3432 = vpack.c.b16 %v3320, %v3319
        %v3433 = vpack.c.b16 %v3322, %v3321
        %v3434 = vpack.c.b16 %v3324, %v3323
        %v3435 = vpack.c.b16 %v3326, %v3325
        %v3436 = vpack.c.b16 %v3328, %v3327
        %v3437 = vpack.c.b16 %v3330, %v3329
        %v3438 = vpack.c.b16 %v3332, %v3331
        %v3439 = vpack.c.b16 %v3334, %v3333
        %v3440 = vpack.c.b16 %v3336, %v3335
        %v3441 = vpack.c.b16 %v3338, %v3337
        %v3442 = vpack.c.b16 %v3340, %v3339
        %v3443 = vpack.c.b16 %v3342, %v3341
        %v3444 = vpack.c.b16 %v3344, %v3343
        %v3445 = vpack.c.b16 %v3346, %v3345
        %v3446 = vpack.c.b16 %v3348, %v3347
        %v3447 = vpack.c.b16 %v3350, %v3349
        %v3448 = vpack.c.b16 %v3352, %v3351
        %v3449 = vpack.c.b16 %v3354, %v3353
        %v3450 = vpack.c.b16 %v3356, %v3355
        %v3451 = vpack.c.b16 %v3358, %v3357
        %v3452 = vpack.c.b16 %v3360, %v3359
        %v3453 = vpack.c.b16 %v3362, %v3361
        %v3454 = vpack.c.b16 %v3364, %v3363
        %v3455 = vpack.c.b16 %v3366, %v3365
        %v3456 = vpack.c.b16 %v3368, %v3367
        %v3457 = vpack.c.b16 %v3370, %v3369
        %v3458 = vpack.c.b16 %v3372, %v3371
        %v3459 = vpack.c.b16 %v3374, %v3373
        %v3460 = vpack.c.b16 %v3376, %v3375
        %v3461 = vpack.c.b16 %v3378, %v3377
        %v3462 = vpack.c.b16 %v3380, %v3379
        %v3463 = vpack.c.b16 %v3382, %v3381
        %v3464 = vpack.c.b16 %v3384, %v3383
        %v3465 = vpack.c.b16 %v3386, %v3385
        %v3466 = vpack.c.b16 %v3388, %v3387
        %v3467 = vpack.c.b16 %v3390, %v3389
        %v3468 = vpack.c.b16 %v3392, %v3391
        %v3469 = vpack.c.b16 %v3394, %v3393
        %v3470 = vpack.c.b16 %v3396, %v3395
        %v3471 = vpack.c.b16 %v3398, %v3397
        %v3472 = vpack.c.b16 %v3400, %v3399
        %3545 = vmatprep.subr.bf16.mxu0 0
        %3546 = vmatpush1.bf16.msra.mxu0 %v3401
        %3547 = vmatprep.subr.bf16.mxu0 0
        %3548 = vmatpush1.bf16.msra.mxu0 %v3402
        %3549 = vmatprep.subr.bf16.mxu0 0
        %3550 = vmatpush1.bf16.msra.mxu0 %v3403
        %3551 = vmatprep.subr.bf16.mxu0 0
        %3552 = vmatpush1.bf16.msra.mxu0 %v3404
        %3553 = vmatprep.subr.bf16.mxu0 0
        %3554 = vmatpush1.bf16.msra.mxu0 %v3405
        %3555 = vmatprep.subr.bf16.mxu0 0
        %3556 = vmatpush1.bf16.msra.mxu0 %v3406
        %3557 = vmatprep.subr.bf16.mxu0 0
        %3558 = vmatpush1.bf16.msra.mxu0 %v3407
        %3559 = vmatprep.subr.bf16.mxu0 0
        %3560 = vmatpush1.bf16.msra.mxu0 %v3408
        %3561 = vmatprep.subr.bf16.mxu0 0
        %3562 = vmatpush1.bf16.msra.mxu0 %v3409
        %3563 = vmatprep.subr.bf16.mxu0 0
        %3564 = vmatpush1.bf16.msra.mxu0 %v3410
        %3565 = vmatprep.subr.bf16.mxu0 0
        %3566 = vmatpush1.bf16.msra.mxu0 %v3411
        %3567 = vmatprep.subr.bf16.mxu0 0
        %3568 = vmatpush1.bf16.msra.mxu0 %v3412
        %3569 = vmatprep.subr.bf16.mxu0 0
        %3570 = vmatpush1.bf16.msra.mxu0 %v3413
        %3571 = vmatprep.subr.bf16.mxu0 0
        %3572 = vmatpush1.bf16.msra.mxu0 %v3414
        %3573 = vmatprep.subr.bf16.mxu0 0
        %3574 = vmatpush1.bf16.msra.mxu0 %v3415
        %3575 = vmatprep.subr.bf16.mxu0 0
        %3576 = vmatpush1.bf16.msra.mxu0 %v3416
        %3577 = vmatprep.mubr.bf16.mxu0 %v3042
        %3578 = vmatmul.mubr.bf16.gmra.mrb[0].mxu0 %v3041
        %v3579 = vpop.f32.mrb[0].mxu0
        %v3580 = vadd.f32 %v3039, %v3579
        %v3581 = vpop.f32.mrb[0].mxu0
        %v3582 = vpop.f32.mrb[0].mxu0
        %v3583 = vadd.f32 %v3039, %v3582
        %v3584 = vpop.f32.mrb[0].mxu0
        %3585 = vmatprep.mubr.bf16.mxu0 %v3051
        %3586 = vmatmul.mubr.bf16.gmra.mrb[0].mxu0 %v3050
        %v3587 = vpop.f32.mrb[0].mxu0
        %v3588 = vadd.f32 %v3039, %v3587
        %v3589 = vpop.f32.mrb[0].mxu0
        %v3590 = vpop.f32.mrb[0].mxu0
        %v3591 = vadd.f32 %v3039, %v3590
        %v3592 = vpop.f32.mrb[0].mxu0
        %3593 = vmatprep.mubr.bf16.mxu0 %v3060
        %3594 = vmatmul.mubr.bf16.gmra.mrb[0].mxu0 %v3059
        %v3595 = vpop.f32.mrb[0].mxu0
        %v3596 = vadd.f32 %v3039, %v3595
        %v3597 = vpop.f32.mrb[0].mxu0
        %v3598 = vpop.f32.mrb[0].mxu0
        %v3599 = vadd.f32 %v3039, %v3598
        %v3600 = vpop.f32.mrb[0].mxu0
        %3601 = vmatprep.mubr.bf16.mxu0 %v3069
        %3602 = vmatmul.mubr.bf16.gmra.mrb[0].mxu0 %v3068
        %v3603 = vpop.f32.mrb[0].mxu0
        %v3604 = vadd.f32 %v3039, %v3603
        %v3605 = vpop.f32.mrb[0].mxu0
        %v3606 = vpop.f32.mrb[0].mxu0
        %v3607 = vadd.f32 %v3039, %v3606
        %v3608 = vpop.f32.mrb[0].mxu0
        %3609 = vdwg.mxu0
        %3610 = vmatprep.subr.bf16.mxu0 0
        %3611 = vmatpush1.bf16.msra.mxu0 %v3417
        %3612 = vmatprep.subr.bf16.mxu0 0
        %3613 = vmatpush1.bf16.msra.mxu0 %v3418
        %3614 = vmatprep.subr.bf16.mxu0 0
        %3615 = vmatpush1.bf16.msra.mxu0 %v3419
        %3616 = vmatprep.subr.bf16.mxu0 0
        %3617 = vmatpush1.bf16.msra.mxu0 %v3420
        %3618 = vmatprep.subr.bf16.mxu0 0
        %3619 = vmatpush1.bf16.msra.mxu0 %v3421
        %3620 = vmatprep.subr.bf16.mxu0 0
        %3621 = vmatpush1.bf16.msra.mxu0 %v3422
        %3622 = vmatprep.subr.bf16.mxu0 0
        %3623 = vmatpush1.bf16.msra.mxu0 %v3423
        %3624 = vmatprep.subr.bf16.mxu0 0
        %3625 = vmatpush1.bf16.msra.mxu0 %v3424
        %3626 = vmatprep.subr.bf16.mxu0 0
        %3627 = vmatpush1.bf16.msra.mxu0 %v3425
        %3628 = vmatprep.subr.bf16.mxu0 0
        %3629 = vmatpush1.bf16.msra.mxu0 %v3426
        %3630 = vmatprep.subr.bf16.mxu0 0
        %3631 = vmatpush1.bf16.msra.mxu0 %v3427
        %3632 = vmatprep.subr.bf16.mxu0 0
        %3633 = vmatpush1.bf16.msra.mxu0 %v3428
        %3634 = vmatprep.subr.bf16.mxu0 0
        %3635 = vmatpush1.bf16.msra.mxu0 %v3429
        %3636 = vmatprep.subr.bf16.mxu0 0
        %3637 = vmatpush1.bf16.msra.mxu0 %v3430
        %3638 = vmatprep.subr.bf16.mxu0 0
        %3639 = vmatpush1.bf16.msra.mxu0 %v3431
        %3640 = vmatprep.subr.bf16.mxu0 0
        %3641 = vmatpush1.bf16.msra.mxu0 %v3432
        %3642 = vmatprep.mubr.bf16.mxu0 %v3044
        %3643 = vmatmul.mubr.bf16.gmra.mrb[0].mxu0 %v3043
        %v3644 = vpop.f32.mrb[0].mxu0
        %v3645 = vadd.f32 %v3580, %v3644
        %v3646 = vpop.f32.mrb[0].mxu0
        %v3647 = vpop.f32.mrb[0].mxu0
        %v3648 = vadd.f32 %v3583, %v3647
        %v3649 = vpop.f32.mrb[0].mxu0
        %3650 = vmatprep.mubr.bf16.mxu0 %v3053
        %3651 = vmatmul.mubr.bf16.gmra.mrb[0].mxu0 %v3052
        %v3652 = vpop.f32.mrb[0].mxu0
        %v3653 = vadd.f32 %v3588, %v3652
        %v3654 = vpop.f32.mrb[0].mxu0
        %v3655 = vpop.f32.mrb[0].mxu0
        %v3656 = vadd.f32 %v3591, %v3655
        %v3657 = vpop.f32.mrb[0].mxu0
        %3658 = vmatprep.mubr.bf16.mxu0 %v3062
        %3659 = vmatmul.mubr.bf16.gmra.mrb[0].mxu0 %v3061
        %v3660 = vpop.f32.mrb[0].mxu0
        %v3661 = vadd.f32 %v3596, %v3660
        %v3662 = vpop.f32.mrb[0].mxu0
        %v3663 = vpop.f32.mrb[0].mxu0
        %v3664 = vadd.f32 %v3599, %v3663
        %v3665 = vpop.f32.mrb[0].mxu0
        %3666 = vmatprep.mubr.bf16.mxu0 %v3071
        %3667 = vmatmul.mubr.bf16.gmra.mrb[0].mxu0 %v3070
        %v3668 = vpop.f32.mrb[0].mxu0
        %v3669 = vadd.f32 %v3604, %v3668
        %v3670 = vpop.f32.mrb[0].mxu0
        %v3671 = vpop.f32.mrb[0].mxu0
        %v3672 = vadd.f32 %v3607, %v3671
        %v3673 = vpop.f32.mrb[0].mxu0
        %3674 = vdwg.mxu0
        %3675 = vmatprep.subr.bf16.mxu0 0
        %3676 = vmatpush1.bf16.msra.mxu0 %v3433
        %3677 = vmatprep.subr.bf16.mxu0 0
        %3678 = vmatpush1.bf16.msra.mxu0 %v3434
        %3679 = vmatprep.subr.bf16.mxu0 0
        %3680 = vmatpush1.bf16.msra.mxu0 %v3435
        %3681 = vmatprep.subr.bf16.mxu0 0
        %3682 = vmatpush1.bf16.msra.mxu0 %v3436
        %3683 = vmatprep.subr.bf16.mxu0 0
        %3684 = vmatpush1.bf16.msra.mxu0 %v3437
        %3685 = vmatprep.subr.bf16.mxu0 0
        %3686 = vmatpush1.bf16.msra.mxu0 %v3438
        %3687 = vmatprep.subr.bf16.mxu0 0
        %3688 = vmatpush1.bf16.msra.mxu0 %v3439
        %3689 = vmatprep.subr.bf16.mxu0 0
        %3690 = vmatpush1.bf16.msra.mxu0 %v3440
        %3691 = vmatprep.subr.bf16.mxu0 0
        %3692 = vmatpush1.bf16.msra.mxu0 %v3441
        %3693 = vmatprep.subr.bf16.mxu0 0
        %3694 = vmatpush1.bf16.msra.mxu0 %v3442
        %3695 = vmatprep.subr.bf16.mxu0 0
        %3696 = vmatpush1.bf16.msra.mxu0 %v3443
        %3697 = vmatprep.subr.bf16.mxu0 0
        %3698 = vmatpush1.bf16.msra.mxu0 %v3444
        %3699 = vmatprep.subr.bf16.mxu0 0
        %3700 = vmatpush1.bf16.msra.mxu0 %v3445
        %3701 = vmatprep.subr.bf16.mxu0 0
        %3702 = vmatpush1.bf16.msra.mxu0 %v3446
        %3703 = vmatprep.subr.bf16.mxu0 0
        %3704 = vmatpush1.bf16.msra.mxu0 %v3447
        %3705 = vmatprep.subr.bf16.mxu0 0
        %3706 = vmatpush1.bf16.msra.mxu0 %v3448
        %3707 = vmatprep.mubr.bf16.mxu0 %v3046
        %3708 = vmatmul.mubr.bf16.gmra.mrb[0].mxu0 %v3045
        %v3709 = vpop.f32.mrb[0].mxu0
        %v3710 = vadd.f32 %v3645, %v3709
        %v3711 = vpop.f32.mrb[0].mxu0
        %v3712 = vpop.f32.mrb[0].mxu0
        %v3713 = vadd.f32 %v3648, %v3712
        %v3714 = vpop.f32.mrb[0].mxu0
        %3715 = vmatprep.mubr.bf16.mxu0 %v3055
        %3716 = vmatmul.mubr.bf16.gmra.mrb[0].mxu0 %v3054
        %v3717 = vpop.f32.mrb[0].mxu0
        %v3718 = vadd.f32 %v3653, %v3717
        %v3719 = vpop.f32.mrb[0].mxu0
        %v3720 = vpop.f32.mrb[0].mxu0
        %v3721 = vadd.f32 %v3656, %v3720
        %v3722 = vpop.f32.mrb[0].mxu0
        %3723 = vmatprep.mubr.bf16.mxu0 %v3064
        %3724 = vmatmul.mubr.bf16.gmra.mrb[0].mxu0 %v3063
        %v3725 = vpop.f32.mrb[0].mxu0
        %v3726 = vadd.f32 %v3661, %v3725
        %v3727 = vpop.f32.mrb[0].mxu0
        %v3728 = vpop.f32.mrb[0].mxu0
        %v3729 = vadd.f32 %v3664, %v3728
        %v3730 = vpop.f32.mrb[0].mxu0
        %3731 = vmatprep.mubr.bf16.mxu0 %v3073
        %3732 = vmatmul.mubr.bf16.gmra.mrb[0].mxu0 %v3072
        %v3733 = vpop.f32.mrb[0].mxu0
        %v3734 = vadd.f32 %v3669, %v3733
        %v3735 = vpop.f32.mrb[0].mxu0
        %v3736 = vpop.f32.mrb[0].mxu0
        %v3737 = vadd.f32 %v3672, %v3736
        %v3738 = vpop.f32.mrb[0].mxu0
        %3739 = vdwg.mxu0
        %3740 = vmatprep.subr.bf16.mxu0 0
        %3741 = vmatpush1.bf16.msra.mxu0 %v3449
        %3742 = vmatprep.subr.bf16.mxu0 0
        %3743 = vmatpush1.bf16.msra.mxu0 %v3450
        %3744 = vmatprep.subr.bf16.mxu0 0
        %3745 = vmatpush1.bf16.msra.mxu0 %v3451
        %3746 = vmatprep.subr.bf16.mxu0 0
        %3747 = vmatpush1.bf16.msra.mxu0 %v3452
        %3748 = vmatprep.subr.bf16.mxu0 0
        %3749 = vmatpush1.bf16.msra.mxu0 %v3453
        %3750 = vmatprep.subr.bf16.mxu0 0
        %3751 = vmatpush1.bf16.msra.mxu0 %v3454
        %3752 = vmatprep.subr.bf16.mxu0 0
        %3753 = vmatpush1.bf16.msra.mxu0 %v3455
        %3754 = vmatprep.subr.bf16.mxu0 0
        %3755 = vmatpush1.bf16.msra.mxu0 %v3456
        %3756 = vmatprep.subr.bf16.mxu0 0
        %3757 = vmatpush1.bf16.msra.mxu0 %v3457
        %3758 = vmatprep.subr.bf16.mxu0 0
        %3759 = vmatpush1.bf16.msra.mxu0 %v3458
        %3760 = vmatprep.subr.bf16.mxu0 0
        %3761 = vmatpush1.bf16.msra.mxu0 %v3459
        %3762 = vmatprep.subr.bf16.mxu0 0
        %3763 = vmatpush1.bf16.msra.mxu0 %v3460
        %3764 = vmatprep.subr.bf16.mxu0 0
        %3765 = vmatpush1.bf16.msra.mxu0 %v3461
        %3766 = vmatprep.subr.bf16.mxu0 0
        %3767 = vmatpush1.bf16.msra.mxu0 %v3462
        %3768 = vmatprep.subr.bf16.mxu0 0
        %3769 = vmatpush1.bf16.msra.mxu0 %v3463
        %3770 = vmatprep.subr.bf16.mxu0 0
        %3771 = vmatpush1.bf16.msra.mxu0 %v3464
        %3772 = vmatprep.mubr.bf16.mxu0 %v3048
        %3773 = vmatmul.mubr.bf16.gmra.mrb[0].mxu0 %v3047
        %v3774 = vpop.f32.mrb[0].mxu0
        %v3775 = vadd.f32 %v3710, %v3774
        %v3776 = vpop.f32.mrb[0].mxu0
        %v3777 = vpop.f32.mrb[0].mxu0
        %v3778 = vadd.f32 %v3713, %v3777
        %v3779 = vpop.f32.mrb[0].mxu0
        %3780 = vmatprep.mubr.bf16.mxu0 %v3057
        %3781 = vmatmul.mubr.bf16.gmra.mrb[0].mxu0 %v3056
        %v3782 = vpop.f32.mrb[0].mxu0
        %v3783 = vadd.f32 %v3718, %v3782
        %v3784 = vpop.f32.mrb[0].mxu0
        %v3785 = vpop.f32.mrb[0].mxu0
        %v3786 = vadd.f32 %v3721, %v3785
        %v3787 = vpop.f32.mrb[0].mxu0
        %3788 = vmatprep.mubr.bf16.mxu0 %v3066
        %3789 = vmatmul.mubr.bf16.gmra.mrb[0].mxu0 %v3065
        %v3790 = vpop.f32.mrb[0].mxu0
        %v3791 = vadd.f32 %v3726, %v3790
        %v3792 = vpop.f32.mrb[0].mxu0
        %v3793 = vpop.f32.mrb[0].mxu0
        %v3794 = vadd.f32 %v3729, %v3793
        %v3795 = vpop.f32.mrb[0].mxu0
        %3796 = vmatprep.mubr.bf16.mxu0 %v3075
        %3797 = vmatmul.mubr.bf16.gmra.mrb[0].mxu0 %v3074
        %v3798 = vpop.f32.mrb[0].mxu0
        %v3799 = vadd.f32 %v3734, %v3798
        %v3800 = vpop.f32.mrb[0].mxu0
        %v3801 = vpop.f32.mrb[0].mxu0
        %v3802 = vadd.f32 %v3737, %v3801
        %v3803 = vpop.f32.mrb[0].mxu0
        %3804 = vdwg.mxu0
        %3805 = vmatprep.subr.bf16.mxu0 0
        %3806 = vmatpush1.bf16.msra.mxu0 %v3465
        %3807 = vmatprep.subr.bf16.mxu0 0
        %3808 = vmatpush1.bf16.msra.mxu0 %v3466
        %3809 = vmatprep.subr.bf16.mxu0 0
        %3810 = vmatpush1.bf16.msra.mxu0 %v3467
        %3811 = vmatprep.subr.bf16.mxu0 0
        %3812 = vmatpush1.bf16.msra.mxu0 %v3468
        %3813 = vmatprep.subr.bf16.mxu0 0
        %3814 = vmatpush1.bf16.msra.mxu0 %v3469
        %3815 = vmatprep.subr.bf16.mxu0 0
        %3816 = vmatpush1.bf16.msra.mxu0 %v3470
        %3817 = vmatprep.subr.bf16.mxu0 0
        %3818 = vmatpush1.bf16.msra.mxu0 %v3471
        %3819 = vmatprep.subr.bf16.mxu0 0
        %3820 = vmatpush1.bf16.msra.mxu0 %v3472
        %3821 = vmatprep.subr.bf16.mxu0 0
        %3822 = vmatpush1.bf16.msra.mxu0 0
        %3823 = vmatprep.subr.bf16.mxu0 0
        %3824 = vmatpush1.bf16.msra.mxu0 0
        %3825 = vmatprep.subr.bf16.mxu0 0
        %3826 = vmatpush1.bf16.msra.mxu0 0
        %3827 = vmatprep.subr.bf16.mxu0 0
        %3828 = vmatpush1.bf16.msra.mxu0 0
        %3829 = vmatprep.subr.bf16.mxu0 0
        %3830 = vmatpush1.bf16.msra.mxu0 0
        %3831 = vmatprep.subr.bf16.mxu0 0
        %3832 = vmatpush1.bf16.msra.mxu0 0
        %3833 = vmatprep.subr.bf16.mxu0 0
        %3834 = vmatpush1.bf16.msra.mxu0 0
        %3835 = vmatprep.subr.bf16.mxu0 0
        %3836 = vmatpush1.bf16.msra.mxu0 0
        %3837 = vmatprep.mubr.bf16.mxu0 0
        %3838 = vmatmul.mubr.bf16.gmra.mrb[0].mxu0 %v3049
        %v3839 = vpop.f32.mrb[0].mxu0
        %v3840 = vadd.f32 %v3775, %v3839
        %v3841 = vpop.f32.mrb[0].mxu0
        %v3842 = vpop.f32.mrb[0].mxu0
        %v3843 = vadd.f32 %v3778, %v3842
        %v3844 = vpop.f32.mrb[0].mxu0
        %3845 = vmatprep.mubr.bf16.mxu0 0
        %3846 = vmatmul.mubr.bf16.gmra.mrb[0].mxu0 %v3058
        %v3847 = vpop.f32.mrb[0].mxu0
        %v3848 = vadd.f32 %v3783, %v3847
        %v3849 = vpop.f32.mrb[0].mxu0
        %v3850 = vpop.f32.mrb[0].mxu0
        %v3851 = vadd.f32 %v3786, %v3850
        %v3852 = vpop.f32.mrb[0].mxu0
        %3853 = vmatprep.mubr.bf16.mxu0 0
        %3854 = vmatmul.mubr.bf16.gmra.mrb[0].mxu0 %v3067
        %v3855 = vpop.f32.mrb[0].mxu0
        %v3856 = vadd.f32 %v3791, %v3855
        %v3857 = vpop.f32.mrb[0].mxu0
        %v3858 = vpop.f32.mrb[0].mxu0
        %v3859 = vadd.f32 %v3794, %v3858
        %v3860 = vpop.f32.mrb[0].mxu0
        %3861 = vmatprep.mubr.bf16.mxu0 0
        %3862 = vmatmul.mubr.bf16.gmra.mrb[0].mxu0 %v3076
        %v3863 = vpop.f32.mrb[0].mxu0
        %v3864 = vadd.f32 %v3799, %v3863
        %v3865 = vpop.f32.mrb[0].mxu0
        %v3866 = vpop.f32.mrb[0].mxu0
        %v3867 = vadd.f32 %v3802, %v3866
        %v3868 = vpop.f32.mrb[0].mxu0
        %3869 = vdwg.mxu0
        %v3870 = vmax.f32 %v3840, 0.0
        %v3871 = vmax.f32 %v3843, 0.0
        %v3872 = vmax.f32 %v3848, 0.0
        %v3873 = vmax.f32 %v3851, 0.0
        %v3874 = vmax.f32 %v3856, 0.0
        %v3875 = vmax.f32 %v3859, 0.0
        %v3876 = vmax.f32 %v3864, 0.0
        %v3877 = vmax.f32 %v3867, 0.0
        %v3878 = vmax.f32 %v3870, %v3871
        %v3879 = vmax.f32 %v3872, %v3873
        %v3880 = vmax.f32 %v3874, %v3875
        %v3881 = vmax.f32 %v3876, %v3877
        %v3886 = vcombine.high %v3878, %v3878
        %v3888 = vunpack.c.l.s4 1983009808
        %v3889 = vunpack.c.0.s8 %v3888
        %v3890 = vlaneseq
        %v3891 = vshrl.u32 %v3890, 7
        %v3892 = vsub.s32 %v3889, %v3891
        %v3893 = vrot.slane %v3878, %v3892
        %v3895 = vunpack.c.l.s4 1983009808
        %v3896 = vunpack.c.0.s8 %v3895
        %v3897 = vlaneseq
        %v3898 = vshrl.u32 %v3897, 7
        %v3899 = vsub.s32 %v3896, %v3898
        %v3900 = vrot.slane %v3886, %v3899
        %v3901 = vcombine.high %v3893, %v3893
        %v3902 = vcombine.high %v3900, %v3900
        %v3903 = vcombine.high %v3879, %v3879
        %v3905 = vunpack.c.l.s4 1983009808
        %v3906 = vunpack.c.0.s8 %v3905
        %v3907 = vlaneseq
        %v3908 = vshrl.u32 %v3907, 7
        %v3909 = vsub.s32 %v3906, %v3908
        %v3910 = vrot.slane %v3879, %v3909
        %v3912 = vunpack.c.l.s4 1983009808
        %v3913 = vunpack.c.0.s8 %v3912
        %v3914 = vlaneseq
        %v3915 = vshrl.u32 %v3914, 7
        %v3916 = vsub.s32 %v3913, %v3915
        %v3917 = vrot.slane %v3903, %v3916
        %v3918 = vcombine.high %v3910, %v3910
        %v3919 = vcombine.high %v3917, %v3917
        %v3920 = vcombine.high %v3880, %v3880
        %v3922 = vunpack.c.l.s4 1983009808
        %v3923 = vunpack.c.0.s8 %v3922
        %v3924 = vlaneseq
        %v3925 = vshrl.u32 %v3924, 7
        %v3926 = vsub.s32 %v3923, %v3925
        %v3927 = vrot.slane %v3880, %v3926
        %v3929 = vunpack.c.l.s4 1983009808
        %v3930 = vunpack.c.0.s8 %v3929
        %v3931 = vlaneseq
        %v3932 = vshrl.u32 %v3931, 7
        %v3933 = vsub.s32 %v3930, %v3932
        %v3934 = vrot.slane %v3920, %v3933
        %v3935 = vcombine.high %v3927, %v3927
        %v3936 = vcombine.high %v3934, %v3934
        %v3937 = vcombine.high %v3881, %v3881
        %v3939 = vunpack.c.l.s4 1983009808
        %v3940 = vunpack.c.0.s8 %v3939
        %v3941 = vlaneseq
        %v3942 = vshrl.u32 %v3941, 7
        %v3943 = vsub.s32 %v3940, %v3942
        %v3944 = vrot.slane %v3881, %v3943
        %v3946 = vunpack.c.l.s4 1983009808
        %v3947 = vunpack.c.0.s8 %v3946
        %v3948 = vlaneseq
        %v3949 = vshrl.u32 %v3948, 7
        %v3950 = vsub.s32 %v3947, %v3949
        %v3951 = vrot.slane %v3937, %v3950
        %v3952 = vcombine.high %v3944, %v3944
        %v3953 = vcombine.high %v3951, %v3951
        %v3970 = vrot.slane %v3893, 7
        %v3971 = vrot.slane %v3970, 2
        %v3972 = vrot.slane %v3901, 7
        %v3973 = vrot.slane %v3972, 2
        %v3974 = vrot.slane %v3900, 7
        %v3975 = vrot.slane %v3974, 2
        %v3976 = vrot.slane %v3902, 7
        %v3977 = vrot.slane %v3976, 2
        %v3978 = vrot.slane %v3910, 7
        %v3979 = vrot.slane %v3978, 2
        %v3980 = vrot.slane %v3918, 7
        %v3981 = vrot.slane %v3980, 2
        %v3982 = vrot.slane %v3917, 7
        %v3983 = vrot.slane %v3982, 2
        %v3984 = vrot.slane %v3919, 7
        %v3985 = vrot.slane %v3984, 2
        %v3986 = vrot.slane %v3927, 7
        %v3987 = vrot.slane %v3986, 2
        %v3988 = vrot.slane %v3935, 7
        %v3989 = vrot.slane %v3988, 2
        %v3990 = vrot.slane %v3934, 7
        %v3991 = vrot.slane %v3990, 2
        %v3992 = vrot.slane %v3936, 7
        %v3993 = vrot.slane %v3992, 2
        %v3994 = vrot.slane %v3944, 7
        %v3995 = vrot.slane %v3994, 2
        %v3996 = vrot.slane %v3952, 7
        %v3997 = vrot.slane %v3996, 2
        %v3998 = vrot.slane %v3951, 7
        %v3999 = vrot.slane %v3998, 2
        %v4000 = vrot.slane %v3953, 7
        %v4001 = vrot.slane %v4000, 2
        %v4018 = vmax.f32 %v3893, %v3971
        %v4019 = vmax.f32 %v3901, %v3973
        %v4020 = vmax.f32 %v3900, %v3975
        %v4021 = vmax.f32 %v3902, %v3977
        %v4022 = vmax.f32 %v3910, %v3979
        %v4023 = vmax.f32 %v3918, %v3981
        %v4024 = vmax.f32 %v3917, %v3983
        %v4025 = vmax.f32 %v3919, %v3985
        %v4026 = vmax.f32 %v3927, %v3987
        %v4027 = vmax.f32 %v3935, %v3989
        %v4028 = vmax.f32 %v3934, %v3991
        %v4029 = vmax.f32 %v3936, %v3993
        %v4030 = vmax.f32 %v3944, %v3995
        %v4031 = vmax.f32 %v3952, %v3997
        %v4032 = vmax.f32 %v3951, %v3999
        %v4033 = vmax.f32 %v3953, %v4001
        %v4034 = vmax.f32 %v2188, %v2189
        %v4035 = vmax.f32 %v2190, %v2191
        %v4036 = vmax.f32 %v2192, %v2193
        %v4037 = vmax.f32 %v2194, %v2195
        %v4042 = vcombine.high %v4034, %v4034
        %v4044 = vunpack.c.l.s4 1983009808
        %v4045 = vunpack.c.0.s8 %v4044
        %v4046 = vlaneseq
        %v4047 = vshrl.u32 %v4046, 7
        %v4048 = vsub.s32 %v4045, %v4047
        %v4049 = vrot.slane %v4034, %v4048
        %v4051 = vunpack.c.l.s4 1983009808
        %v4052 = vunpack.c.0.s8 %v4051
        %v4053 = vlaneseq
        %v4054 = vshrl.u32 %v4053, 7
        %v4055 = vsub.s32 %v4052, %v4054
        %v4056 = vrot.slane %v4042, %v4055
        %v4057 = vcombine.high %v4049, %v4049
        %v4058 = vcombine.high %v4056, %v4056
        %v4059 = vcombine.high %v4035, %v4035
        %v4061 = vunpack.c.l.s4 1983009808
        %v4062 = vunpack.c.0.s8 %v4061
        %v4063 = vlaneseq
        %v4064 = vshrl.u32 %v4063, 7
        %v4065 = vsub.s32 %v4062, %v4064
        %v4066 = vrot.slane %v4035, %v4065
        %v4068 = vunpack.c.l.s4 1983009808
        %v4069 = vunpack.c.0.s8 %v4068
        %v4070 = vlaneseq
        %v4071 = vshrl.u32 %v4070, 7
        %v4072 = vsub.s32 %v4069, %v4071
        %v4073 = vrot.slane %v4059, %v4072
        %v4074 = vcombine.high %v4066, %v4066
        %v4075 = vcombine.high %v4073, %v4073
        %v4076 = vcombine.high %v4036, %v4036
        %v4078 = vunpack.c.l.s4 1983009808
        %v4079 = vunpack.c.0.s8 %v4078
        %v4080 = vlaneseq
        %v4081 = vshrl.u32 %v4080, 7
        %v4082 = vsub.s32 %v4079, %v4081
        %v4083 = vrot.slane %v4036, %v4082
        %v4085 = vunpack.c.l.s4 1983009808
        %v4086 = vunpack.c.0.s8 %v4085
        %v4087 = vlaneseq
        %v4088 = vshrl.u32 %v4087, 7
        %v4089 = vsub.s32 %v4086, %v4088
        %v4090 = vrot.slane %v4076, %v4089
        %v4091 = vcombine.high %v4083, %v4083
        %v4092 = vcombine.high %v4090, %v4090
        %v4093 = vcombine.high %v4037, %v4037
        %v4095 = vunpack.c.l.s4 1983009808
        %v4096 = vunpack.c.0.s8 %v4095
        %v4097 = vlaneseq
        %v4098 = vshrl.u32 %v4097, 7
        %v4099 = vsub.s32 %v4096, %v4098
        %v4100 = vrot.slane %v4037, %v4099
        %v4102 = vunpack.c.l.s4 1983009808
        %v4103 = vunpack.c.0.s8 %v4102
        %v4104 = vlaneseq
        %v4105 = vshrl.u32 %v4104, 7
        %v4106 = vsub.s32 %v4103, %v4105
        %v4107 = vrot.slane %v4093, %v4106
        %v4108 = vcombine.high %v4100, %v4100
        %v4109 = vcombine.high %v4107, %v4107
        %v4126 = vrot.slane %v4049, 7
        %v4127 = vrot.slane %v4126, 2
        %v4128 = vrot.slane %v4057, 7
        %v4129 = vrot.slane %v4128, 2
        %v4130 = vrot.slane %v4056, 7
        %v4131 = vrot.slane %v4130, 2
        %v4132 = vrot.slane %v4058, 7
        %v4133 = vrot.slane %v4132, 2
        %v4134 = vrot.slane %v4066, 7
        %v4135 = vrot.slane %v4134, 2
        %v4136 = vrot.slane %v4074, 7
        %v4137 = vrot.slane %v4136, 2
        %v4138 = vrot.slane %v4073, 7
        %v4139 = vrot.slane %v4138, 2
        %v4140 = vrot.slane %v4075, 7
        %v4141 = vrot.slane %v4140, 2
        %v4142 = vrot.slane %v4083, 7
        %v4143 = vrot.slane %v4142, 2
        %v4144 = vrot.slane %v4091, 7
        %v4145 = vrot.slane %v4144, 2
        %v4146 = vrot.slane %v4090, 7
        %v4147 = vrot.slane %v4146, 2
        %v4148 = vrot.slane %v4092, 7
        %v4149 = vrot.slane %v4148, 2
        %v4150 = vrot.slane %v4100, 7
        %v4151 = vrot.slane %v4150, 2
        %v4152 = vrot.slane %v4108, 7
        %v4153 = vrot.slane %v4152, 2
        %v4154 = vrot.slane %v4107, 7
        %v4155 = vrot.slane %v4154, 2
        %v4156 = vrot.slane %v4109, 7
        %v4157 = vrot.slane %v4156, 2
        %v4174 = vmax.f32 %v4049, %v4127
        %v4175 = vmax.f32 %v4057, %v4129
        %v4176 = vmax.f32 %v4056, %v4131
        %v4177 = vmax.f32 %v4058, %v4133
        %v4178 = vmax.f32 %v4066, %v4135
        %v4179 = vmax.f32 %v4074, %v4137
        %v4180 = vmax.f32 %v4073, %v4139
        %v4181 = vmax.f32 %v4075, %v4141
        %v4182 = vmax.f32 %v4083, %v4143
        %v4183 = vmax.f32 %v4091, %v4145
        %v4184 = vmax.f32 %v4090, %v4147
        %v4185 = vmax.f32 %v4092, %v4149
        %v4186 = vmax.f32 %v4100, %v4151
        %v4187 = vmax.f32 %v4108, %v4153
        %v4188 = vmax.f32 %v4107, %v4155
        %v4189 = vmax.f32 %v4109, %v4157
        %v4190 = vadd.f32 %v4018, %v4174
        %v4191 = vadd.f32 %v4019, %v4175
        %v4192 = vadd.f32 %v4020, %v4176
        %v4193 = vadd.f32 %v4021, %v4177
        %v4194 = vadd.f32 %v4022, %v4178
        %v4195 = vadd.f32 %v4023, %v4179
        %v4196 = vadd.f32 %v4024, %v4180
        %v4197 = vadd.f32 %v4025, %v4181
        %v4198 = vadd.f32 %v4026, %v4182
        %v4199 = vadd.f32 %v4027, %v4183
        %v4200 = vadd.f32 %v4028, %v4184
        %v4201 = vadd.f32 %v4029, %v4185
        %v4202 = vadd.f32 %v4030, %v4186
        %v4203 = vadd.f32 %v4031, %v4187
        %v4204 = vadd.f32 %v4032, %v4188
        %v4205 = vadd.f32 %v4033, %v4189
        %v4206 = vpack.c.bf16 %v4190, %v4190
        %v4207 = vpack.c.bf16 %v4191, %v4191
        %v4208 = vpack.c.bf16 %v4192, %v4192
        %v4209 = vpack.c.bf16 %v4193, %v4193
        %v4210 = vpack.c.bf16 %v4194, %v4194
        %v4211 = vpack.c.bf16 %v4195, %v4195
        %v4212 = vpack.c.bf16 %v4196, %v4196
        %v4213 = vpack.c.bf16 %v4197, %v4197
        %v4214 = vpack.c.bf16 %v4198, %v4198
        %v4215 = vpack.c.bf16 %v4199, %v4199
        %v4216 = vpack.c.bf16 %v4200, %v4200
        %v4217 = vpack.c.bf16 %v4201, %v4201
        %v4218 = vpack.c.bf16 %v4202, %v4202
        %v4219 = vpack.c.bf16 %v4203, %v4203
        %v4220 = vpack.c.bf16 %v4204, %v4204
        %v4221 = vpack.c.bf16 %v4205, %v4205
        %4222 = vst [vmem:[#allocation4] sm:$0x7] 0
        %4223 = vst [vmem:[#allocation4 + $0x4] sm:$0x7] 0
        %4224 = vst [vmem:[#allocation4 + $0x8] sm:$0x7] 0
        %4225 = vst [vmem:[#allocation4 + $0xc] sm:$0x7] 0
        %4226 = vst [vmem:[#allocation4 + $0x10] sm:$0x7] 0
        %4227 = vst [vmem:[#allocation4 + $0x14] sm:$0x7] 0
        %v4244 = vunpack.c.l.b16 %v4206
        %v4245 = vunpack.c.l.b16 %v4207
        %v4246 = vunpack.c.l.b16 %v4208
        %v4247 = vunpack.c.l.b16 %v4209
        %v4248 = vunpack.c.l.b16 %v4210
        %v4249 = vunpack.c.l.b16 %v4211
        %v4250 = vunpack.c.l.b16 %v4212
        %v4251 = vunpack.c.l.b16 %v4213
        %v4252 = vunpack.c.l.b16 %v4214
        %v4253 = vunpack.c.l.b16 %v4215
        %v4254 = vunpack.c.l.b16 %v4216
        %v4255 = vunpack.c.l.b16 %v4217
        %v4256 = vunpack.c.l.b16 %v4218
        %v4257 = vunpack.c.l.b16 %v4219
        %v4258 = vunpack.c.l.b16 %v4220
        %v4259 = vunpack.c.l.b16 %v4221
        %v4260 = vpack.c.b16 %v4244, %v4244
        %v4261 = vpack.c.b16 %v4245, %v4245
        %v4262 = vpack.c.b16 %v4246, %v4246
        %v4263 = vpack.c.b16 %v4247, %v4247
        %v4264 = vpack.c.b16 %v4248, %v4248
        %v4265 = vpack.c.b16 %v4249, %v4249
        %v4266 = vpack.c.b16 %v4250, %v4250
        %v4267 = vpack.c.b16 %v4251, %v4251
        %v4268 = vpack.c.b16 %v4252, %v4252
        %v4269 = vpack.c.b16 %v4253, %v4253
        %v4270 = vpack.c.b16 %v4254, %v4254
        %v4271 = vpack.c.b16 %v4255, %v4255
        %v4272 = vpack.c.b16 %v4256, %v4256
        %v4273 = vpack.c.b16 %v4257, %v4257
        %v4274 = vpack.c.b16 %v4258, %v4258
        %v4275 = vpack.c.b16 %v4259, %v4259
        %v4276 = vunpack.c.l.b16 %v4260
        %v4277 = vunpack.c.l.b16 %v4261
        %v4278 = vunpack.c.l.b16 %v4262
        %v4279 = vunpack.c.l.b16 %v4263
        %v4280 = vunpack.c.l.b16 %v4264
        %v4281 = vunpack.c.l.b16 %v4265
        %v4282 = vunpack.c.l.b16 %v4266
        %v4283 = vunpack.c.l.b16 %v4267
        %v4284 = vunpack.c.l.b16 %v4268
        %v4285 = vunpack.c.l.b16 %v4269
        %v4286 = vunpack.c.l.b16 %v4270
        %v4287 = vunpack.c.l.b16 %v4271
        %v4288 = vunpack.c.l.b16 %v4272
        %v4289 = vunpack.c.l.b16 %v4273
        %v4290 = vunpack.c.l.b16 %v4274
        %v4291 = vunpack.c.l.b16 %v4275
        %v4292 = vrot.slane %v4276, 7
        %v4293 = vrot.slane %v4277, 6
        %vm4294 = vcmask 1042434
        %v4295 = vsel %vm4294, %v4293, %v4292
        %v4296 = vrot.slane %v4278, 5
        %vm4297 = vcmask 1043459
        %v4298 = vsel %vm4297, %v4296, %v4295
        %v4299 = vrot.slane %v4279, 4
        %vm4300 = vcmask 1044484
        %v4301 = vsel %vm4300, %v4299, %v4298
        %v4302 = vrot.slane %v4280, 7
        %v4303 = vrot.slane %v4281, 6
        %v4304 = vsel %vm4294, %v4303, %v4302
        %v4305 = vrot.slane %v4282, 5
        %v4306 = vsel %vm4297, %v4305, %v4304
        %v4307 = vrot.slane %v4283, 4
        %v4308 = vsel %vm4300, %v4307, %v4306
        %v4309 = vrot.slane %v4284, 7
        %v4310 = vrot.slane %v4285, 6
        %v4311 = vsel %vm4294, %v4310, %v4309
        %v4312 = vrot.slane %v4286, 5
        %v4313 = vsel %vm4297, %v4312, %v4311
        %v4314 = vrot.slane %v4287, 4
        %v4315 = vsel %vm4300, %v4314, %v4313
        %v4316 = vrot.slane %v4288, 7
        %v4317 = vrot.slane %v4289, 6
        %v4318 = vsel %vm4294, %v4317, %v4316
        %v4319 = vrot.slane %v4290, 5
        %v4320 = vsel %vm4297, %v4319, %v4318
        %v4321 = vrot.slane %v4291, 4
        %v4322 = vsel %vm4300, %v4321, %v4320
        %v4323 = vpack.c.b16 %v4301, %v4301
        %v4324 = vpack.c.b16 %v4308, %v4308
        %v4325 = vpack.c.b16 %v4315, %v4315
        %v4326 = vpack.c.b16 %v4322, %v4322
        %s4331 = scalar_lea.vmem [#allocation4], 4
        %vm4332 = vcmask 1042432
        %vm4333 = vsmask.f32 2306
        %vm4334 = vmand %vm4332, %vm4333
        %v4335 = vld [vmem:[%s4331] sm:$0x7]
        %v4336 = vsel %vm4334, %v4323, %v4335
        %4337 = vst [vmem:[%s4331] sm:$0x7] %v4336
        %v4338 = vld [vmem:[%s4331 + $0x4] sm:$0x7]
        %v4339 = vsel %vm4334, %v4324, %v4338
        %4340 = vst [vmem:[%s4331 + $0x4] sm:$0x7] %v4339
        %v4341 = vld [vmem:[%s4331 + $0x8] sm:$0x7]
        %v4342 = vsel %vm4334, %v4325, %v4341
        %4343 = vst [vmem:[%s4331 + $0x8] sm:$0x7] %v4342
        %v4344 = vld [vmem:[%s4331 + $0xc] sm:$0x7]
        %v4345 = vsel %vm4334, %v4326, %v4344
        %4346 = vst [vmem:[%s4331 + $0xc] sm:$0x7] %v4345
        %v4347 = vld [vmem:[#allocation4] sm:$0x3]
        %v4348 = vld [vmem:[#allocation4 + $0x4] sm:$0x3]
        %v4349 = vld [vmem:[#allocation4 + $0x8] sm:$0x3]
        %v4350 = vld [vmem:[#allocation4 + $0xc] sm:$0x3]
        %v4351 = vld [vmem:[#allocation4] sm:$0x7]
        %v4352 = vld [vmem:[#allocation4 + $0x4] sm:$0x7]
        %v4353 = vld [vmem:[#allocation4 + $0x8] sm:$0x7]
        %v4354 = vld [vmem:[#allocation4 + $0xc] sm:$0x7]
        %v4355 = vld [vmem:[#allocation4] sm:$0x6]
        %v4356 = vld [vmem:[#allocation4 + $0x4] sm:$0x6]
        %v4357 = vld [vmem:[#allocation4 + $0x8] sm:$0x6]
        %v4358 = vld [vmem:[#allocation4 + $0xc] sm:$0x6]
        %v4359 = vld [vmem:[%s4331] sm:$0x3]
        %v4360 = vld [vmem:[%s4331 + $0x4] sm:$0x3]
        %v4361 = vld [vmem:[%s4331 + $0x8] sm:$0x3]
        %v4362 = vld [vmem:[%s4331 + $0xc] sm:$0x3]
        %v4363 = vld [vmem:[%s4331] sm:$0x7]
        %v4364 = vld [vmem:[%s4331 + $0x4] sm:$0x7]
        %v4365 = vld [vmem:[%s4331 + $0x8] sm:$0x7]
        %v4366 = vld [vmem:[%s4331 + $0xc] sm:$0x7]
        %v4367 = vld [vmem:[%s4331] sm:$0x6]
        %v4368 = vld [vmem:[%s4331 + $0x4] sm:$0x6]
        %v4369 = vld [vmem:[%s4331 + $0x8] sm:$0x6]
        %v4370 = vld [vmem:[%s4331 + $0xc] sm:$0x6]
        %s4371 = scalar_lea.vmem [#allocation4], 8
        %v4372 = vld [vmem:[%s4371] sm:$0x3]
        %v4373 = vld [vmem:[%s4371 + $0x4] sm:$0x3]
        %v4374 = vld [vmem:[%s4371 + $0x8] sm:$0x3]
        %v4375 = vld [vmem:[%s4371 + $0xc] sm:$0x3]
        %v4376 = vld [vmem:[%s4371] sm:$0x7]
        %v4377 = vld [vmem:[%s4371 + $0x4] sm:$0x7]
        %v4378 = vld [vmem:[%s4371 + $0x8] sm:$0x7]
        %v4379 = vld [vmem:[%s4371 + $0xc] sm:$0x7]
        %v4380 = vld [vmem:[%s4371] sm:$0x6]
        %v4381 = vld [vmem:[%s4371 + $0x4] sm:$0x6]
        %v4382 = vld [vmem:[%s4371 + $0x8] sm:$0x6]
        %v4383 = vld [vmem:[%s4371 + $0xc] sm:$0x6]
        %v4388 = vunpack.c.l.b16 %v4351
        %v4389 = vunpack.c.l.b16 %v4352
        %v4390 = vunpack.c.l.b16 %v4353
        %v4391 = vunpack.c.l.b16 %v4354
        %v4392 = vpack.c.b16 %v4388, %v4388
        %v4393 = vpack.c.b16 %v4389, %v4389
        %v4394 = vpack.c.b16 %v4390, %v4390
        %v4395 = vpack.c.b16 %v4391, %v4391
        %v4397 = vshrl.u32 %v4392, 16
        %v4399 = vshll.u32 %v4392, 16
        %v4401 = vrot.slane %v4399, 1
        %v4402 = vor.u32 %v4397, %v4401
        %v4404 = vshrl.u32 %v4393, 16
        %v4406 = vshll.u32 %v4393, 16
        %v4408 = vrot.slane %v4406, 1
        %v4409 = vor.u32 %v4404, %v4408
        %v4411 = vshrl.u32 %v4394, 16
        %v4413 = vshll.u32 %v4394, 16
        %v4415 = vrot.slane %v4413, 1
        %v4416 = vor.u32 %v4411, %v4415
        %v4418 = vshrl.u32 %v4395, 16
        %v4420 = vshll.u32 %v4395, 16
        %v4422 = vrot.slane %v4420, 1
        %v4423 = vor.u32 %v4418, %v4422
        %v4428 = vunpack.c.l.b16 %v4355
        %v4429 = vunpack.c.l.b16 %v4356
        %v4430 = vunpack.c.l.b16 %v4357
        %v4431 = vunpack.c.l.b16 %v4358
        %v4432 = vpack.c.b16 %v4428, %v4428
        %v4433 = vpack.c.b16 %v4429, %v4429
        %v4434 = vpack.c.b16 %v4430, %v4430
        %v4435 = vpack.c.b16 %v4431, %v4431
        %v4436 = vrot.slane %v4432, 1
        %v4437 = vrot.slane %v4433, 1
        %v4438 = vrot.slane %v4434, 1
        %v4439 = vrot.slane %v4435, 1
        %v4444 = vunpack.c.l.b16 %v4363
        %v4445 = vunpack.c.l.b16 %v4364
        %v4446 = vunpack.c.l.b16 %v4365
        %v4447 = vunpack.c.l.b16 %v4366
        %v4448 = vpack.c.b16 %v4444, %v4444
        %v4449 = vpack.c.b16 %v4445, %v4445
        %v4450 = vpack.c.b16 %v4446, %v4446
        %v4451 = vpack.c.b16 %v4447, %v4447
        %v4453 = vshrl.u32 %v4448, 16
        %v4455 = vshll.u32 %v4448, 16
        %v4457 = vrot.slane %v4455, 1
        %v4458 = vor.u32 %v4453, %v4457
        %v4460 = vshrl.u32 %v4449, 16
        %v4462 = vshll.u32 %v4449, 16
        %v4464 = vrot.slane %v4462, 1
        %v4465 = vor.u32 %v4460, %v4464
        %v4467 = vshrl.u32 %v4450, 16
        %v4469 = vshll.u32 %v4450, 16
        %v4471 = vrot.slane %v4469, 1
        %v4472 = vor.u32 %v4467, %v4471
        %v4474 = vshrl.u32 %v4451, 16
        %v4476 = vshll.u32 %v4451, 16
        %v4478 = vrot.slane %v4476, 1
        %v4479 = vor.u32 %v4474, %v4478
        %v4484 = vunpack.c.l.b16 %v4367
        %v4485 = vunpack.c.l.b16 %v4368
        %v4486 = vunpack.c.l.b16 %v4369
        %v4487 = vunpack.c.l.b16 %v4370
        %v4488 = vpack.c.b16 %v4484, %v4484
        %v4489 = vpack.c.b16 %v4485, %v4485
        %v4490 = vpack.c.b16 %v4486, %v4486
        %v4491 = vpack.c.b16 %v4487, %v4487
        %v4492 = vrot.slane %v4488, 1
        %v4493 = vrot.slane %v4489, 1
        %v4494 = vrot.slane %v4490, 1
        %v4495 = vrot.slane %v4491, 1
        %v4500 = vunpack.c.l.b16 %v4376
        %v4501 = vunpack.c.l.b16 %v4377
        %v4502 = vunpack.c.l.b16 %v4378
        %v4503 = vunpack.c.l.b16 %v4379
        %v4504 = vpack.c.b16 %v4500, %v4500
        %v4505 = vpack.c.b16 %v4501, %v4501
        %v4506 = vpack.c.b16 %v4502, %v4502
        %v4507 = vpack.c.b16 %v4503, %v4503
        %v4509 = vshrl.u32 %v4504, 16
        %v4511 = vshll.u32 %v4504, 16
        %v4513 = vrot.slane %v4511, 1
        %v4514 = vor.u32 %v4509, %v4513
        %v4516 = vshrl.u32 %v4505, 16
        %v4518 = vshll.u32 %v4505, 16
        %v4520 = vrot.slane %v4518, 1
        %v4521 = vor.u32 %v4516, %v4520
        %v4523 = vshrl.u32 %v4506, 16
        %v4525 = vshll.u32 %v4506, 16
        %v4527 = vrot.slane %v4525, 1
        %v4528 = vor.u32 %v4523, %v4527
        %v4530 = vshrl.u32 %v4507, 16
        %v4532 = vshll.u32 %v4507, 16
        %v4534 = vrot.slane %v4532, 1
        %v4535 = vor.u32 %v4530, %v4534
        %v4540 = vunpack.c.l.b16 %v4380
        %v4541 = vunpack.c.l.b16 %v4381
        %v4542 = vunpack.c.l.b16 %v4382
        %v4543 = vunpack.c.l.b16 %v4383
        %v4544 = vpack.c.b16 %v4540, %v4540
        %v4545 = vpack.c.b16 %v4541, %v4541
        %v4546 = vpack.c.b16 %v4542, %v4542
        %v4547 = vpack.c.b16 %v4543, %v4543
        %v4548 = vrot.slane %v4544, 1
        %v4549 = vrot.slane %v4545, 1
        %v4550 = vrot.slane %v4546, 1
        %v4551 = vrot.slane %v4547, 1
        %v4564 = vcombine.low %v4347, %v4402
        %v4565 = vcombine.low %v4436, %v4359
        %v4567 = vunpack.c.l.s4 1983009808
        %v4568 = vunpack.c.0.s8 %v4567
        %v4569 = vlaneseq
        %v4570 = vshrl.u32 %v4569, 7
        %v4571 = vsub.s32 %v4568, %v4570
        %v4572 = vrot.slane %v4564, %v4571
        %v4574 = vunpack.c.l.s4 1983009808
        %v4575 = vunpack.c.0.s8 %v4574
        %v4576 = vlaneseq
        %v4577 = vshrl.u32 %v4576, 7
        %v4578 = vsub.s32 %v4575, %v4577
        %v4579 = vrot.slane %v4565, %v4578
        %v4580 = vcombine.low %v4572, %v4579
        %v4581 = vcombine.low %v4458, %v4492
        %v4582 = vcombine.low %v4372, %v4514
        %v4584 = vunpack.c.l.s4 1983009808
        %v4585 = vunpack.c.0.s8 %v4584
        %v4586 = vlaneseq
        %v4587 = vshrl.u32 %v4586, 7
        %v4588 = vsub.s32 %v4585, %v4587
        %v4589 = vrot.slane %v4581, %v4588
        %v4591 = vunpack.c.l.s4 1983009808
        %v4592 = vunpack.c.0.s8 %v4591
        %v4593 = vlaneseq
        %v4594 = vshrl.u32 %v4593, 7
        %v4595 = vsub.s32 %v4592, %v4594
        %v4596 = vrot.slane %v4582, %v4595
        %v4597 = vcombine.low %v4589, %v4596
        %v4599 = vunpack.c.l.s4 1983009808
        %v4600 = vunpack.c.0.s8 %v4599
        %v4601 = vlaneseq
        %v4602 = vshrl.u32 %v4601, 7
        %v4603 = vsub.s32 %v4600, %v4602
        %v4604 = vrot.slane %v4548, %v4603
        %v4605 = vcombine.low %v4348, %v4409
        %v4606 = vcombine.low %v4437, %v4360
        %v4608 = vunpack.c.l.s4 1983009808
        %v4609 = vunpack.c.0.s8 %v4608
        %v4610 = vlaneseq
        %v4611 = vshrl.u32 %v4610, 7
        %v4612 = vsub.s32 %v4609, %v4611
        %v4613 = vrot.slane %v4605, %v4612
        %v4615 = vunpack.c.l.s4 1983009808
        %v4616 = vunpack.c.0.s8 %v4615
        %v4617 = vlaneseq
        %v4618 = vshrl.u32 %v4617, 7
        %v4619 = vsub.s32 %v4616, %v4618
        %v4620 = vrot.slane %v4606, %v4619
        %v4621 = vcombine.low %v4613, %v4620
        %v4622 = vcombine.low %v4465, %v4493
        %v4623 = vcombine.low %v4373, %v4521
        %v4625 = vunpack.c.l.s4 1983009808
        %v4626 = vunpack.c.0.s8 %v4625
        %v4627 = vlaneseq
        %v4628 = vshrl.u32 %v4627, 7
        %v4629 = vsub.s32 %v4626, %v4628
        %v4630 = vrot.slane %v4622, %v4629
        %v4632 = vunpack.c.l.s4 1983009808
        %v4633 = vunpack.c.0.s8 %v4632
        %v4634 = vlaneseq
        %v4635 = vshrl.u32 %v4634, 7
        %v4636 = vsub.s32 %v4633, %v4635
        %v4637 = vrot.slane %v4623, %v4636
        %v4638 = vcombine.low %v4630, %v4637
        %v4640 = vunpack.c.l.s4 1983009808
        %v4641 = vunpack.c.0.s8 %v4640
        %v4642 = vlaneseq
        %v4643 = vshrl.u32 %v4642, 7
        %v4644 = vsub.s32 %v4641, %v4643
        %v4645 = vrot.slane %v4549, %v4644
        %v4646 = vcombine.low %v4349, %v4416
        %v4647 = vcombine.low %v4438, %v4361
        %v4649 = vunpack.c.l.s4 1983009808
        %v4650 = vunpack.c.0.s8 %v4649
        %v4651 = vlaneseq
        %v4652 = vshrl.u32 %v4651, 7
        %v4653 = vsub.s32 %v4650, %v4652
        %v4654 = vrot.slane %v4646, %v4653
        %v4656 = vunpack.c.l.s4 1983009808
        %v4657 = vunpack.c.0.s8 %v4656
        %v4658 = vlaneseq
        %v4659 = vshrl.u32 %v4658, 7
        %v4660 = vsub.s32 %v4657, %v4659
        %v4661 = vrot.slane %v4647, %v4660
        %v4662 = vcombine.low %v4654, %v4661
        %v4663 = vcombine.low %v4472, %v4494
        %v4664 = vcombine.low %v4374, %v4528
        %v4666 = vunpack.c.l.s4 1983009808
        %v4667 = vunpack.c.0.s8 %v4666
        %v4668 = vlaneseq
        %v4669 = vshrl.u32 %v4668, 7
        %v4670 = vsub.s32 %v4667, %v4669
        %v4671 = vrot.slane %v4663, %v4670
        %v4673 = vunpack.c.l.s4 1983009808
        %v4674 = vunpack.c.0.s8 %v4673
        %v4675 = vlaneseq
        %v4676 = vshrl.u32 %v4675, 7
        %v4677 = vsub.s32 %v4674, %v4676
        %v4678 = vrot.slane %v4664, %v4677
        %v4679 = vcombine.low %v4671, %v4678
        %v4681 = vunpack.c.l.s4 1983009808
        %v4682 = vunpack.c.0.s8 %v4681
        %v4683 = vlaneseq
        %v4684 = vshrl.u32 %v4683, 7
        %v4685 = vsub.s32 %v4682, %v4684
        %v4686 = vrot.slane %v4550, %v4685
        %v4687 = vcombine.low %v4350, %v4423
        %v4688 = vcombine.low %v4439, %v4362
        %v4690 = vunpack.c.l.s4 1983009808
        %v4691 = vunpack.c.0.s8 %v4690
        %v4692 = vlaneseq
        %v4693 = vshrl.u32 %v4692, 7
        %v4694 = vsub.s32 %v4691, %v4693
        %v4695 = vrot.slane %v4687, %v4694
        %v4697 = vunpack.c.l.s4 1983009808
        %v4698 = vunpack.c.0.s8 %v4697
        %v4699 = vlaneseq
        %v4700 = vshrl.u32 %v4699, 7
        %v4701 = vsub.s32 %v4698, %v4700
        %v4702 = vrot.slane %v4688, %v4701
        %v4703 = vcombine.low %v4695, %v4702
        %v4704 = vcombine.low %v4479, %v4495
        %v4705 = vcombine.low %v4375, %v4535
        %v4707 = vunpack.c.l.s4 1983009808
        %v4708 = vunpack.c.0.s8 %v4707
        %v4709 = vlaneseq
        %v4710 = vshrl.u32 %v4709, 7
        %v4711 = vsub.s32 %v4708, %v4710
        %v4712 = vrot.slane %v4704, %v4711
        %v4714 = vunpack.c.l.s4 1983009808
        %v4715 = vunpack.c.0.s8 %v4714
        %v4716 = vlaneseq
        %v4717 = vshrl.u32 %v4716, 7
        %v4718 = vsub.s32 %v4715, %v4717
        %v4719 = vrot.slane %v4705, %v4718
        %v4720 = vcombine.low %v4712, %v4719
        %v4722 = vunpack.c.l.s4 1983009808
        %v4723 = vunpack.c.0.s8 %v4722
        %v4724 = vlaneseq
        %v4725 = vshrl.u32 %v4724, 7
        %v4726 = vsub.s32 %v4723, %v4725
        %v4727 = vrot.slane %v4551, %v4726
        %v4728 = vld [vmem:[%s7] sm:$0xf]
        %v4729 = vld [vmem:[%s7 + $0x4] sm:$0xf]
        %v4730 = vld [vmem:[%s7 + $0x8] sm:$0xf]
        %v4731 = vld [vmem:[%s7 + $0xc] sm:$0xf]
        %v4732 = vld [vmem:[%s7 + $0x10] sm:$0xf]
        %v4733 = vld [vmem:[%s7 + $0x14] sm:$0xf]
        %v4734 = vld [vmem:[%s7 + $0x18] sm:$0xf]
        %v4735 = vld [vmem:[%s7 + $0x1c] sm:$0xf]
        %v4736 = vld [vmem:[%s7 + $0x20] sm:$0xf]
        %v4737 = vld [vmem:[%s7 + $0x24] sm:$0xf]
        %v4738 = vld [vmem:[%s7 + $0x28] sm:$0xf]
        %v4739 = vld [vmem:[%s7 + $0x2c] sm:$0xf]
        %v4740 = vld [vmem:[%s7 + $0x30] sm:$0xf]
        %v4741 = vld [vmem:[%s7 + $0x34] sm:$0xf]
        %v4742 = vld [vmem:[%s7 + $0x38] sm:$0xf]
        %v4743 = vld [vmem:[%s7 + $0x3c] sm:$0xf]
        %v4744 = vld [vmem:[%s7 + $0x40] sm:$0xf]
        %v4745 = vld [vmem:[%s7 + $0x44] sm:$0xf]
        %v4746 = vld [vmem:[%s7 + $0x48] sm:$0xf]
        %v4747 = vld [vmem:[%s7 + $0x4c] sm:$0xf]
        %v4748 = vld [vmem:[%s7 + $0x50] sm:$0xf]
        %v4749 = vld [vmem:[%s7 + $0x54] sm:$0xf]
        %v4750 = vld [vmem:[%s7 + $0x58] sm:$0xf]
        %v4751 = vld [vmem:[%s7 + $0x5c] sm:$0xf]
        %v4752 = vld [vmem:[%s7 + $0x60] sm:$0xf]
        %v4753 = vld [vmem:[%s7 + $0x64] sm:$0xf]
        %v4754 = vld [vmem:[%s7 + $0x68] sm:$0xf]
        %v4755 = vld [vmem:[%s7 + $0x6c] sm:$0xf]
        %v4756 = vld [vmem:[%s7 + $0x70] sm:$0xf]
        %v4757 = vld [vmem:[%s7 + $0x74] sm:$0xf]
        %v4758 = vld [vmem:[%s7 + $0x78] sm:$0xf]
        %v4759 = vld [vmem:[%s7 + $0x7c] sm:$0xf]
        %v4760 = vld [vmem:[%s7 + $0x80] sm:$0xf]
        %v4761 = vld [vmem:[%s7 + $0x84] sm:$0xf]
        %v4762 = vld [vmem:[%s7 + $0x88] sm:$0xf]
        %v4763 = vld [vmem:[%s7 + $0x8c] sm:$0xf]
        %v4764 = vld [vmem:[%s7 + $0x90] sm:$0xf]
        %v4765 = vld [vmem:[%s7 + $0x94] sm:$0xf]
        %v4766 = vld [vmem:[%s7 + $0x98] sm:$0xf]
        %v4767 = vld [vmem:[%s7 + $0x9c] sm:$0xf]
        %v4768 = vld [vmem:[%s7 + $0xa0] sm:$0xf]
        %v4769 = vld [vmem:[%s7 + $0xa4] sm:$0xf]
        %v4770 = vld [vmem:[%s7 + $0xa8] sm:$0xf]
        %v4771 = vld [vmem:[%s7 + $0xac] sm:$0xf]
        %v4772 = vld [vmem:[%s7 + $0xb0] sm:$0xf]
        %v4773 = vld [vmem:[%s7 + $0xb4] sm:$0xf]
        %v4774 = vld [vmem:[%s7 + $0xb8] sm:$0xf]
        %v4775 = vld [vmem:[%s7 + $0xbc] sm:$0xf]
        %v4776 = vld [vmem:[%s7 + $0xc0] sm:$0xf]
        %v4777 = vld [vmem:[%s7 + $0xc4] sm:$0xf]
        %v4778 = vld [vmem:[%s7 + $0xc8] sm:$0xf]
        %v4779 = vld [vmem:[%s7 + $0xcc] sm:$0xf]
        %v4780 = vld [vmem:[%s7 + $0xd0] sm:$0xf]
        %v4781 = vld [vmem:[%s7 + $0xd4] sm:$0xf]
        %v4782 = vld [vmem:[%s7 + $0xd8] sm:$0xf]
        %v4783 = vld [vmem:[%s7 + $0xdc] sm:$0xf]
        %v4784 = vld [vmem:[%s7 + $0xe0] sm:$0xf]
        %v4785 = vld [vmem:[%s7 + $0xe4] sm:$0xf]
        %v4786 = vld [vmem:[%s7 + $0xe8] sm:$0xf]
        %v4787 = vld [vmem:[%s7 + $0xec] sm:$0xf]
        %v4788 = vld [vmem:[%s7 + $0xf0] sm:$0xf]
        %v4789 = vld [vmem:[%s7 + $0xf4] sm:$0xf]
        %v4790 = vld [vmem:[%s7 + $0xf8] sm:$0xf]
        %v4791 = vld [vmem:[%s7 + $0xfc] sm:$0xf]
        %v4792 = vld [vmem:[%s7 + $0x100] sm:$0xf]
        %v4793 = vld [vmem:[%s7 + $0x104] sm:$0xf]
        %v4794 = vld [vmem:[%s7 + $0x108] sm:$0xf]
        %v4795 = vld [vmem:[%s7 + $0x10c] sm:$0xf]
        %v4796 = vld [vmem:[%s7 + $0x110] sm:$0xf]
        %v4797 = vld [vmem:[%s7 + $0x114] sm:$0xf]
        %v4798 = vld [vmem:[%s7 + $0x118] sm:$0xf]
        %v4799 = vld [vmem:[%s7 + $0x11c] sm:$0xf]
        %v4800 = vld [vmem:[%s7 + $0x120] sm:$0xf]
        %v4801 = vld [vmem:[%s7 + $0x124] sm:$0xf]
        %v4802 = vld [vmem:[%s7 + $0x128] sm:$0xf]
        %v4803 = vld [vmem:[%s7 + $0x12c] sm:$0xf]
        %v4804 = vld [vmem:[%s7 + $0x130] sm:$0xf]
        %v4805 = vld [vmem:[%s7 + $0x134] sm:$0xf]
        %v4806 = vld [vmem:[%s7 + $0x138] sm:$0xf]
        %v4807 = vld [vmem:[%s7 + $0x13c] sm:$0xf]
        %v4808 = vld [vmem:[%s7 + $0x140] sm:$0xf]
        %v4809 = vld [vmem:[%s7 + $0x144] sm:$0xf]
        %v4810 = vld [vmem:[%s7 + $0x148] sm:$0xf]
        %v4811 = vld [vmem:[%s7 + $0x14c] sm:$0xf]
        %v4812 = vld [vmem:[%s7 + $0x150] sm:$0xf]
        %v4813 = vld [vmem:[%s7 + $0x154] sm:$0xf]
        %v4814 = vld [vmem:[%s7 + $0x158] sm:$0xf]
        %v4815 = vld [vmem:[%s7 + $0x15c] sm:$0xf]
        %v4816 = vld [vmem:[%s7 + $0x160] sm:$0xf]
        %v4817 = vld [vmem:[%s7 + $0x164] sm:$0xf]
        %v4818 = vld [vmem:[%s7 + $0x168] sm:$0xf]
        %v4819 = vld [vmem:[%s7 + $0x16c] sm:$0xf]
        %v4820 = vld [vmem:[%s7 + $0x170] sm:$0xf]
        %v4821 = vld [vmem:[%s7 + $0x174] sm:$0xf]
        %v4822 = vld [vmem:[%s7 + $0x178] sm:$0xf]
        %v4823 = vld [vmem:[%s7 + $0x17c] sm:$0xf]
        %v4824 = vld [vmem:[%s7 + $0x180] sm:$0xf]
        %v4825 = vld [vmem:[%s7 + $0x184] sm:$0xf]
        %v4826 = vld [vmem:[%s7 + $0x188] sm:$0xf]
        %v4827 = vld [vmem:[%s7 + $0x18c] sm:$0xf]
        %v4828 = vld [vmem:[%s7 + $0x190] sm:$0xf]
        %v4829 = vld [vmem:[%s7 + $0x194] sm:$0xf]
        %v4830 = vld [vmem:[%s7 + $0x198] sm:$0xf]
        %v4831 = vld [vmem:[%s7 + $0x19c] sm:$0xf]
        %v4832 = vld [vmem:[%s7 + $0x1a0] sm:$0xf]
        %v4833 = vld [vmem:[%s7 + $0x1a4] sm:$0xf]
        %v4834 = vld [vmem:[%s7 + $0x1a8] sm:$0xf]
        %v4835 = vld [vmem:[%s7 + $0x1ac] sm:$0xf]
        %v4836 = vld [vmem:[%s7 + $0x1b0] sm:$0xf]
        %v4837 = vld [vmem:[%s7 + $0x1b4] sm:$0xf]
        %v4838 = vld [vmem:[%s7 + $0x1b8] sm:$0xf]
        %v4839 = vld [vmem:[%s7 + $0x1bc] sm:$0xf]
        %v4840 = vld [vmem:[%s7 + $0x1c0] sm:$0xf]
        %v4841 = vld [vmem:[%s7 + $0x1c4] sm:$0xf]
        %v4842 = vld [vmem:[%s7 + $0x1c8] sm:$0xf]
        %v4843 = vld [vmem:[%s7 + $0x1cc] sm:$0xf]
        %v4844 = vld [vmem:[%s7 + $0x1d0] sm:$0xf]
        %v4845 = vld [vmem:[%s7 + $0x1d4] sm:$0xf]
        %v4846 = vld [vmem:[%s7 + $0x1d8] sm:$0xf]
        %v4847 = vld [vmem:[%s7 + $0x1dc] sm:$0xf]
        %v4848 = vld [vmem:[%s7 + $0x1e0] sm:$0xf]
        %v4849 = vld [vmem:[%s7 + $0x1e4] sm:$0xf]
        %v4850 = vld [vmem:[%s7 + $0x1e8] sm:$0xf]
        %v4851 = vld [vmem:[%s7 + $0x1ec] sm:$0xf]
        %v4852 = vld [vmem:[%s7 + $0x1f0] sm:$0xf]
        %v4853 = vld [vmem:[%s7 + $0x1f4] sm:$0xf]
        %v4854 = vld [vmem:[%s7 + $0x1f8] sm:$0xf]
        %v4855 = vld [vmem:[%s7 + $0x1fc] sm:$0xf]
        %v4856 = vld [vmem:[%s7 + $0x200] sm:$0xf]
        %v4857 = vld [vmem:[%s7 + $0x204] sm:$0xf]
        %v4858 = vld [vmem:[%s7 + $0x208] sm:$0xf]
        %v4859 = vld [vmem:[%s7 + $0x20c] sm:$0xf]
        %v4860 = vld [vmem:[%s7 + $0x210] sm:$0xf]
        %v4861 = vld [vmem:[%s7 + $0x214] sm:$0xf]
        %v4862 = vld [vmem:[%s7 + $0x218] sm:$0xf]
        %v4863 = vld [vmem:[%s7 + $0x21c] sm:$0xf]
        %v4864 = vld [vmem:[%s7 + $0x220] sm:$0xf]
        %v4865 = vld [vmem:[%s7 + $0x224] sm:$0xf]
        %v4866 = vld [vmem:[%s7 + $0x228] sm:$0xf]
        %v4867 = vld [vmem:[%s7 + $0x22c] sm:$0xf]
        %v4868 = vld [vmem:[%s7 + $0x230] sm:$0xf]
        %v4869 = vld [vmem:[%s7 + $0x234] sm:$0xf]
        %v4870 = vld [vmem:[%s7 + $0x238] sm:$0xf]
        %v4871 = vld [vmem:[%s7 + $0x23c] sm:$0xf]
        %v4872 = vld [vmem:[%s8] sm:$0x1]
        %v4874 = vlaneseq
        %v4875 = vshrl.u32 %v4874, 7
        %v4876 = vsub.s32 0, %v4875
        %v4877 = vrot.slane %v4872, %v4876
        %v4879 = vcombine.low %v4580, %v4621
        %v4880 = vcombine.high %v4580, %v4621
        %v4881 = vcombine.low %v4662, %v4703
        %v4882 = vcombine.high %v4662, %v4703
        %v4884 = vunpack.c.l.s4 1983009808
        %v4885 = vunpack.c.0.s8 %v4884
        %v4886 = vlaneseq
        %v4887 = vshrl.u32 %v4886, 7
        %v4888 = vsub.s32 %v4885, %v4887
        %v4889 = vrot.slane %v4879, %v4888
        %v4891 = vunpack.c.l.s4 1983009808
        %v4892 = vunpack.c.0.s8 %v4891
        %v4893 = vlaneseq
        %v4894 = vshrl.u32 %v4893, 7
        %v4895 = vsub.s32 %v4892, %v4894
        %v4896 = vrot.slane %v4880, %v4895
        %v4898 = vunpack.c.l.s4 1983009808
        %v4899 = vunpack.c.0.s8 %v4898
        %v4900 = vlaneseq
        %v4901 = vshrl.u32 %v4900, 7
        %v4902 = vsub.s32 %v4899, %v4901
        %v4903 = vrot.slane %v4881, %v4902
        %v4905 = vunpack.c.l.s4 1983009808
        %v4906 = vunpack.c.0.s8 %v4905
        %v4907 = vlaneseq
        %v4908 = vshrl.u32 %v4907, 7
        %v4909 = vsub.s32 %v4906, %v4908
        %v4910 = vrot.slane %v4882, %v4909
        %v4911 = vcombine.low %v4889, %v4903
        %v4912 = vcombine.high %v4889, %v4903
        %v4913 = vcombine.low %v4896, %v4910
        %v4914 = vcombine.high %v4896, %v4910
        %v4915 = vcombine.low %v4597, %v4638
        %v4916 = vcombine.high %v4597, %v4638
        %v4917 = vcombine.low %v4679, %v4720
        %v4918 = vcombine.high %v4679, %v4720
        %v4920 = vunpack.c.l.s4 1983009808
        %v4921 = vunpack.c.0.s8 %v4920
        %v4922 = vlaneseq
        %v4923 = vshrl.u32 %v4922, 7
        %v4924 = vsub.s32 %v4921, %v4923
        %v4925 = vrot.slane %v4915, %v4924
        %v4927 = vunpack.c.l.s4 1983009808
        %v4928 = vunpack.c.0.s8 %v4927
        %v4929 = vlaneseq
        %v4930 = vshrl.u32 %v4929, 7
        %v4931 = vsub.s32 %v4928, %v4930
        %v4932 = vrot.slane %v4916, %v4931
        %v4934 = vunpack.c.l.s4 1983009808
        %v4935 = vunpack.c.0.s8 %v4934
        %v4936 = vlaneseq
        %v4937 = vshrl.u32 %v4936, 7
        %v4938 = vsub.s32 %v4935, %v4937
        %v4939 = vrot.slane %v4917, %v4938
        %v4941 = vunpack.c.l.s4 1983009808
        %v4942 = vunpack.c.0.s8 %v4941
        %v4943 = vlaneseq
        %v4944 = vshrl.u32 %v4943, 7
        %v4945 = vsub.s32 %v4942, %v4944
        %v4946 = vrot.slane %v4918, %v4945
        %v4947 = vcombine.low %v4925, %v4939
        %v4948 = vcombine.high %v4925, %v4939
        %v4949 = vcombine.low %v4932, %v4946
        %v4950 = vcombine.high %v4932, %v4946
        %v4951 = vcombine.low %v4604, %v4645
        %v4952 = vcombine.low %v4686, %v4727
        %v4954 = vunpack.c.l.s4 1983009808
        %v4955 = vunpack.c.0.s8 %v4954
        %v4956 = vlaneseq
        %v4957 = vshrl.u32 %v4956, 7
        %v4958 = vsub.s32 %v4955, %v4957
        %v4959 = vrot.slane %v4951, %v4958
        %v4961 = vunpack.c.l.s4 1983009808
        %v4962 = vunpack.c.0.s8 %v4961
        %v4963 = vlaneseq
        %v4964 = vshrl.u32 %v4963, 7
        %v4965 = vsub.s32 %v4962, %v4964
        %v4966 = vrot.slane %v4952, %v4965
        %v4967 = vcombine.low %v4959, %v4966
        %v5121 = vunpack.c.l.b16 %v4728
        %v5122 = vunpack.c.l.b16 %v4729
        %v5123 = vunpack.c.l.b16 %v4730
        %v5124 = vunpack.c.l.b16 %v4731
        %v5125 = vunpack.c.l.b16 %v4732
        %v5126 = vunpack.c.l.b16 %v4733
        %v5127 = vunpack.c.l.b16 %v4734
        %v5128 = vunpack.c.l.b16 %v4735
        %v5129 = vunpack.c.l.b16 %v4736
        %v5130 = vunpack.c.l.b16 %v4737
        %v5131 = vunpack.c.l.b16 %v4738
        %v5132 = vunpack.c.l.b16 %v4739
        %v5133 = vunpack.c.l.b16 %v4740
        %v5134 = vunpack.c.l.b16 %v4741
        %v5135 = vunpack.c.l.b16 %v4742
        %v5136 = vunpack.c.l.b16 %v4743
        %v5137 = vunpack.c.l.b16 %v4744
        %v5138 = vunpack.c.l.b16 %v4745
        %v5139 = vunpack.c.l.b16 %v4746
        %v5140 = vunpack.c.l.b16 %v4747
        %v5141 = vunpack.c.l.b16 %v4748
        %v5142 = vunpack.c.l.b16 %v4749
        %v5143 = vunpack.c.l.b16 %v4750
        %v5144 = vunpack.c.l.b16 %v4751
        %v5145 = vunpack.c.l.b16 %v4752
        %v5146 = vunpack.c.l.b16 %v4753
        %v5147 = vunpack.c.l.b16 %v4754
        %v5148 = vunpack.c.l.b16 %v4755
        %v5149 = vunpack.c.l.b16 %v4756
        %v5150 = vunpack.c.l.b16 %v4757
        %v5151 = vunpack.c.l.b16 %v4758
        %v5152 = vunpack.c.l.b16 %v4759
        %v5153 = vunpack.c.l.b16 %v4760
        %v5154 = vunpack.c.l.b16 %v4761
        %v5155 = vunpack.c.l.b16 %v4762
        %v5156 = vunpack.c.l.b16 %v4763
        %v5157 = vunpack.c.l.b16 %v4764
        %v5158 = vunpack.c.l.b16 %v4765
        %v5159 = vunpack.c.l.b16 %v4766
        %v5160 = vunpack.c.l.b16 %v4767
        %v5161 = vunpack.c.l.b16 %v4768
        %v5162 = vunpack.c.l.b16 %v4769
        %v5163 = vunpack.c.l.b16 %v4770
        %v5164 = vunpack.c.l.b16 %v4771
        %v5165 = vunpack.c.l.b16 %v4772
        %v5166 = vunpack.c.l.b16 %v4773
        %v5167 = vunpack.c.l.b16 %v4774
        %v5168 = vunpack.c.l.b16 %v4775
        %v5169 = vunpack.c.l.b16 %v4776
        %v5170 = vunpack.c.l.b16 %v4777
        %v5171 = vunpack.c.l.b16 %v4778
        %v5172 = vunpack.c.l.b16 %v4779
        %v5173 = vunpack.c.l.b16 %v4780
        %v5174 = vunpack.c.l.b16 %v4781
        %v5175 = vunpack.c.l.b16 %v4782
        %v5176 = vunpack.c.l.b16 %v4783
        %v5177 = vunpack.c.l.b16 %v4784
        %v5178 = vunpack.c.l.b16 %v4785
        %v5179 = vunpack.c.l.b16 %v4786
        %v5180 = vunpack.c.l.b16 %v4787
        %v5181 = vunpack.c.l.b16 %v4788
        %v5182 = vunpack.c.l.b16 %v4789
        %v5183 = vunpack.c.l.b16 %v4790
        %v5184 = vunpack.c.l.b16 %v4791
        %v5185 = vunpack.c.l.b16 %v4792
        %v5186 = vunpack.c.l.b16 %v4793
        %v5187 = vunpack.c.l.b16 %v4794
        %v5188 = vunpack.c.l.b16 %v4795
        %v5189 = vunpack.c.l.b16 %v4796
        %v5190 = vunpack.c.l.b16 %v4797
        %v5191 = vunpack.c.l.b16 %v4798
        %v5192 = vunpack.c.l.b16 %v4799
        %v5193 = vunpack.c.l.b16 %v4800
        %v5194 = vunpack.c.l.b16 %v4801
        %v5195 = vunpack.c.l.b16 %v4802
        %v5196 = vunpack.c.l.b16 %v4803
        %v5197 = vunpack.c.l.b16 %v4804
        %v5198 = vunpack.c.l.b16 %v4805
        %v5199 = vunpack.c.l.b16 %v4806
        %v5200 = vunpack.c.l.b16 %v4807
        %v5201 = vunpack.c.l.b16 %v4808
        %v5202 = vunpack.c.l.b16 %v4809
        %v5203 = vunpack.c.l.b16 %v4810
        %v5204 = vunpack.c.l.b16 %v4811
        %v5205 = vunpack.c.l.b16 %v4812
        %v5206 = vunpack.c.l.b16 %v4813
        %v5207 = vunpack.c.l.b16 %v4814
        %v5208 = vunpack.c.l.b16 %v4815
        %v5209 = vunpack.c.l.b16 %v4816
        %v5210 = vunpack.c.l.b16 %v4817
        %v5211 = vunpack.c.l.b16 %v4818
        %v5212 = vunpack.c.l.b16 %v4819
        %v5213 = vunpack.c.l.b16 %v4820
        %v5214 = vunpack.c.l.b16 %v4821
        %v5215 = vunpack.c.l.b16 %v4822
        %v5216 = vunpack.c.l.b16 %v4823
        %v5217 = vunpack.c.l.b16 %v4824
        %v5218 = vunpack.c.l.b16 %v4825
        %v5219 = vunpack.c.l.b16 %v4826
        %v5220 = vunpack.c.l.b16 %v4827
        %v5221 = vunpack.c.l.b16 %v4828
        %v5222 = vunpack.c.l.b16 %v4829
        %v5223 = vunpack.c.l.b16 %v4830
        %v5224 = vunpack.c.l.b16 %v4831
        %v5225 = vunpack.c.l.b16 %v4832
        %v5226 = vunpack.c.l.b16 %v4833
        %v5227 = vunpack.c.l.b16 %v4834
        %v5228 = vunpack.c.l.b16 %v4835
        %v5229 = vunpack.c.l.b16 %v4836
        %v5230 = vunpack.c.l.b16 %v4837
        %v5231 = vunpack.c.l.b16 %v4838
        %v5232 = vunpack.c.l.b16 %v4839
        %v5233 = vunpack.c.l.b16 %v4840
        %v5234 = vunpack.c.l.b16 %v4841
        %v5235 = vunpack.c.l.b16 %v4842
        %v5236 = vunpack.c.l.b16 %v4843
        %v5237 = vunpack.c.l.b16 %v4844
        %v5238 = vunpack.c.l.b16 %v4845
        %v5239 = vunpack.c.l.b16 %v4846
        %v5240 = vunpack.c.l.b16 %v4847
        %v5241 = vunpack.c.l.b16 %v4848
        %v5242 = vunpack.c.l.b16 %v4849
        %v5243 = vunpack.c.l.b16 %v4850
        %v5244 = vunpack.c.l.b16 %v4851
        %v5245 = vunpack.c.l.b16 %v4852
        %v5246 = vunpack.c.l.b16 %v4853
        %v5247 = vunpack.c.l.b16 %v4854
        %v5248 = vunpack.c.l.b16 %v4855
        %v5249 = vunpack.c.l.b16 %v4856
        %v5250 = vunpack.c.l.b16 %v4857
        %v5251 = vunpack.c.l.b16 %v4858
        %v5252 = vunpack.c.l.b16 %v4859
        %v5253 = vunpack.c.l.b16 %v4860
        %v5254 = vunpack.c.l.b16 %v4861
        %v5255 = vunpack.c.l.b16 %v4862
        %v5256 = vunpack.c.l.b16 %v4863
        %v5257 = vunpack.c.l.b16 %v4864
        %v5258 = vunpack.c.l.b16 %v4865
        %v5259 = vunpack.c.l.b16 %v4866
        %v5260 = vunpack.c.l.b16 %v4867
        %v5261 = vunpack.c.l.b16 %v4868
        %v5262 = vunpack.c.l.b16 %v4869
        %v5263 = vunpack.c.l.b16 %v4870
        %v5264 = vunpack.c.l.b16 %v4871
        %v5265 = vpack.c.b16 %v5122, %v5121
        %v5266 = vpack.c.b16 %v5124, %v5123
        %v5267 = vpack.c.b16 %v5126, %v5125
        %v5268 = vpack.c.b16 %v5128, %v5127
        %v5269 = vpack.c.b16 %v5130, %v5129
        %v5270 = vpack.c.b16 %v5132, %v5131
        %v5271 = vpack.c.b16 %v5134, %v5133
        %v5272 = vpack.c.b16 %v5136, %v5135
        %v5273 = vpack.c.b16 %v5138, %v5137
        %v5274 = vpack.c.b16 %v5140, %v5139
        %v5275 = vpack.c.b16 %v5142, %v5141
        %v5276 = vpack.c.b16 %v5144, %v5143
        %v5277 = vpack.c.b16 %v5146, %v5145
        %v5278 = vpack.c.b16 %v5148, %v5147
        %v5279 = vpack.c.b16 %v5150, %v5149
        %v5280 = vpack.c.b16 %v5152, %v5151
        %v5281 = vpack.c.b16 %v5154, %v5153
        %v5282 = vpack.c.b16 %v5156, %v5155
        %v5283 = vpack.c.b16 %v5158, %v5157
        %v5284 = vpack.c.b16 %v5160, %v5159
        %v5285 = vpack.c.b16 %v5162, %v5161
        %v5286 = vpack.c.b16 %v5164, %v5163
        %v5287 = vpack.c.b16 %v5166, %v5165
        %v5288 = vpack.c.b16 %v5168, %v5167
        %v5289 = vpack.c.b16 %v5170, %v5169
        %v5290 = vpack.c.b16 %v5172, %v5171
        %v5291 = vpack.c.b16 %v5174, %v5173
        %v5292 = vpack.c.b16 %v5176, %v5175
        %v5293 = vpack.c.b16 %v5178, %v5177
        %v5294 = vpack.c.b16 %v5180, %v5179
        %v5295 = vpack.c.b16 %v5182, %v5181
        %v5296 = vpack.c.b16 %v5184, %v5183
        %v5297 = vpack.c.b16 %v5186, %v5185
        %v5298 = vpack.c.b16 %v5188, %v5187
        %v5299 = vpack.c.b16 %v5190, %v5189
        %v5300 = vpack.c.b16 %v5192, %v5191
        %v5301 = vpack.c.b16 %v5194, %v5193
        %v5302 = vpack.c.b16 %v5196, %v5195
        %v5303 = vpack.c.b16 %v5198, %v5197
        %v5304 = vpack.c.b16 %v5200, %v5199
        %v5305 = vpack.c.b16 %v5202, %v5201
        %v5306 = vpack.c.b16 %v5204, %v5203
        %v5307 = vpack.c.b16 %v5206, %v5205
        %v5308 = vpack.c.b16 %v5208, %v5207
        %v5309 = vpack.c.b16 %v5210, %v5209
        %v5310 = vpack.c.b16 %v5212, %v5211
        %v5311 = vpack.c.b16 %v5214, %v5213
        %v5312 = vpack.c.b16 %v5216, %v5215
        %v5313 = vpack.c.b16 %v5218, %v5217
        %v5314 = vpack.c.b16 %v5220, %v5219
        %v5315 = vpack.c.b16 %v5222, %v5221
        %v5316 = vpack.c.b16 %v5224, %v5223
        %v5317 = vpack.c.b16 %v5226, %v5225
        %v5318 = vpack.c.b16 %v5228, %v5227
        %v5319 = vpack.c.b16 %v5230, %v5229
        %v5320 = vpack.c.b16 %v5232, %v5231
        %v5321 = vpack.c.b16 %v5234, %v5233
        %v5322 = vpack.c.b16 %v5236, %v5235
        %v5323 = vpack.c.b16 %v5238, %v5237
        %v5324 = vpack.c.b16 %v5240, %v5239
        %v5325 = vpack.c.b16 %v5242, %v5241
        %v5326 = vpack.c.b16 %v5244, %v5243
        %v5327 = vpack.c.b16 %v5246, %v5245
        %v5328 = vpack.c.b16 %v5248, %v5247
        %v5329 = vpack.c.b16 %v5250, %v5249
        %v5330 = vpack.c.b16 %v5252, %v5251
        %v5331 = vpack.c.b16 %v5254, %v5253
        %v5332 = vpack.c.b16 %v5256, %v5255
        %v5333 = vpack.c.b16 %v5258, %v5257
        %v5334 = vpack.c.b16 %v5260, %v5259
        %v5335 = vpack.c.b16 %v5262, %v5261
        %v5336 = vpack.c.b16 %v5264, %v5263
        %5409 = vmatprep.subr.bf16.mxu0 0
        %5410 = vmatpush1.bf16.msra.mxu0 %v5265
        %5411 = vmatprep.subr.bf16.mxu0 0
        %5412 = vmatpush1.bf16.msra.mxu0 %v5266
        %5413 = vmatprep.subr.bf16.mxu0 0
        %5414 = vmatpush1.bf16.msra.mxu0 %v5267
        %5415 = vmatprep.subr.bf16.mxu0 0
        %5416 = vmatpush1.bf16.msra.mxu0 %v5268
        %5417 = vmatprep.subr.bf16.mxu0 0
        %5418 = vmatpush1.bf16.msra.mxu0 %v5269
        %5419 = vmatprep.subr.bf16.mxu0 0
        %5420 = vmatpush1.bf16.msra.mxu0 %v5270
        %5421 = vmatprep.subr.bf16.mxu0 0
        %5422 = vmatpush1.bf16.msra.mxu0 %v5271
        %5423 = vmatprep.subr.bf16.mxu0 0
        %5424 = vmatpush1.bf16.msra.mxu0 %v5272
        %5425 = vmatprep.subr.bf16.mxu0 0
        %5426 = vmatpush1.bf16.msra.mxu0 %v5273
        %5427 = vmatprep.subr.bf16.mxu0 0
        %5428 = vmatpush1.bf16.msra.mxu0 %v5274
        %5429 = vmatprep.subr.bf16.mxu0 0
        %5430 = vmatpush1.bf16.msra.mxu0 %v5275
        %5431 = vmatprep.subr.bf16.mxu0 0
        %5432 = vmatpush1.bf16.msra.mxu0 %v5276
        %5433 = vmatprep.subr.bf16.mxu0 0
        %5434 = vmatpush1.bf16.msra.mxu0 %v5277
        %5435 = vmatprep.subr.bf16.mxu0 0
        %5436 = vmatpush1.bf16.msra.mxu0 %v5278
        %5437 = vmatprep.subr.bf16.mxu0 0
        %5438 = vmatpush1.bf16.msra.mxu0 %v5279
        %5439 = vmatprep.subr.bf16.mxu0 0
        %5440 = vmatpush1.bf16.msra.mxu0 %v5280
        %5441 = vmatprep.mubr.bf16.mxu0 %v4912
        %5442 = vmatmul.mubr.bf16.gmra.mrb[0].mxu0 %v4911
        %v5443 = vpop.f32.mrb[0].mxu0
        %v5444 = vadd.f32 %v4877, %v5443
        %v5445 = vpop.f32.mrb[0].mxu0
        %v5446 = vpop.f32.mrb[0].mxu0
        %v5447 = vadd.f32 %v4877, %v5446
        %v5448 = vpop.f32.mrb[0].mxu0
        %5449 = vdwg.mxu0
        %5450 = vmatprep.subr.bf16.mxu0 0
        %5451 = vmatpush1.bf16.msra.mxu0 %v5281
        %5452 = vmatprep.subr.bf16.mxu0 0
        %5453 = vmatpush1.bf16.msra.mxu0 %v5282
        %5454 = vmatprep.subr.bf16.mxu0 0
        %5455 = vmatpush1.bf16.msra.mxu0 %v5283
        %5456 = vmatprep.subr.bf16.mxu0 0
        %5457 = vmatpush1.bf16.msra.mxu0 %v5284
        %5458 = vmatprep.subr.bf16.mxu0 0
        %5459 = vmatpush1.bf16.msra.mxu0 %v5285
        %5460 = vmatprep.subr.bf16.mxu0 0
        %5461 = vmatpush1.bf16.msra.mxu0 %v5286
        %5462 = vmatprep.subr.bf16.mxu0 0
        %5463 = vmatpush1.bf16.msra.mxu0 %v5287
        %5464 = vmatprep.subr.bf16.mxu0 0
        %5465 = vmatpush1.bf16.msra.mxu0 %v5288
        %5466 = vmatprep.subr.bf16.mxu0 0
        %5467 = vmatpush1.bf16.msra.mxu0 %v5289
        %5468 = vmatprep.subr.bf16.mxu0 0
        %5469 = vmatpush1.bf16.msra.mxu0 %v5290
        %5470 = vmatprep.subr.bf16.mxu0 0
        %5471 = vmatpush1.bf16.msra.mxu0 %v5291
        %5472 = vmatprep.subr.bf16.mxu0 0
        %5473 = vmatpush1.bf16.msra.mxu0 %v5292
        %5474 = vmatprep.subr.bf16.mxu0 0
        %5475 = vmatpush1.bf16.msra.mxu0 %v5293
        %5476 = vmatprep.subr.bf16.mxu0 0
        %5477 = vmatpush1.bf16.msra.mxu0 %v5294
        %5478 = vmatprep.subr.bf16.mxu0 0
        %5479 = vmatpush1.bf16.msra.mxu0 %v5295
        %5480 = vmatprep.subr.bf16.mxu0 0
        %5481 = vmatpush1.bf16.msra.mxu0 %v5296
        %5482 = vmatprep.mubr.bf16.mxu0 %v4914
        %5483 = vmatmul.mubr.bf16.gmra.mrb[0].mxu0 %v4913
        %v5484 = vpop.f32.mrb[0].mxu0
        %v5485 = vadd.f32 %v5444, %v5484
        %v5486 = vpop.f32.mrb[0].mxu0
        %v5487 = vpop.f32.mrb[0].mxu0
        %v5488 = vadd.f32 %v5447, %v5487
        %v5489 = vpop.f32.mrb[0].mxu0
        %5490 = vdwg.mxu0
        %5491 = vmatprep.subr.bf16.mxu0 0
        %5492 = vmatpush1.bf16.msra.mxu0 %v5297
        %5493 = vmatprep.subr.bf16.mxu0 0
        %5494 = vmatpush1.bf16.msra.mxu0 %v5298
        %5495 = vmatprep.subr.bf16.mxu0 0
        %5496 = vmatpush1.bf16.msra.mxu0 %v5299
        %5497 = vmatprep.subr.bf16.mxu0 0
        %5498 = vmatpush1.bf16.msra.mxu0 %v5300
        %5499 = vmatprep.subr.bf16.mxu0 0
        %5500 = vmatpush1.bf16.msra.mxu0 %v5301
        %5501 = vmatprep.subr.bf16.mxu0 0
        %5502 = vmatpush1.bf16.msra.mxu0 %v5302
        %5503 = vmatprep.subr.bf16.mxu0 0
        %5504 = vmatpush1.bf16.msra.mxu0 %v5303
        %5505 = vmatprep.subr.bf16.mxu0 0
        %5506 = vmatpush1.bf16.msra.mxu0 %v5304
        %5507 = vmatprep.subr.bf16.mxu0 0
        %5508 = vmatpush1.bf16.msra.mxu0 %v5305
        %5509 = vmatprep.subr.bf16.mxu0 0
        %5510 = vmatpush1.bf16.msra.mxu0 %v5306
        %5511 = vmatprep.subr.bf16.mxu0 0
        %5512 = vmatpush1.bf16.msra.mxu0 %v5307
        %5513 = vmatprep.subr.bf16.mxu0 0
        %5514 = vmatpush1.bf16.msra.mxu0 %v5308
        %5515 = vmatprep.subr.bf16.mxu0 0
        %5516 = vmatpush1.bf16.msra.mxu0 %v5309
        %5517 = vmatprep.subr.bf16.mxu0 0
        %5518 = vmatpush1.bf16.msra.mxu0 %v5310
        %5519 = vmatprep.subr.bf16.mxu0 0
        %5520 = vmatpush1.bf16.msra.mxu0 %v5311
        %5521 = vmatprep.subr.bf16.mxu0 0
        %5522 = vmatpush1.bf16.msra.mxu0 %v5312
        %5523 = vmatprep.mubr.bf16.mxu0 %v4948
        %5524 = vmatmul.mubr.bf16.gmra.mrb[0].mxu0 %v4947
        %v5525 = vpop.f32.mrb[0].mxu0
        %v5526 = vadd.f32 %v5485, %v5525
        %v5527 = vpop.f32.mrb[0].mxu0
        %v5528 = vpop.f32.mrb[0].mxu0
        %v5529 = vadd.f32 %v5488, %v5528
        %v5530 = vpop.f32.mrb[0].mxu0
        %5531 = vdwg.mxu0
        %5532 = vmatprep.subr.bf16.mxu0 0
        %5533 = vmatpush1.bf16.msra.mxu0 %v5313
        %5534 = vmatprep.subr.bf16.mxu0 0
        %5535 = vmatpush1.bf16.msra.mxu0 %v5314
        %5536 = vmatprep.subr.bf16.mxu0 0
        %5537 = vmatpush1.bf16.msra.mxu0 %v5315
        %5538 = vmatprep.subr.bf16.mxu0 0
        %5539 = vmatpush1.bf16.msra.mxu0 %v5316
        %5540 = vmatprep.subr.bf16.mxu0 0
        %5541 = vmatpush1.bf16.msra.mxu0 %v5317
        %5542 = vmatprep.subr.bf16.mxu0 0
        %5543 = vmatpush1.bf16.msra.mxu0 %v5318
        %5544 = vmatprep.subr.bf16.mxu0 0
        %5545 = vmatpush1.bf16.msra.mxu0 %v5319
        %5546 = vmatprep.subr.bf16.mxu0 0
        %5547 = vmatpush1.bf16.msra.mxu0 %v5320
        %5548 = vmatprep.subr.bf16.mxu0 0
        %5549 = vmatpush1.bf16.msra.mxu0 %v5321
        %5550 = vmatprep.subr.bf16.mxu0 0
        %5551 = vmatpush1.bf16.msra.mxu0 %v5322
        %5552 = vmatprep.subr.bf16.mxu0 0
        %5553 = vmatpush1.bf16.msra.mxu0 %v5323
        %5554 = vmatprep.subr.bf16.mxu0 0
        %5555 = vmatpush1.bf16.msra.mxu0 %v5324
        %5556 = vmatprep.subr.bf16.mxu0 0
        %5557 = vmatpush1.bf16.msra.mxu0 %v5325
        %5558 = vmatprep.subr.bf16.mxu0 0
        %5559 = vmatpush1.bf16.msra.mxu0 %v5326
        %5560 = vmatprep.subr.bf16.mxu0 0
        %5561 = vmatpush1.bf16.msra.mxu0 %v5327
        %5562 = vmatprep.subr.bf16.mxu0 0
        %5563 = vmatpush1.bf16.msra.mxu0 %v5328
        %5564 = vmatprep.mubr.bf16.mxu0 %v4950
        %5565 = vmatmul.mubr.bf16.gmra.mrb[0].mxu0 %v4949
        %v5566 = vpop.f32.mrb[0].mxu0
        %v5567 = vadd.f32 %v5526, %v5566
        %v5568 = vpop.f32.mrb[0].mxu0
        %v5569 = vpop.f32.mrb[0].mxu0
        %v5570 = vadd.f32 %v5529, %v5569
        %v5571 = vpop.f32.mrb[0].mxu0
        %5572 = vdwg.mxu0
        %5573 = vmatprep.subr.bf16.mxu0 0
        %5574 = vmatpush1.bf16.msra.mxu0 %v5329
        %5575 = vmatprep.subr.bf16.mxu0 0
        %5576 = vmatpush1.bf16.msra.mxu0 %v5330
        %5577 = vmatprep.subr.bf16.mxu0 0
        %5578 = vmatpush1.bf16.msra.mxu0 %v5331
        %5579 = vmatprep.subr.bf16.mxu0 0
        %5580 = vmatpush1.bf16.msra.mxu0 %v5332
        %5581 = vmatprep.subr.bf16.mxu0 0
        %5582 = vmatpush1.bf16.msra.mxu0 %v5333
        %5583 = vmatprep.subr.bf16.mxu0 0
        %5584 = vmatpush1.bf16.msra.mxu0 %v5334
        %5585 = vmatprep.subr.bf16.mxu0 0
        %5586 = vmatpush1.bf16.msra.mxu0 %v5335
        %5587 = vmatprep.subr.bf16.mxu0 0
        %5588 = vmatpush1.bf16.msra.mxu0 %v5336
        %5589 = vmatprep.subr.bf16.mxu0 0
        %5590 = vmatpush1.bf16.msra.mxu0 0
        %5591 = vmatprep.subr.bf16.mxu0 0
        %5592 = vmatpush1.bf16.msra.mxu0 0
        %5593 = vmatprep.subr.bf16.mxu0 0
        %5594 = vmatpush1.bf16.msra.mxu0 0
        %5595 = vmatprep.subr.bf16.mxu0 0
        %5596 = vmatpush1.bf16.msra.mxu0 0
        %5597 = vmatprep.subr.bf16.mxu0 0
        %5598 = vmatpush1.bf16.msra.mxu0 0
        %5599 = vmatprep.subr.bf16.mxu0 0
        %5600 = vmatpush1.bf16.msra.mxu0 0
        %5601 = vmatprep.subr.bf16.mxu0 0
        %5602 = vmatpush1.bf16.msra.mxu0 0
        %5603 = vmatprep.subr.bf16.mxu0 0
        %5604 = vmatpush1.bf16.msra.mxu0 0
        %5605 = vmatprep.mubr.bf16.mxu0 0
        %5606 = vmatmul.mubr.bf16.gmra.mrb[0].mxu0 %v4967
        %v5607 = vpop.f32.mrb[0].mxu0
        %v5608 = vadd.f32 %v5567, %v5607
        %v5609 = vpop.f32.mrb[0].mxu0
        %v5610 = vpop.f32.mrb[0].mxu0
        %v5611 = vadd.f32 %v5570, %v5610
        %v5612 = vpop.f32.mrb[0].mxu0
        %5613 = vdwg.mxu0
        %v5614 = vmax.f32 %v5608, 0.0
        %v5615 = vmax.f32 %v5611, 0.0
        %v5616 = vadd.f32 %v5614, %v5615
        %v5617 = vrot.slane %v5616, 4
        %v5618 = vadd.f32 %v5616, %v5617
        %v5619 = vrot.slane %v5618, 2
        %v5620 = vadd.f32 %v5618, %v5619
        %v5621 = vrot.slane %v5620, 1
        %v5622 = vadd.f32 %v5620, %v5621
        %v5623 = vmul.f32 %v5622, 0.0625
        %v5624 = vpack.c.bf16 %v5623, %v5623
        %v5625 = vld [vmem:[%s9] sm:$0xf]
        %v5626 = vld [vmem:[%s9 + $0x4] sm:$0xf]
        %v5627 = vld [vmem:[%s9 + $0x8] sm:$0xf]
        %v5628 = vld [vmem:[%s9 + $0xc] sm:$0xf]
        %v5629 = vld [vmem:[%s9 + $0x10] sm:$0xf]
        %v5630 = vld [vmem:[%s9 + $0x14] sm:$0xf]
        %v5631 = vld [vmem:[%s9 + $0x18] sm:$0xf]
        %v5632 = vld [vmem:[%s9 + $0x1c] sm:$0xf]
        %v5633 = vld [vmem:[%s9 + $0x20] sm:$0xf]
        %v5634 = vld [vmem:[%s9 + $0x24] sm:$0xf]
        %v5635 = vld [vmem:[%s9 + $0x28] sm:$0xf]
        %v5636 = vld [vmem:[%s9 + $0x2c] sm:$0xf]
        %v5637 = vld [vmem:[%s9 + $0x30] sm:$0xf]
        %v5638 = vld [vmem:[%s9 + $0x34] sm:$0xf]
        %v5639 = vld [vmem:[%s9 + $0x38] sm:$0xf]
        %v5640 = vld [vmem:[%s9 + $0x3c] sm:$0xf]
        %v5641 = vld [vmem:[%s10] sm:$0x1]
        %v5658 = vunpack.c.l.b16 %v5625
        %v5659 = vunpack.c.l.b16 %v5626
        %v5660 = vunpack.c.l.b16 %v5627
        %v5661 = vunpack.c.l.b16 %v5628
        %v5662 = vunpack.c.l.b16 %v5629
        %v5663 = vunpack.c.l.b16 %v5630
        %v5664 = vunpack.c.l.b16 %v5631
        %v5665 = vunpack.c.l.b16 %v5632
        %v5666 = vunpack.c.l.b16 %v5633
        %v5667 = vunpack.c.l.b16 %v5634
        %v5668 = vunpack.c.l.b16 %v5635
        %v5669 = vunpack.c.l.b16 %v5636
        %v5670 = vunpack.c.l.b16 %v5637
        %v5671 = vunpack.c.l.b16 %v5638
        %v5672 = vunpack.c.l.b16 %v5639
        %v5673 = vunpack.c.l.b16 %v5640
        %v5674 = vpack.c.b16 %v5659, %v5658
        %v5675 = vpack.c.b16 %v5661, %v5660
        %v5676 = vpack.c.b16 %v5663, %v5662
        %v5677 = vpack.c.b16 %v5665, %v5664
        %v5678 = vpack.c.b16 %v5667, %v5666
        %v5679 = vpack.c.b16 %v5669, %v5668
        %v5680 = vpack.c.b16 %v5671, %v5670
        %v5681 = vpack.c.b16 %v5673, %v5672
        %5690 = vmatprep.subr.bf16.mxu0 0
        %5691 = vmatpush1.bf16.msra.mxu0 %v5674
        %5692 = vmatprep.subr.bf16.mxu0 0
        %5693 = vmatpush1.bf16.msra.mxu0 %v5675
        %5694 = vmatprep.subr.bf16.mxu0 0
        %5695 = vmatpush1.bf16.msra.mxu0 %v5676
        %5696 = vmatprep.subr.bf16.mxu0 0
        %5697 = vmatpush1.bf16.msra.mxu0 %v5677
        %5698 = vmatprep.subr.bf16.mxu0 0
        %5699 = vmatpush1.bf16.msra.mxu0 %v5678
        %5700 = vmatprep.subr.bf16.mxu0 0
        %5701 = vmatpush1.bf16.msra.mxu0 %v5679
        %5702 = vmatprep.subr.bf16.mxu0 0
        %5703 = vmatpush1.bf16.msra.mxu0 %v5680
        %5704 = vmatprep.subr.bf16.mxu0 0
        %5705 = vmatpush1.bf16.msra.mxu0 %v5681
        %5706 = vmatprep.subr.bf16.mxu0 0
        %5707 = vmatpush1.bf16.msra.mxu0 0
        %5708 = vmatprep.subr.bf16.mxu0 0
        %5709 = vmatpush1.bf16.msra.mxu0 0
        %5710 = vmatprep.subr.bf16.mxu0 0
        %5711 = vmatpush1.bf16.msra.mxu0 0
        %5712 = vmatprep.subr.bf16.mxu0 0
        %5713 = vmatpush1.bf16.msra.mxu0 0
        %5714 = vmatprep.subr.bf16.mxu0 0
        %5715 = vmatpush1.bf16.msra.mxu0 0
        %5716 = vmatprep.subr.bf16.mxu0 0
        %5717 = vmatpush1.bf16.msra.mxu0 0
        %5718 = vmatprep.subr.bf16.mxu0 0
        %5719 = vmatpush1.bf16.msra.mxu0 0
        %5720 = vmatprep.subr.bf16.mxu0 0
        %5721 = vmatpush1.bf16.msra.mxu0 0
        %5722 = vmatprep.mubr.bf16.mxu0 0
        %5723 = vmatmul.mubr.bf16.gmra.mrb[0].mxu0 %v5624
        %v5724 = vpop.f32.mrb[0].mxu0
        %v5725 = vadd.f32 %v5641, %v5724
        %v5726 = vpop.f32.mrb[0].mxu0
        %v5727 = vpop.f32.mrb[0].mxu0
        %v5728 = vpop.f32.mrb[0].mxu0
        %5729 = vdwg.mxu0
        %5730 = vst [vmem:[%s379] sm:$0x1] %v5725
        %s5731 = sand.u32 %s269, 1
        %s5732 = scalar_lea.sflag [#allocation6], %s5731
        %s5733 = sand.u32 %s269, 1
        %s5734 = scalar_lea.vmem [#allocation5], %s5733
        // Predicated region
        $region65: #{model_forward.1} parent=63 // pred_check
          %p5735 = pneg %p279
        $region66: #{model_forward.1} parent=63 // pred_check_branch
          %5737 = sbr.rel (%p5735) target = $region68
        $region67: #{model_forward.1} parent=63 // pred_region
          %s5739 = ssub.s32 16, 16
          %5740 = vsyncadd %s5732, %s5739
          %s5741 = smul.addr %s25, 16
          %s5742 = scalar_lea.hbm %s11, %s5741
          %s5744 = sshll.u32 %s5734, 4
          %s5745 = int_to_ptr.vmem [resolvable:$true] %s5744
          %5747 = dma.vmem_to_hbm [thread:$0]  %s5745, 16, %s5742, %s5732
        $region68: #{model_forward.1} parent=63 // pred_fallthru
          _
      $region64: #{model_forward.1} parent=5 // pred_fallthru
        _
      %p5748 = scmp.le.s32.totalorder 2, %s20
      // Predicated region
      $region69: #{model_forward.1} parent=5 // pred_check
        %p5749 = pneg %p5748
      $region70: #{model_forward.1} parent=5 // pred_check_branch
        %5751 = sbr.rel (%p5749) target = $region72
      $region71: #{model_forward.1} parent=5 // pred_region
        %s5752 = ssub.s32 %s20, 2
        // Predicated region
        $region73: #{model_forward.1} parent=71 // pred_check
          %p5753 = pneg %p285
        $region74: #{model_forward.1} parent=71 // pred_check_branch
          %5755 = sbr.rel (%p5753) target = $region76
        $region75: #{model_forward.1} parent=71 // pred_region
          %s5756 = sand.u32 %s270, 1
          %s5757 = scalar_lea.sflag [#allocation6], %s5756
          %s5758 = sand.u32 %s270, 1
          %s5759 = scalar_lea.vmem [#allocation5], %s5758
          %5760 = dma.done %s5757, 16
        $region76: #{model_forward.1} parent=71 // pred_fallthru
          _
      $region72: #{model_forward.1} parent=5 // pred_fallthru
        _
    $region6: #{model_forward.1} parent=1 // loop_footer
      %s24 = sadd.s32 1, %s20
    $region7: #{model_forward.1} parent=1 // loop_footer_branch
      %19 = sbr.rel target = $region3
    $region8: #{model_forward.1} parent=1 // loop_exit
      _
    %5761 = vsyncpa [#allocation6], 1
    %s5762 = scalar_lea.sflag [#allocation6], 1
    %5763 = vsyncpa %s5762, 1

</llo_original>
